<compile_context>
chip_gen: v7x
topology: tpu7x:2x2x1
jax: 0.10.0
libtpu: 0.0.40
codegen_flags: <defaults>
</compile_context>

<pallas_src>
import functools

import jax
import jax.numpy as jnp
from jax.experimental import pallas as pl
from jax.experimental.pallas import tpu as pltpu


def _round_up(x, m):
    return ((x + m - 1) // m) * m


def _flow_kernel(z_ref, mask_ref, nmask_ref, w1_ref, b1_ref,
                 w2s_ref, w2t_ref, b2s_ref, b2t_ref, o_ref,
                 *, num_flows):
    """Applies `num_flows` masked affine coupling layers to one batch tile.

    MXU matmuls use bf16 operands + f32 accumulation; elementwise math is f32.
    """
    z = z_ref[...].astype(jnp.float32)                       # (tm, D) f32
    # Static unroll: K is small here. TODO(synk): switch to
    # lax.fori_loop(..., unroll=True) with dynamic weight indexing if K >= 16.
    for k in range(num_flows):
        m = mask_ref[pl.ds(k, 1), :]                          # (1, D) f32
        nm = nmask_ref[pl.ds(k, 1), :]                        # (1, D) f32 (= 1 - mask)
        w1 = w1_ref[k]                                        # (D, H) bf16
        b1 = b1_ref[pl.ds(k, 1), :]                           # (1, H) f32
        w2s = w2s_ref[k]                                      # (H, D) bf16
        w2t = w2t_ref[k]                                      # (H, D) bf16
        b2s = b2s_ref[pl.ds(k, 1), :]                         # (1, D) f32
        b2t = b2t_ref[pl.ds(k, 1), :]                         # (1, D) f32

        zm = z * m                                            # masked input (f32)
        h = jnp.dot(zm.astype(jnp.bfloat16), w1,
                    preferred_element_type=jnp.float32) + b1
        h = jnp.maximum(h, 0.0)                               # ReLU (f32)
        h16 = h.astype(jnp.bfloat16)
        # Two lane-aligned output dots instead of one (H, 2D) dot + lane slicing.
        s = jnp.tanh(jnp.dot(h16, w2s, preferred_element_type=jnp.float32) + b2s)
        t = jnp.dot(h16, w2t, preferred_element_type=jnp.float32) + b2t
        z = zm + nm * (z * jnp.exp(s) + t)
    o_ref[...] = z.astype(o_ref.dtype)


def conditional_normalizing_flow_forward(z, mask, w1, b1, w2, b2, *, tm=256):
    """Pallas forward of the flow stack.

    z    : (B, D) f32
    mask : (K, D) f32  binary coupling masks
    w1   : (K, D, H), b1 : (K, H)       conditioner layer 1
    w2   : (K, H, 2D), b2 : (K, 2D)     conditioner layer 2 ([:D]=scale, [D:]=shift)
    """
    B, D = z.shape
    K, _, H = w1.shape
    out_dtype = z.dtype

    # Split the conditioner output into lane-aligned scale / shift tensors.
    w2_s, w2_t = w2[:, :, :D], w2[:, :, D:]
    b2_s, b2_t = b2[:, :D], b2[:, D:]

    # Precompute (1 - mask) once (avoids K redundant VPU subtracts/broadcasts).
    nmask = 1.0 - mask

    # bf16 weights: halves resident/DMA'd weight bytes, doubles MXU throughput.
    w1_bf = w1.astype(jnp.bfloat16)
    w2s_bf = w2_s.astype(jnp.bfloat16)
    w2t_bf = w2_t.astype(jnp.bfloat16)

    # Batch tiling: big, sublane-aligned tile; pad ragged batches; prefer
    # >= 2 grid steps so both v7x TensorCores get work.
    tm_eff = min(tm, _round_up(B, 8))
    tm_eff = max(8, (tm_eff // 8) * 8)
    if _round_up(B, tm_eff) // tm_eff < 2 and tm_eff >= 16 and B > 8:
        half = max(8, _round_up(tm_eff // 2, 8))
        if _round_up(B, half) // half >= 2:
            tm_eff = half
    b_pad = _round_up(B, tm_eff)
    z_in = z if b_pad == B else jnp.pad(z, ((0, b_pad - B), (0, 0)))
    grid = b_pad // tm_eff

    kernel = functools.partial(_flow_kernel, num_flows=K)
    out = pl.pallas_call(
        kernel,
        out_shape=jax.ShapeDtypeStruct((b_pad, D), out_dtype),
        grid_spec=pltpu.PrefetchScalarGridSpec(
            num_scalar_prefetch=0,
            grid=(grid,),
            in_specs=[
                pl.BlockSpec((tm_eff, D), lambda i: (i, 0)),     # z tile
                pl.BlockSpec((K, D), lambda i: (0, 0)),          # mask (full)
                pl.BlockSpec((K, D), lambda i: (0, 0)),          # 1 - mask (full)
                pl.BlockSpec((K, D, H), lambda i: (0, 0, 0)),    # W1 (bf16, full)
                pl.BlockSpec((K, H), lambda i: (0, 0)),          # b1 (full)
                pl.BlockSpec((K, H, D), lambda i: (0, 0, 0)),    # W2 scale (bf16)
                pl.BlockSpec((K, H, D), lambda i: (0, 0, 0)),    # W2 shift (bf16)
                pl.BlockSpec((K, D), lambda i: (0, 0)),          # b2 scale
                pl.BlockSpec((K, D), lambda i: (0, 0)),          # b2 shift
            ],
            out_specs=pl.BlockSpec((tm_eff, D), lambda i: (i, 0)),
        ),
        compiler_params=pltpu.CompilerParams(
            dimension_semantics=("parallel",)),
    )(z_in, mask, nmask, w1_bf, b1, w2s_bf, w2t_bf, b2_s, b2_t)
    return out[:B]


def _reference_forward(z, mask, w1, b1, w2, b2, matmul_dtype=jnp.float32):
    """Pure-JAX reference of the same flow stack (matmul dtype selectable)."""
    K, D, _ = w1.shape
    z = z.astype(jnp.float32)
    for k in range(K):
        m = mask[k][None, :]
        zm = z * m
        h = jnp.dot(zm.astype(matmul_dtype), w1[k].astype(matmul_dtype),
                    preferred_element_type=jnp.float32) + b1[k][None, :]
        h = jnp.maximum(h, 0.0)
        st = jnp.dot(h.astype(matmul_dtype), w2[k].astype(matmul_dtype),
                     preferred_element_type=jnp.float32) + b2[k][None, :]
        s = jnp.tanh(st[:, :D])
        t = st[:, D:]
        z = zm + (1.0 - m) * (z * jnp.exp(s) + t)
    return z


if __name__ == "__main__":
    B, D, H, K = 512, 8, 32, 4   # B sized so the grid has 2 parallel tiles of 256

    key = jax.random.PRNGKey(0)
    kz, k1, k2, k3, k4 = jax.random.split(key, 5)

    z = jax.random.normal(kz, (B, D), dtype=jnp.float32)

    # Deterministic parameter init (small scale keeps exp() well-behaved).
    w1 = 0.05 * jax.random.normal(k1, (K, D, H), dtype=jnp.float32)
    b1 = 0.02 * jax.random.normal(k2, (K, H), dtype=jnp.float32)
    w2 = 0.05 * jax.random.normal(k3, (K, H, 2 * D), dtype=jnp.float32)
    b2 = 0.02 * jax.random.normal(k4, (K, 2 * D), dtype=jnp.float32)

    # Alternating binary (checkerboard) masks across flows.
    base = (jnp.arange(D) % 2).astype(jnp.float32)
    mask = jnp.stack([base if k % 2 == 0 else 1.0 - base for k in range(K)])

    out = conditional_normalizing_flow_forward(z, mask, w1, b1, w2, b2)
    out = jax.block_until_ready(out)
    assert out.shape == (B, D)

    # Exact-math check: reference mirrors the kernel (bf16 MXU operands, f32 accum).
    ref_bf16 = _reference_forward(z, mask, w1, b1, w2, b2, matmul_dtype=jnp.bfloat16)
    assert jnp.allclose(out, ref_bf16, atol=1e-3, rtol=1e-3), "mismatch vs bf16 reference"

    # Semantic check vs the pure-f32 flow stack (loosened for bf16 matmuls).
    ref_f32 = _reference_forward(z, mask, w1, b1, w2, b2, matmul_dtype=jnp.float32)
    assert jnp.allclose(out, ref_f32, atol=5e-2, rtol=5e-2), "mismatch vs f32 reference"

    print("KERNEL_OK")
</pallas_src>

<mosaic_0001>
module attributes {stable_mosaic.version = 11 : i64} {
  func.func @_flow_kernel(%arg0: i32, %arg1: memref<256x8xf32, #tpu.memory_space<vmem>>, %arg2: memref<4x8xf32, #tpu.memory_space<vmem>>, %arg3: memref<4x8xf32, #tpu.memory_space<vmem>>, %arg4: memref<4x8x32xbf16, #tpu.memory_space<vmem>>, %arg5: memref<4x32xf32, #tpu.memory_space<vmem>>, %arg6: memref<4x32x8xbf16, #tpu.memory_space<vmem>>, %arg7: memref<4x32x8xbf16, #tpu.memory_space<vmem>>, %arg8: memref<4x8xf32, #tpu.memory_space<vmem>>, %arg9: memref<4x8xf32, #tpu.memory_space<vmem>>, %arg10: memref<256x8xf32, #tpu.memory_space<vmem>>) attributes {dimension_semantics = [#tpu.dimension_semantics<parallel>], iteration_bounds = array<i64: 2>, scalar_prefetch = 0 : i64, scratch_operands = 0 : i64, tpu.core_type = #tpu.core_type<tc>, window_params = [{transform_indices = @transform_0, window_bounds = array<i64: 256, 8>}, {pipeline_mode = #tpu.pipeline_mode<synchronous>, transform_indices = @transform_1, window_bounds = array<i64: 4, 8>}, {pipeline_mode = #tpu.pipeline_mode<synchronous>, transform_indices = @transform_2, window_bounds = array<i64: 4, 8>}, {pipeline_mode = #tpu.pipeline_mode<synchronous>, transform_indices = @transform_3, window_bounds = array<i64: 4, 8, 32>}, {pipeline_mode = #tpu.pipeline_mode<synchronous>, transform_indices = @transform_4, window_bounds = array<i64: 4, 32>}, {pipeline_mode = #tpu.pipeline_mode<synchronous>, transform_indices = @transform_5, window_bounds = array<i64: 4, 32, 8>}, {pipeline_mode = #tpu.pipeline_mode<synchronous>, transform_indices = @transform_6, window_bounds = array<i64: 4, 32, 8>}, {pipeline_mode = #tpu.pipeline_mode<synchronous>, transform_indices = @transform_7, window_bounds = array<i64: 4, 8>}, {pipeline_mode = #tpu.pipeline_mode<synchronous>, transform_indices = @transform_8, window_bounds = array<i64: 4, 8>}, {transform_indices = @transform_9, window_bounds = array<i64: 256, 8>}]} {
    %c0 = arith.constant 0 : index
    %c0_0 = arith.constant 0 : index
    %0 = vector.load %arg1[%c0, %c0_0] : memref<256x8xf32, #tpu.memory_space<vmem>>, vector<256x8xf32>
    %c0_1 = arith.constant 0 : index
    %c0_2 = arith.constant 0 : index
    %1 = vector.load %arg2[%c0_1, %c0_2] : memref<4x8xf32, #tpu.memory_space<vmem>>, vector<1x8xf32>
    %c0_3 = arith.constant 0 : index
    %c0_4 = arith.constant 0 : index
    %2 = vector.load %arg3[%c0_3, %c0_4] : memref<4x8xf32, #tpu.memory_space<vmem>>, vector<1x8xf32>
    %c0_5 = arith.constant 0 : index
    %c0_6 = arith.constant 0 : index
    %c0_7 = arith.constant 0 : index
    %3 = vector.load %arg4[%c0_5, %c0_6, %c0_7] : memref<4x8x32xbf16, #tpu.memory_space<vmem>>, vector<1x8x32xbf16>
    %4 = vector.shape_cast %3 : vector<1x8x32xbf16> to vector<8x32xbf16>
    %c0_8 = arith.constant 0 : index
    %c0_9 = arith.constant 0 : index
    %5 = vector.load %arg5[%c0_8, %c0_9] : memref<4x32xf32, #tpu.memory_space<vmem>>, vector<1x32xf32>
    %c0_10 = arith.constant 0 : index
    %c0_11 = arith.constant 0 : index
    %c0_12 = arith.constant 0 : index
    %6 = vector.load %arg6[%c0_10, %c0_11, %c0_12] : memref<4x32x8xbf16, #tpu.memory_space<vmem>>, vector<1x32x8xbf16>
    %7 = vector.shape_cast %6 : vector<1x32x8xbf16> to vector<32x8xbf16>
    %c0_13 = arith.constant 0 : index
    %c0_14 = arith.constant 0 : index
    %c0_15 = arith.constant 0 : index
    %8 = vector.load %arg7[%c0_13, %c0_14, %c0_15] : memref<4x32x8xbf16, #tpu.memory_space<vmem>>, vector<1x32x8xbf16>
    %9 = vector.shape_cast %8 : vector<1x32x8xbf16> to vector<32x8xbf16>
    %c0_16 = arith.constant 0 : index
    %c0_17 = arith.constant 0 : index
    %10 = vector.load %arg8[%c0_16, %c0_17] : memref<4x8xf32, #tpu.memory_space<vmem>>, vector<1x8xf32>
    %c0_18 = arith.constant 0 : index
    %c0_19 = arith.constant 0 : index
    %11 = vector.load %arg9[%c0_18, %c0_19] : memref<4x8xf32, #tpu.memory_space<vmem>>, vector<1x8xf32>
    %12 = vector.broadcast %1 : vector<1x8xf32> to vector<256x8xf32>
    %13 = arith.mulf %0, %12 : vector<256x8xf32>
    %14 = arith.truncf %13 : vector<256x8xf32> to vector<256x8xbf16>
    %cst = arith.constant dense<0.000000e+00> : vector<256x32xf32>
    %15 = tpu.matmul %14, %4, %cst {dimension_numbers = #tpu.dot_dimension_numbers<[1], [0], [0], [1], [0, 0, 1, 1], [], []>} : vector<256x8xbf16>, vector<8x32xbf16>, vector<256x32xf32> -> vector<256x32xf32>
    %16 = vector.broadcast %5 : vector<1x32xf32> to vector<256x32xf32>
    %17 = arith.addf %15, %16 : vector<256x32xf32>
    %cst_20 = arith.constant 0.000000e+00 : f32
    %18 = vector.broadcast %cst_20 : f32 to vector<256x32xf32>
    %19 = arith.maximumf %17, %18 : vector<256x32xf32>
    %20 = arith.truncf %19 : vector<256x32xf32> to vector<256x32xbf16>
    %cst_21 = arith.constant dense<0.000000e+00> : vector<256x8xf32>
    %21 = tpu.matmul %20, %7, %cst_21 {dimension_numbers = #tpu.dot_dimension_numbers<[1], [0], [0], [1], [0, 0, 1, 1], [], []>} : vector<256x32xbf16>, vector<32x8xbf16>, vector<256x8xf32> -> vector<256x8xf32>
    %22 = vector.broadcast %10 : vector<1x8xf32> to vector<256x8xf32>
    %23 = arith.addf %21, %22 : vector<256x8xf32>
    %24 = math.tanh %23 : vector<256x8xf32>
    %cst_22 = arith.constant dense<0.000000e+00> : vector<256x8xf32>
    %25 = tpu.matmul %20, %9, %cst_22 {dimension_numbers = #tpu.dot_dimension_numbers<[1], [0], [0], [1], [0, 0, 1, 1], [], []>} : vector<256x32xbf16>, vector<32x8xbf16>, vector<256x8xf32> -> vector<256x8xf32>
    %26 = vector.broadcast %11 : vector<1x8xf32> to vector<256x8xf32>
    %27 = arith.addf %25, %26 : vector<256x8xf32>
    %28 = math.exp %24 : vector<256x8xf32>
    %29 = arith.mulf %0, %28 : vector<256x8xf32>
    %30 = arith.addf %29, %27 : vector<256x8xf32>
    %31 = vector.broadcast %2 : vector<1x8xf32> to vector<256x8xf32>
    %32 = arith.mulf %31, %30 : vector<256x8xf32>
    %33 = arith.addf %13, %32 : vector<256x8xf32>
    %c1 = arith.constant 1 : index
    %c0_23 = arith.constant 0 : index
    %34 = vector.load %arg2[%c1, %c0_23] : memref<4x8xf32, #tpu.memory_space<vmem>>, vector<1x8xf32>
    %c1_24 = arith.constant 1 : index
    %c0_25 = arith.constant 0 : index
    %35 = vector.load %arg3[%c1_24, %c0_25] : memref<4x8xf32, #tpu.memory_space<vmem>>, vector<1x8xf32>
    %c1_26 = arith.constant 1 : index
    %c0_27 = arith.constant 0 : index
    %c0_28 = arith.constant 0 : index
    %36 = vector.load %arg4[%c1_26, %c0_27, %c0_28] : memref<4x8x32xbf16, #tpu.memory_space<vmem>>, vector<1x8x32xbf16>
    %37 = vector.shape_cast %36 : vector<1x8x32xbf16> to vector<8x32xbf16>
    %c1_29 = arith.constant 1 : index
    %c0_30 = arith.constant 0 : index
    %38 = vector.load %arg5[%c1_29, %c0_30] : memref<4x32xf32, #tpu.memory_space<vmem>>, vector<1x32xf32>
    %c1_31 = arith.constant 1 : index
    %c0_32 = arith.constant 0 : index
    %c0_33 = arith.constant 0 : index
    %39 = vector.load %arg6[%c1_31, %c0_32, %c0_33] : memref<4x32x8xbf16, #tpu.memory_space<vmem>>, vector<1x32x8xbf16>
    %40 = vector.shape_cast %39 : vector<1x32x8xbf16> to vector<32x8xbf16>
    %c1_34 = arith.constant 1 : index
    %c0_35 = arith.constant 0 : index
    %c0_36 = arith.constant 0 : index
    %41 = vector.load %arg7[%c1_34, %c0_35, %c0_36] : memref<4x32x8xbf16, #tpu.memory_space<vmem>>, vector<1x32x8xbf16>
    %42 = vector.shape_cast %41 : vector<1x32x8xbf16> to vector<32x8xbf16>
    %c1_37 = arith.constant 1 : index
    %c0_38 = arith.constant 0 : index
    %43 = vector.load %arg8[%c1_37, %c0_38] : memref<4x8xf32, #tpu.memory_space<vmem>>, vector<1x8xf32>
    %c1_39 = arith.constant 1 : index
    %c0_40 = arith.constant 0 : index
    %44 = vector.load %arg9[%c1_39, %c0_40] : memref<4x8xf32, #tpu.memory_space<vmem>>, vector<1x8xf32>
    %45 = vector.broadcast %34 : vector<1x8xf32> to vector<256x8xf32>
    %46 = arith.mulf %33, %45 : vector<256x8xf32>
    %47 = arith.truncf %46 : vector<256x8xf32> to vector<256x8xbf16>
    %cst_41 = arith.constant dense<0.000000e+00> : vector<256x32xf32>
    %48 = tpu.matmul %47, %37, %cst_41 {dimension_numbers = #tpu.dot_dimension_numbers<[1], [0], [0], [1], [0, 0, 1, 1], [], []>} : vector<256x8xbf16>, vector<8x32xbf16>, vector<256x32xf32> -> vector<256x32xf32>
    %49 = vector.broadcast %38 : vector<1x32xf32> to vector<256x32xf32>
    %50 = arith.addf %48, %49 : vector<256x32xf32>
    %cst_42 = arith.constant 0.000000e+00 : f32
    %51 = vector.broadcast %cst_42 : f32 to vector<256x32xf32>
    %52 = arith.maximumf %50, %51 : vector<256x32xf32>
    %53 = arith.truncf %52 : vector<256x32xf32> to vector<256x32xbf16>
    %cst_43 = arith.constant dense<0.000000e+00> : vector<256x8xf32>
    %54 = tpu.matmul %53, %40, %cst_43 {dimension_numbers = #tpu.dot_dimension_numbers<[1], [0], [0], [1], [0, 0, 1, 1], [], []>} : vector<256x32xbf16>, vector<32x8xbf16>, vector<256x8xf32> -> vector<256x8xf32>
    %55 = vector.broadcast %43 : vector<1x8xf32> to vector<256x8xf32>
    %56 = arith.addf %54, %55 : vector<256x8xf32>
    %57 = math.tanh %56 : vector<256x8xf32>
    %cst_44 = arith.constant dense<0.000000e+00> : vector<256x8xf32>
    %58 = tpu.matmul %53, %42, %cst_44 {dimension_numbers = #tpu.dot_dimension_numbers<[1], [0], [0], [1], [0, 0, 1, 1], [], []>} : vector<256x32xbf16>, vector<32x8xbf16>, vector<256x8xf32> -> vector<256x8xf32>
    %59 = vector.broadcast %44 : vector<1x8xf32> to vector<256x8xf32>
    %60 = arith.addf %58, %59 : vector<256x8xf32>
    %61 = math.exp %57 : vector<256x8xf32>
    %62 = arith.mulf %33, %61 : vector<256x8xf32>
    %63 = arith.addf %62, %60 : vector<256x8xf32>
    %64 = vector.broadcast %35 : vector<1x8xf32> to vector<256x8xf32>
    %65 = arith.mulf %64, %63 : vector<256x8xf32>
    %66 = arith.addf %46, %65 : vector<256x8xf32>
    %c2 = arith.constant 2 : index
    %c0_45 = arith.constant 0 : index
    %67 = vector.load %arg2[%c2, %c0_45] : memref<4x8xf32, #tpu.memory_space<vmem>>, vector<1x8xf32>
    %c2_46 = arith.constant 2 : index
    %c0_47 = arith.constant 0 : index
    %68 = vector.load %arg3[%c2_46, %c0_47] : memref<4x8xf32, #tpu.memory_space<vmem>>, vector<1x8xf32>
    %c2_48 = arith.constant 2 : index
    %c0_49 = arith.constant 0 : index
    %c0_50 = arith.constant 0 : index
    %69 = vector.load %arg4[%c2_48, %c0_49, %c0_50] : memref<4x8x32xbf16, #tpu.memory_space<vmem>>, vector<1x8x32xbf16>
    %70 = vector.shape_cast %69 : vector<1x8x32xbf16> to vector<8x32xbf16>
    %c2_51 = arith.constant 2 : index
    %c0_52 = arith.constant 0 : index
    %71 = vector.load %arg5[%c2_51, %c0_52] : memref<4x32xf32, #tpu.memory_space<vmem>>, vector<1x32xf32>
    %c2_53 = arith.constant 2 : index
    %c0_54 = arith.constant 0 : index
    %c0_55 = arith.constant 0 : index
    %72 = vector.load %arg6[%c2_53, %c0_54, %c0_55] : memref<4x32x8xbf16, #tpu.memory_space<vmem>>, vector<1x32x8xbf16>
    %73 = vector.shape_cast %72 : vector<1x32x8xbf16> to vector<32x8xbf16>
    %c2_56 = arith.constant 2 : index
    %c0_57 = arith.constant 0 : index
    %c0_58 = arith.constant 0 : index
    %74 = vector.load %arg7[%c2_56, %c0_57, %c0_58] : memref<4x32x8xbf16, #tpu.memory_space<vmem>>, vector<1x32x8xbf16>
    %75 = vector.shape_cast %74 : vector<1x32x8xbf16> to vector<32x8xbf16>
    %c2_59 = arith.constant 2 : index
    %c0_60 = arith.constant 0 : index
    %76 = vector.load %arg8[%c2_59, %c0_60] : memref<4x8xf32, #tpu.memory_space<vmem>>, vector<1x8xf32>
    %c2_61 = arith.constant 2 : index
    %c0_62 = arith.constant 0 : index
    %77 = vector.load %arg9[%c2_61, %c0_62] : memref<4x8xf32, #tpu.memory_space<vmem>>, vector<1x8xf32>
    %78 = vector.broadcast %67 : vector<1x8xf32> to vector<256x8xf32>
    %79 = arith.mulf %66, %78 : vector<256x8xf32>
    %80 = arith.truncf %79 : vector<256x8xf32> to vector<256x8xbf16>
    %cst_63 = arith.constant dense<0.000000e+00> : vector<256x32xf32>
    %81 = tpu.matmul %80, %70, %cst_63 {dimension_numbers = #tpu.dot_dimension_numbers<[1], [0], [0], [1], [0, 0, 1, 1], [], []>} : vector<256x8xbf16>, vector<8x32xbf16>, vector<256x32xf32> -> vector<256x32xf32>
    %82 = vector.broadcast %71 : vector<1x32xf32> to vector<256x32xf32>
    %83 = arith.addf %81, %82 : vector<256x32xf32>
    %cst_64 = arith.constant 0.000000e+00 : f32
    %84 = vector.broadcast %cst_64 : f32 to vector<256x32xf32>
    %85 = arith.maximumf %83, %84 : vector<256x32xf32>
    %86 = arith.truncf %85 : vector<256x32xf32> to vector<256x32xbf16>
    %cst_65 = arith.constant dense<0.000000e+00> : vector<256x8xf32>
    %87 = tpu.matmul %86, %73, %cst_65 {dimension_numbers = #tpu.dot_dimension_numbers<[1], [0], [0], [1], [0, 0, 1, 1], [], []>} : vector<256x32xbf16>, vector<32x8xbf16>, vector<256x8xf32> -> vector<256x8xf32>
    %88 = vector.broadcast %76 : vector<1x8xf32> to vector<256x8xf32>
    %89 = arith.addf %87, %88 : vector<256x8xf32>
    %90 = math.tanh %89 : vector<256x8xf32>
    %cst_66 = arith.constant dense<0.000000e+00> : vector<256x8xf32>
    %91 = tpu.matmul %86, %75, %cst_66 {dimension_numbers = #tpu.dot_dimension_numbers<[1], [0], [0], [1], [0, 0, 1, 1], [], []>} : vector<256x32xbf16>, vector<32x8xbf16>, vector<256x8xf32> -> vector<256x8xf32>
    %92 = vector.broadcast %77 : vector<1x8xf32> to vector<256x8xf32>
    %93 = arith.addf %91, %92 : vector<256x8xf32>
    %94 = math.exp %90 : vector<256x8xf32>
    %95 = arith.mulf %66, %94 : vector<256x8xf32>
    %96 = arith.addf %95, %93 : vector<256x8xf32>
    %97 = vector.broadcast %68 : vector<1x8xf32> to vector<256x8xf32>
    %98 = arith.mulf %97, %96 : vector<256x8xf32>
    %99 = arith.addf %79, %98 : vector<256x8xf32>
    %c3 = arith.constant 3 : index
    %c0_67 = arith.constant 0 : index
    %100 = vector.load %arg2[%c3, %c0_67] : memref<4x8xf32, #tpu.memory_space<vmem>>, vector<1x8xf32>
    %c3_68 = arith.constant 3 : index
    %c0_69 = arith.constant 0 : index
    %101 = vector.load %arg3[%c3_68, %c0_69] : memref<4x8xf32, #tpu.memory_space<vmem>>, vector<1x8xf32>
    %c3_70 = arith.constant 3 : index
    %c0_71 = arith.constant 0 : index
    %c0_72 = arith.constant 0 : index
    %102 = vector.load %arg4[%c3_70, %c0_71, %c0_72] : memref<4x8x32xbf16, #tpu.memory_space<vmem>>, vector<1x8x32xbf16>
    %103 = vector.shape_cast %102 : vector<1x8x32xbf16> to vector<8x32xbf16>
    %c3_73 = arith.constant 3 : index
    %c0_74 = arith.constant 0 : index
    %104 = vector.load %arg5[%c3_73, %c0_74] : memref<4x32xf32, #tpu.memory_space<vmem>>, vector<1x32xf32>
    %c3_75 = arith.constant 3 : index
    %c0_76 = arith.constant 0 : index
    %c0_77 = arith.constant 0 : index
    %105 = vector.load %arg6[%c3_75, %c0_76, %c0_77] : memref<4x32x8xbf16, #tpu.memory_space<vmem>>, vector<1x32x8xbf16>
    %106 = vector.shape_cast %105 : vector<1x32x8xbf16> to vector<32x8xbf16>
    %c3_78 = arith.constant 3 : index
    %c0_79 = arith.constant 0 : index
    %c0_80 = arith.constant 0 : index
    %107 = vector.load %arg7[%c3_78, %c0_79, %c0_80] : memref<4x32x8xbf16, #tpu.memory_space<vmem>>, vector<1x32x8xbf16>
    %108 = vector.shape_cast %107 : vector<1x32x8xbf16> to vector<32x8xbf16>
    %c3_81 = arith.constant 3 : index
    %c0_82 = arith.constant 0 : index
    %109 = vector.load %arg8[%c3_81, %c0_82] : memref<4x8xf32, #tpu.memory_space<vmem>>, vector<1x8xf32>
    %c3_83 = arith.constant 3 : index
    %c0_84 = arith.constant 0 : index
    %110 = vector.load %arg9[%c3_83, %c0_84] : memref<4x8xf32, #tpu.memory_space<vmem>>, vector<1x8xf32>
    %111 = vector.broadcast %100 : vector<1x8xf32> to vector<256x8xf32>
    %112 = arith.mulf %99, %111 : vector<256x8xf32>
    %113 = arith.truncf %112 : vector<256x8xf32> to vector<256x8xbf16>
    %cst_85 = arith.constant dense<0.000000e+00> : vector<256x32xf32>
    %114 = tpu.matmul %113, %103, %cst_85 {dimension_numbers = #tpu.dot_dimension_numbers<[1], [0], [0], [1], [0, 0, 1, 1], [], []>} : vector<256x8xbf16>, vector<8x32xbf16>, vector<256x32xf32> -> vector<256x32xf32>
    %115 = vector.broadcast %104 : vector<1x32xf32> to vector<256x32xf32>
    %116 = arith.addf %114, %115 : vector<256x32xf32>
    %cst_86 = arith.constant 0.000000e+00 : f32
    %117 = vector.broadcast %cst_86 : f32 to vector<256x32xf32>
    %118 = arith.maximumf %116, %117 : vector<256x32xf32>
    %119 = arith.truncf %118 : vector<256x32xf32> to vector<256x32xbf16>
    %cst_87 = arith.constant dense<0.000000e+00> : vector<256x8xf32>
    %120 = tpu.matmul %119, %106, %cst_87 {dimension_numbers = #tpu.dot_dimension_numbers<[1], [0], [0], [1], [0, 0, 1, 1], [], []>} : vector<256x32xbf16>, vector<32x8xbf16>, vector<256x8xf32> -> vector<256x8xf32>
    %121 = vector.broadcast %109 : vector<1x8xf32> to vector<256x8xf32>
    %122 = arith.addf %120, %121 : vector<256x8xf32>
    %123 = math.tanh %122 : vector<256x8xf32>
    %cst_88 = arith.constant dense<0.000000e+00> : vector<256x8xf32>
    %124 = tpu.matmul %119, %108, %cst_88 {dimension_numbers = #tpu.dot_dimension_numbers<[1], [0], [0], [1], [0, 0, 1, 1], [], []>} : vector<256x32xbf16>, vector<32x8xbf16>, vector<256x8xf32> -> vector<256x8xf32>
    %125 = vector.broadcast %110 : vector<1x8xf32> to vector<256x8xf32>
    %126 = arith.addf %124, %125 : vector<256x8xf32>
    %127 = math.exp %123 : vector<256x8xf32>
    %128 = arith.mulf %99, %127 : vector<256x8xf32>
    %129 = arith.addf %128, %126 : vector<256x8xf32>
    %130 = vector.broadcast %101 : vector<1x8xf32> to vector<256x8xf32>
    %131 = arith.mulf %130, %129 : vector<256x8xf32>
    %132 = arith.addf %112, %131 : vector<256x8xf32>
    %c0_89 = arith.constant 0 : index
    %c0_90 = arith.constant 0 : index
    %133 = vector.load %arg10[%c0_89, %c0_90] : memref<256x8xf32, #tpu.memory_space<vmem>>, vector<256x8xf32>
    tpu.vector_store %arg10[%c0_89, %c0_90], %132 {strides = array<i32>} : memref<256x8xf32, #tpu.memory_space<vmem>>, vector<256x8xf32>,
    return
  }
  func.func @transform_0(%arg0: i32) -> (i32, i32) {
    %c0_i32 = arith.constant 0 : i32
    %c0_i32_0 = arith.constant 0 : i32
    return %arg0, %c0_i32 : i32, i32
  }
  func.func @transform_1(%arg0: i32) -> (i32, i32) {
    %c0_i32 = arith.constant 0 : i32
    %c0_i32_0 = arith.constant 0 : i32
    %c0_i32_1 = arith.constant 0 : i32
    return %c0_i32, %c0_i32_0 : i32, i32
  }
  func.func @transform_2(%arg0: i32) -> (i32, i32) {
    %c0_i32 = arith.constant 0 : i32
    %c0_i32_0 = arith.constant 0 : i32
    %c0_i32_1 = arith.constant 0 : i32
    return %c0_i32, %c0_i32_0 : i32, i32
  }
  func.func @transform_3(%arg0: i32) -> (i32, i32, i32) {
    %c0_i32 = arith.constant 0 : i32
    %c0_i32_0 = arith.constant 0 : i32
    %c0_i32_1 = arith.constant 0 : i32
    %c0_i32_2 = arith.constant 0 : i32
    return %c0_i32, %c0_i32_0, %c0_i32_1 : i32, i32, i32
  }
  func.func @transform_4(%arg0: i32) -> (i32, i32) {
    %c0_i32 = arith.constant 0 : i32
    %c0_i32_0 = arith.constant 0 : i32
    %c0_i32_1 = arith.constant 0 : i32
    return %c0_i32, %c0_i32_0 : i32, i32
  }
  func.func @transform_5(%arg0: i32) -> (i32, i32, i32) {
    %c0_i32 = arith.constant 0 : i32
    %c0_i32_0 = arith.constant 0 : i32
    %c0_i32_1 = arith.constant 0 : i32
    %c0_i32_2 = arith.constant 0 : i32
    return %c0_i32, %c0_i32_0, %c0_i32_1 : i32, i32, i32
  }
  func.func @transform_6(%arg0: i32) -> (i32, i32, i32) {
    %c0_i32 = arith.constant 0 : i32
    %c0_i32_0 = arith.constant 0 : i32
    %c0_i32_1 = arith.constant 0 : i32
    %c0_i32_2 = arith.constant 0 : i32
    return %c0_i32, %c0_i32_0, %c0_i32_1 : i32, i32, i32
  }
  func.func @transform_7(%arg0: i32) -> (i32, i32) {
    %c0_i32 = arith.constant 0 : i32
    %c0_i32_0 = arith.constant 0 : i32
    %c0_i32_1 = arith.constant 0 : i32
    return %c0_i32, %c0_i32_0 : i32, i32
  }
  func.func @transform_8(%arg0: i32) -> (i32, i32) {
    %c0_i32 = arith.constant 0 : i32
    %c0_i32_0 = arith.constant 0 : i32
    %c0_i32_1 = arith.constant 0 : i32
    return %c0_i32, %c0_i32_0 : i32, i32
  }
  func.func @transform_9(%arg0: i32) -> (i32, i32) {
    %c0_i32 = arith.constant 0 : i32
    %c0_i32_0 = arith.constant 0 : i32
    return %arg0, %c0_i32 : i32, i32
  }
}

</mosaic_0001>

<llo_original>
// kernel: tpu_custom_call.1
$region0: #{tpu_custom_call.1}
  #allocation0 [shape = 'u32[]', space=smem, size = 0x4, offset = 0x4, fixed_abs, tag = 'smem constant byte address 0x4 - core index']
  #allocation1 [shape = 'u32[144,128]{1,0:T(1,128)}', space=vmem, size = 0x12000, scoped, tag = 'internal scratch']
  %s0 = inlined_call_operand.vmem [shape: f32[512,8], index: 0, kind: input, shape index: {}]
  %s1 = inlined_call_operand.vmem [shape: f32[4,8], index: 1, kind: input, shape index: {}]
  %s2 = inlined_call_operand.vmem [shape: f32[4,8], index: 2, kind: input, shape index: {}]
  %s3 = inlined_call_operand.vmem [shape: bf16[4,8,32], index: 3, kind: input, shape index: {}]
  %s4 = inlined_call_operand.vmem [shape: f32[4,32], index: 4, kind: input, shape index: {}]
  %s5 = inlined_call_operand.vmem [shape: bf16[4,32,8], index: 5, kind: input, shape index: {}]
  %s6 = inlined_call_operand.vmem [shape: bf16[4,32,8], index: 6, kind: input, shape index: {}]
  %s7 = inlined_call_operand.vmem [shape: f32[4,8], index: 7, kind: input, shape index: {}]
  %s8 = inlined_call_operand.vmem [shape: f32[4,8], index: 8, kind: input, shape index: {}]
  %s9 = inlined_call_operand.vmem [shape: f32[512,8], index: 9, kind: output, shape index: {}]
  %s10 = sld [smem:[#allocation0]]
  $region69: #{tpu_custom_call.1} parent=0
    _
  %s12 = ssub.s32 1, %s10
  %s13 = scalar_select 0, %s12, %s10
  loop: start=0, step=1, limit=4
  $region2: #{tpu_custom_call.1} parent=0 // loop_pre_header
    _
  $region3: #{tpu_custom_call.1} parent=0 // loop_header
    %s15 = sphi 0, %s19
    %p16 = scmp.ge.s32.totalorder %s15, 4
    %s25 = sphi 0, %s27
    %s28 = sphi 0, %s25
    %s29 = sphi 0, %s28
    %s45 = sphi 0, %s29
    %s49 = sphi 0, %s49
    %s51 = sphi 0, %s49
    %s52 = sphi 0, %s51
    %s66 = sphi 0, %s52
    %s70 = sphi 0, %s70
    %s72 = sphi 0, %s70
    %s73 = sphi 0, %s72
    %s87 = sphi 0, %s73
    %s91 = sphi 0, %s91
    %s93 = sphi 0, %s91
    %s94 = sphi 0, %s93
    %s108 = sphi 0, %s94
    %s112 = sphi 0, %s112
    %s114 = sphi 0, %s112
    %s115 = sphi 0, %s114
    %s129 = sphi 0, %s115
    %s133 = sphi 0, %s133
    %s135 = sphi 0, %s133
    %s136 = sphi 0, %s135
    %s150 = sphi 0, %s136
    %s154 = sphi 0, %s154
    %s156 = sphi 0, %s154
    %s157 = sphi 0, %s156
    %s171 = sphi 0, %s157
    %s175 = sphi 0, %s175
    %s177 = sphi 0, %s175
    %s178 = sphi 0, %s177
    %s192 = sphi 0, %s178
    %s196 = sphi 0, %s196
    %s198 = sphi 0, %s196
    %s199 = sphi 0, %s198
    %s213 = sphi 0, %s199
    %s219 = sphi 0, %s221
    %s222 = sphi 0, %s219
    %s223 = sphi 0, %s222
    %s239 = sphi 0, %s223
  $region4: #{tpu_custom_call.1} parent=0 // loop_header_branch
    %18 = sbr.rel (%p16) target = $region8
  $region5: #{tpu_custom_call.1} parent=0 // loop_body
    %s20 = ssub.s32 %s15, 1
    %s21 = ssub.s32 %s15, 2
    %s22 = sadd.s32 %s15, 1
    %s23 = ssub.s32 %s15, %s22
    %p24 = scmp.eq.s32.totalorder %s23, 0
    %s26 = sadd.s32 %s25, 1
    %s27 = scalar_select %p24, %s25, %s26
    %p30 = pneg %p24
    %p31 = scmp.eq.s32.totalorder %s15, 1
    %p32 = por %p30, %p31
    %p33 = scmp.ne.s32.totalorder %s25, %s28
    %p34 = scmp.eq.s32.totalorder %s15, 0
    %p35 = por %p33, %p34
    %p36 = scmp.ne.s32.totalorder %s25, %s28
    %p37 = scmp.eq.s32.totalorder %s20, 1
    %p38 = por %p36, %p37
    %p39 = scmp.ne.s32.totalorder %s28, %s29
    %p40 = scmp.eq.s32.totalorder %s20, 0
    %p41 = por %p39, %p40
    %p42 = scmp.ne.s32.totalorder %s28, %s29
    %p43 = scmp.eq.s32.totalorder %s21, 1
    %p44 = por %p42, %p43
    %p46 = scmp.ne.s32.totalorder %s29, %s45
    %p47 = scmp.eq.s32.totalorder %s21, 0
    %p48 = por %p46, %p47
    %s50 = sadd.s32 %s49, 1
    %p53 = scmp.eq.s32.totalorder %s15, 1
    %p54 = scmp.ne.s32.totalorder %s49, %s51
    %p55 = scmp.eq.s32.totalorder %s15, 0
    %p56 = por %p54, %p55
    %p57 = scmp.ne.s32.totalorder %s49, %s51
    %p58 = scmp.eq.s32.totalorder %s20, 1
    %p59 = por %p57, %p58
    %p60 = scmp.ne.s32.totalorder %s51, %s52
    %p61 = scmp.eq.s32.totalorder %s20, 0
    %p62 = por %p60, %p61
    %p63 = scmp.ne.s32.totalorder %s51, %s52
    %p64 = scmp.eq.s32.totalorder %s21, 1
    %p65 = por %p63, %p64
    %p67 = scmp.ne.s32.totalorder %s52, %s66
    %p68 = scmp.eq.s32.totalorder %s21, 0
    %p69 = por %p67, %p68
    %s71 = sadd.s32 %s70, 1
    %p74 = scmp.eq.s32.totalorder %s15, 1
    %p75 = scmp.ne.s32.totalorder %s70, %s72
    %p76 = scmp.eq.s32.totalorder %s15, 0
    %p77 = por %p75, %p76
    %p78 = scmp.ne.s32.totalorder %s70, %s72
    %p79 = scmp.eq.s32.totalorder %s20, 1
    %p80 = por %p78, %p79
    %p81 = scmp.ne.s32.totalorder %s72, %s73
    %p82 = scmp.eq.s32.totalorder %s20, 0
    %p83 = por %p81, %p82
    %p84 = scmp.ne.s32.totalorder %s72, %s73
    %p85 = scmp.eq.s32.totalorder %s21, 1
    %p86 = por %p84, %p85
    %p88 = scmp.ne.s32.totalorder %s73, %s87
    %p89 = scmp.eq.s32.totalorder %s21, 0
    %p90 = por %p88, %p89
    %s92 = sadd.s32 %s91, 1
    %p95 = scmp.eq.s32.totalorder %s15, 1
    %p96 = scmp.ne.s32.totalorder %s91, %s93
    %p97 = scmp.eq.s32.totalorder %s15, 0
    %p98 = por %p96, %p97
    %p99 = scmp.ne.s32.totalorder %s91, %s93
    %p100 = scmp.eq.s32.totalorder %s20, 1
    %p101 = por %p99, %p100
    %p102 = scmp.ne.s32.totalorder %s93, %s94
    %p103 = scmp.eq.s32.totalorder %s20, 0
    %p104 = por %p102, %p103
    %p105 = scmp.ne.s32.totalorder %s93, %s94
    %p106 = scmp.eq.s32.totalorder %s21, 1
    %p107 = por %p105, %p106
    %p109 = scmp.ne.s32.totalorder %s94, %s108
    %p110 = scmp.eq.s32.totalorder %s21, 0
    %p111 = por %p109, %p110
    %s113 = sadd.s32 %s112, 1
    %p116 = scmp.eq.s32.totalorder %s15, 1
    %p117 = scmp.ne.s32.totalorder %s112, %s114
    %p118 = scmp.eq.s32.totalorder %s15, 0
    %p119 = por %p117, %p118
    %p120 = scmp.ne.s32.totalorder %s112, %s114
    %p121 = scmp.eq.s32.totalorder %s20, 1
    %p122 = por %p120, %p121
    %p123 = scmp.ne.s32.totalorder %s114, %s115
    %p124 = scmp.eq.s32.totalorder %s20, 0
    %p125 = por %p123, %p124
    %p126 = scmp.ne.s32.totalorder %s114, %s115
    %p127 = scmp.eq.s32.totalorder %s21, 1
    %p128 = por %p126, %p127
    %p130 = scmp.ne.s32.totalorder %s115, %s129
    %p131 = scmp.eq.s32.totalorder %s21, 0
    %p132 = por %p130, %p131
    %s134 = sadd.s32 %s133, 1
    %p137 = scmp.eq.s32.totalorder %s15, 1
    %p138 = scmp.ne.s32.totalorder %s133, %s135
    %p139 = scmp.eq.s32.totalorder %s15, 0
    %p140 = por %p138, %p139
    %p141 = scmp.ne.s32.totalorder %s133, %s135
    %p142 = scmp.eq.s32.totalorder %s20, 1
    %p143 = por %p141, %p142
    %p144 = scmp.ne.s32.totalorder %s135, %s136
    %p145 = scmp.eq.s32.totalorder %s20, 0
    %p146 = por %p144, %p145
    %p147 = scmp.ne.s32.totalorder %s135, %s136
    %p148 = scmp.eq.s32.totalorder %s21, 1
    %p149 = por %p147, %p148
    %p151 = scmp.ne.s32.totalorder %s136, %s150
    %p152 = scmp.eq.s32.totalorder %s21, 0
    %p153 = por %p151, %p152
    %s155 = sadd.s32 %s154, 1
    %p158 = scmp.eq.s32.totalorder %s15, 1
    %p159 = scmp.ne.s32.totalorder %s154, %s156
    %p160 = scmp.eq.s32.totalorder %s15, 0
    %p161 = por %p159, %p160
    %p162 = scmp.ne.s32.totalorder %s154, %s156
    %p163 = scmp.eq.s32.totalorder %s20, 1
    %p164 = por %p162, %p163
    %p165 = scmp.ne.s32.totalorder %s156, %s157
    %p166 = scmp.eq.s32.totalorder %s20, 0
    %p167 = por %p165, %p166
    %p168 = scmp.ne.s32.totalorder %s156, %s157
    %p169 = scmp.eq.s32.totalorder %s21, 1
    %p170 = por %p168, %p169
    %p172 = scmp.ne.s32.totalorder %s157, %s171
    %p173 = scmp.eq.s32.totalorder %s21, 0
    %p174 = por %p172, %p173
    %s176 = sadd.s32 %s175, 1
    %p179 = scmp.eq.s32.totalorder %s15, 1
    %p180 = scmp.ne.s32.totalorder %s175, %s177
    %p181 = scmp.eq.s32.totalorder %s15, 0
    %p182 = por %p180, %p181
    %p183 = scmp.ne.s32.totalorder %s175, %s177
    %p184 = scmp.eq.s32.totalorder %s20, 1
    %p185 = por %p183, %p184
    %p186 = scmp.ne.s32.totalorder %s177, %s178
    %p187 = scmp.eq.s32.totalorder %s20, 0
    %p188 = por %p186, %p187
    %p189 = scmp.ne.s32.totalorder %s177, %s178
    %p190 = scmp.eq.s32.totalorder %s21, 1
    %p191 = por %p189, %p190
    %p193 = scmp.ne.s32.totalorder %s178, %s192
    %p194 = scmp.eq.s32.totalorder %s21, 0
    %p195 = por %p193, %p194
    %s197 = sadd.s32 %s196, 1
    %p200 = scmp.eq.s32.totalorder %s15, 1
    %p201 = scmp.ne.s32.totalorder %s196, %s198
    %p202 = scmp.eq.s32.totalorder %s15, 0
    %p203 = por %p201, %p202
    %p204 = scmp.ne.s32.totalorder %s196, %s198
    %p205 = scmp.eq.s32.totalorder %s20, 1
    %p206 = por %p204, %p205
    %p207 = scmp.ne.s32.totalorder %s198, %s199
    %p208 = scmp.eq.s32.totalorder %s20, 0
    %p209 = por %p207, %p208
    %p210 = scmp.ne.s32.totalorder %s198, %s199
    %p211 = scmp.eq.s32.totalorder %s21, 1
    %p212 = por %p210, %p211
    %p214 = scmp.ne.s32.totalorder %s199, %s213
    %p215 = scmp.eq.s32.totalorder %s21, 0
    %p216 = por %p214, %p215
    %s217 = ssub.s32 %s15, %s22
    %p218 = scmp.eq.s32.totalorder %s217, 0
    %s220 = sadd.s32 %s219, 1
    %s221 = scalar_select %p218, %s219, %s220
    %p224 = pneg %p218
    %p225 = scmp.eq.s32.totalorder %s15, 1
    %p226 = por %p224, %p225
    %p227 = scmp.ne.s32.totalorder %s219, %s222
    %p228 = scmp.eq.s32.totalorder %s15, 0
    %p229 = por %p227, %p228
    %p230 = scmp.ne.s32.totalorder %s219, %s222
    %p231 = scmp.eq.s32.totalorder %s20, 1
    %p232 = por %p230, %p231
    %p233 = scmp.ne.s32.totalorder %s222, %s223
    %p234 = scmp.eq.s32.totalorder %s20, 0
    %p235 = por %p233, %p234
    %p236 = scmp.ne.s32.totalorder %s222, %s223
    %p237 = scmp.eq.s32.totalorder %s21, 1
    %p238 = por %p236, %p237
    %p240 = scmp.ne.s32.totalorder %s223, %s239
    %p241 = scmp.eq.s32.totalorder %s21, 0
    %p242 = por %p240, %p241
    %p243 = scmp.le.s32.totalorder 1, %s15
    %p244 = scmp.lt.s32.totalorder %s15, 3
    %p245 = pnand %p243, %p244
    %p246 = pneg %p245
    // Predicated region
    $region9: #{tpu_custom_call.1} parent=5 // pred_check
      _
    $region10: #{tpu_custom_call.1} parent=5 // pred_check_branch
      %248 = sbr.rel (%p245) target = $region12
    $region11: #{tpu_custom_call.1} parent=5 // pred_region
      %s249 = ssub.s32 %s15, 1
      // Predicated region
      $region13: #{tpu_custom_call.1} parent=11 // pred_check
        %p250 = pneg %p62
      $region14: #{tpu_custom_call.1} parent=11 // pred_check_branch
        %252 = sbr.rel (%p250) target = $region16
      $region15: #{tpu_custom_call.1} parent=11 // pred_region
        _
      $region16: #{tpu_custom_call.1} parent=11 // pred_fallthru
        _
      // Predicated region
      $region17: #{tpu_custom_call.1} parent=11 // pred_check
        %p253 = pneg %p83
      $region18: #{tpu_custom_call.1} parent=11 // pred_check_branch
        %255 = sbr.rel (%p253) target = $region20
      $region19: #{tpu_custom_call.1} parent=11 // pred_region
        _
      $region20: #{tpu_custom_call.1} parent=11 // pred_fallthru
        _
      // Predicated region
      $region21: #{tpu_custom_call.1} parent=11 // pred_check
        %p256 = pneg %p104
      $region22: #{tpu_custom_call.1} parent=11 // pred_check_branch
        %258 = sbr.rel (%p256) target = $region24
      $region23: #{tpu_custom_call.1} parent=11 // pred_region
        _
      $region24: #{tpu_custom_call.1} parent=11 // pred_fallthru
        _
      // Predicated region
      $region25: #{tpu_custom_call.1} parent=11 // pred_check
        %p259 = pneg %p125
      $region26: #{tpu_custom_call.1} parent=11 // pred_check_branch
        %261 = sbr.rel (%p259) target = $region28
      $region27: #{tpu_custom_call.1} parent=11 // pred_region
        _
      $region28: #{tpu_custom_call.1} parent=11 // pred_fallthru
        _
      // Predicated region
      $region29: #{tpu_custom_call.1} parent=11 // pred_check
        %p262 = pneg %p146
      $region30: #{tpu_custom_call.1} parent=11 // pred_check_branch
        %264 = sbr.rel (%p262) target = $region32
      $region31: #{tpu_custom_call.1} parent=11 // pred_region
        _
      $region32: #{tpu_custom_call.1} parent=11 // pred_fallthru
        _
      // Predicated region
      $region33: #{tpu_custom_call.1} parent=11 // pred_check
        %p265 = pneg %p167
      $region34: #{tpu_custom_call.1} parent=11 // pred_check_branch
        %267 = sbr.rel (%p265) target = $region36
      $region35: #{tpu_custom_call.1} parent=11 // pred_region
        _
      $region36: #{tpu_custom_call.1} parent=11 // pred_fallthru
        _
      // Predicated region
      $region37: #{tpu_custom_call.1} parent=11 // pred_check
        %p268 = pneg %p188
      $region38: #{tpu_custom_call.1} parent=11 // pred_check_branch
        %270 = sbr.rel (%p268) target = $region40
      $region39: #{tpu_custom_call.1} parent=11 // pred_region
        _
      $region40: #{tpu_custom_call.1} parent=11 // pred_fallthru
        _
      // Predicated region
      $region41: #{tpu_custom_call.1} parent=11 // pred_check
        %p271 = pneg %p209
      $region42: #{tpu_custom_call.1} parent=11 // pred_check_branch
        %273 = sbr.rel (%p271) target = $region44
      $region43: #{tpu_custom_call.1} parent=11 // pred_region
        _
      $region44: #{tpu_custom_call.1} parent=11 // pred_fallthru
        _
    $region12: #{tpu_custom_call.1} parent=5 // pred_fallthru
      _
    %p274 = scmp.lt.s32.totalorder %s15, 2
    // Predicated region
    $region45: #{tpu_custom_call.1} parent=5 // pred_check
      %p275 = pneg %p274
    $region46: #{tpu_custom_call.1} parent=5 // pred_check_branch
      %277 = sbr.rel (%p275) target = $region48
    $region47: #{tpu_custom_call.1} parent=5 // pred_region
      // Predicated region
      $region49: #{tpu_custom_call.1} parent=47 // pred_check
        %p278 = pneg %p35
      $region50: #{tpu_custom_call.1} parent=47 // pred_check_branch
        %280 = sbr.rel (%p278) target = $region52
      $region51: #{tpu_custom_call.1} parent=47 // pred_region
        %s281 = smul.u32 32, %s15
        %p282 = scmp.lt.s32.totalorder %s281, 63
        %s283 = scalar_select %p282, %s281, 63
        %s284 = smul.addr %s283, 8
        %s285 = scalar_lea.vmem %s0, %s284
        %s286 = smul.u32 32, %s15
      $region52: #{tpu_custom_call.1} parent=47 // pred_fallthru
        _
    $region48: #{tpu_custom_call.1} parent=5 // pred_fallthru
      _
    %p287 = scmp.le.s32.totalorder 1, %s15
    %p288 = scmp.lt.s32.totalorder %s15, 3
    %p289 = pnand %p287, %p288
    %p290 = pneg %p289
    // Predicated region
    $region53: #{tpu_custom_call.1} parent=5 // pred_check
      _
    $region54: #{tpu_custom_call.1} parent=5 // pred_check_branch
      %292 = sbr.rel (%p289) target = $region56
    $region55: #{tpu_custom_call.1} parent=5 // pred_region
      %s293 = ssub.s32 %s15, 1
      %s294 = smul.u32 32, %s20
      %p295 = scmp.lt.s32.totalorder %s294, 63
      %s296 = scalar_select %p295, %s294, 63
      %s297 = smul.addr %s296, 8
      %s298 = scalar_lea.vmem %s0, %s297
      %p299 = pneg %p41
      %p300 = pneg %p38
      %p301 = pneg %p62
      %p302 = pneg %p59
      %p303 = pneg %p83
      %p304 = pneg %p80
      %p305 = pneg %p104
      %p306 = pneg %p101
      %p307 = pneg %p125
      %p308 = pneg %p122
      %p309 = pneg %p146
      %p310 = pneg %p143
      %p311 = pneg %p167
      %p312 = pneg %p164
      %p313 = pneg %p188
      %p314 = pneg %p185
      %p315 = pneg %p209
      %p316 = pneg %p206
      %p317 = pneg %p235
      %p318 = pneg %p232
      %s319 = smul.u32 32, %s20
      %p320 = scmp.lt.s32.totalorder %s319, 63
      %s321 = scalar_select %p320, %s319, 63
      %s322 = smul.addr %s321, 8
      %s323 = scalar_lea.vmem %s9, %s322
      %s324 = smul.u32 32, %s20
      %p325 = scmp.lt.s32.totalorder %s324, 63
      %s326 = scalar_select %p325, %s324, 63
      %s327 = smul.addr %s326, 8
      %s328 = scalar_lea.vmem %s0, %s327
      %s329 = smul.u32 32, %s20
      %s330 = smul.u32 32, %s20
      %p331 = scmp.lt.s32.totalorder %s330, 63
      %s332 = scalar_select %p331, %s330, 63
      %s333 = smul.addr %s332, 8
      %s334 = scalar_lea.vmem %s9, %s333
      %s335 = smul.u32 32, %s20
      %v337 = vld [vmem:[%s328] sm:$0xff]
      %v338 = vld [vmem:[%s328 + $0x8] sm:$0xff]
      %v339 = vld [vmem:[%s328 + $0x10] sm:$0xff]
      %v340 = vld [vmem:[%s328 + $0x18] sm:$0xff]
      %v341 = vld [vmem:[%s328 + $0x20] sm:$0xff]
      %v342 = vld [vmem:[%s328 + $0x28] sm:$0xff]
      %v343 = vld [vmem:[%s328 + $0x30] sm:$0xff]
      %v344 = vld [vmem:[%s328 + $0x38] sm:$0xff]
      %v345 = vld [vmem:[%s328 + $0x40] sm:$0xff]
      %v346 = vld [vmem:[%s328 + $0x48] sm:$0xff]
      %v347 = vld [vmem:[%s328 + $0x50] sm:$0xff]
      %v348 = vld [vmem:[%s328 + $0x58] sm:$0xff]
      %v349 = vld [vmem:[%s328 + $0x60] sm:$0xff]
      %v350 = vld [vmem:[%s328 + $0x68] sm:$0xff]
      %v351 = vld [vmem:[%s328 + $0x70] sm:$0xff]
      %v352 = vld [vmem:[%s328 + $0x78] sm:$0xff]
      %v353 = vld [vmem:[%s328 + $0x80] sm:$0xff]
      %v354 = vld [vmem:[%s328 + $0x88] sm:$0xff]
      %v355 = vld [vmem:[%s328 + $0x90] sm:$0xff]
      %v356 = vld [vmem:[%s328 + $0x98] sm:$0xff]
      %v357 = vld [vmem:[%s328 + $0xa0] sm:$0xff]
      %v358 = vld [vmem:[%s328 + $0xa8] sm:$0xff]
      %v359 = vld [vmem:[%s328 + $0xb0] sm:$0xff]
      %v360 = vld [vmem:[%s328 + $0xb8] sm:$0xff]
      %v361 = vld [vmem:[%s328 + $0xc0] sm:$0xff]
      %v362 = vld [vmem:[%s328 + $0xc8] sm:$0xff]
      %v363 = vld [vmem:[%s328 + $0xd0] sm:$0xff]
      %v364 = vld [vmem:[%s328 + $0xd8] sm:$0xff]
      %v365 = vld [vmem:[%s328 + $0xe0] sm:$0xff]
      %v366 = vld [vmem:[%s328 + $0xe8] sm:$0xff]
      %v367 = vld [vmem:[%s328 + $0xf0] sm:$0xff]
      %v368 = vld [vmem:[%s328 + $0xf8] sm:$0xff]
      %v369 = vld [vmem:[%s1] sm:$0x1]
      %v370 = vld [vmem:[%s2] sm:$0x1]
      %v371 = vld [vmem:[%s3] sm:$0xf]
      %v372 = vld [vmem:[%s4] sm:$0x1]
      %v373 = vld [vmem:[%s5] sm:$0xf]
      %v374 = vld [vmem:[%s5 + $0x4] sm:$0xf]
      %v375 = vld [vmem:[%s5 + $0x8] sm:$0xf]
      %v376 = vld [vmem:[%s5 + $0xc] sm:$0xf]
      %v377 = vld [vmem:[%s6] sm:$0xf]
      %v378 = vld [vmem:[%s6 + $0x4] sm:$0xf]
      %v379 = vld [vmem:[%s6 + $0x8] sm:$0xf]
      %v380 = vld [vmem:[%s6 + $0xc] sm:$0xf]
      %v381 = vld [vmem:[%s7] sm:$0x1]
      %v382 = vld [vmem:[%s8] sm:$0x1]
      %v383 = vlaneseq
      %v384 = vshrl.u32 %v383, 7
      %v385 = vsub.s32 0, %v384
      %v386 = vrot.slane %v369, %v385
      %v387 = vmul.f32 %v337, %v386
      %v388 = vmul.f32 %v338, %v386
      %v389 = vmul.f32 %v339, %v386
      %v390 = vmul.f32 %v340, %v386
      %v391 = vmul.f32 %v341, %v386
      %v392 = vmul.f32 %v342, %v386
      %v393 = vmul.f32 %v343, %v386
      %v394 = vmul.f32 %v344, %v386
      %v395 = vmul.f32 %v345, %v386
      %v396 = vmul.f32 %v346, %v386
      %v397 = vmul.f32 %v347, %v386
      %v398 = vmul.f32 %v348, %v386
      %v399 = vmul.f32 %v349, %v386
      %v400 = vmul.f32 %v350, %v386
      %v401 = vmul.f32 %v351, %v386
      %v402 = vmul.f32 %v352, %v386
      %v403 = vmul.f32 %v353, %v386
      %v404 = vmul.f32 %v354, %v386
      %v405 = vmul.f32 %v355, %v386
      %v406 = vmul.f32 %v356, %v386
      %v407 = vmul.f32 %v357, %v386
      %v408 = vmul.f32 %v358, %v386
      %v409 = vmul.f32 %v359, %v386
      %v410 = vmul.f32 %v360, %v386
      %v411 = vmul.f32 %v361, %v386
      %v412 = vmul.f32 %v362, %v386
      %v413 = vmul.f32 %v363, %v386
      %v414 = vmul.f32 %v364, %v386
      %v415 = vmul.f32 %v365, %v386
      %v416 = vmul.f32 %v366, %v386
      %v417 = vmul.f32 %v367, %v386
      %v418 = vmul.f32 %v368, %v386
      %v419 = vpack.c.bf16 %v388, %v387
      %v420 = vpack.c.bf16 %v390, %v389
      %v421 = vpack.c.bf16 %v392, %v391
      %v422 = vpack.c.bf16 %v394, %v393
      %v423 = vpack.c.bf16 %v396, %v395
      %v424 = vpack.c.bf16 %v398, %v397
      %v425 = vpack.c.bf16 %v400, %v399
      %v426 = vpack.c.bf16 %v402, %v401
      %v427 = vpack.c.bf16 %v404, %v403
      %v428 = vpack.c.bf16 %v406, %v405
      %v429 = vpack.c.bf16 %v408, %v407
      %v430 = vpack.c.bf16 %v410, %v409
      %v431 = vpack.c.bf16 %v412, %v411
      %v432 = vpack.c.bf16 %v414, %v413
      %v433 = vpack.c.bf16 %v416, %v415
      %v434 = vpack.c.bf16 %v418, %v417
      %v435 = vlaneseq
      %v436 = vshrl.u32 %v435, 7
      %v437 = vsub.s32 0, %v436
      %v438 = vrot.slane %v372, %v437
      %vm439 = vcmask 64512
      %v441 = vsel %vm439, %v419, 0
      %v444 = vsel %vm439, %v420, 0
      %v447 = vsel %vm439, %v421, 0
      %v450 = vsel %vm439, %v422, 0
      %v453 = vsel %vm439, %v423, 0
      %v456 = vsel %vm439, %v424, 0
      %v459 = vsel %vm439, %v425, 0
      %v462 = vsel %vm439, %v426, 0
      %v465 = vsel %vm439, %v427, 0
      %v468 = vsel %vm439, %v428, 0
      %v471 = vsel %vm439, %v429, 0
      %v474 = vsel %vm439, %v430, 0
      %v477 = vsel %vm439, %v431, 0
      %v480 = vsel %vm439, %v432, 0
      %v483 = vsel %vm439, %v433, 0
      %v486 = vsel %vm439, %v434, 0
      %vm488 = vcmask 1043456
      %v490 = vsel %vm488, %v371, 0
      %492 = vmatprep.subr.bf16.mxu0 0
      %493 = vmatpush1.bf16.msra.mxu0 %v490
      %494 = vmatprep.subr.bf16.mxu0 0
      %495 = vmatpush1.bf16.msra.mxu0 0
      %496 = vmatprep.subr.bf16.mxu0 0
      %497 = vmatpush1.bf16.msra.mxu0 0
      %498 = vmatprep.subr.bf16.mxu0 0
      %499 = vmatpush1.bf16.msra.mxu0 0
      %500 = vmatprep.subr.bf16.mxu0 0
      %501 = vmatpush1.bf16.msra.mxu0 0
      %502 = vmatprep.subr.bf16.mxu0 0
      %503 = vmatpush1.bf16.msra.mxu0 0
      %504 = vmatprep.subr.bf16.mxu0 0
      %505 = vmatpush1.bf16.msra.mxu0 0
      %506 = vmatprep.subr.bf16.mxu0 0
      %507 = vmatpush1.bf16.msra.mxu0 0
      %508 = vmatprep.subr.bf16.mxu0 0
      %509 = vmatpush1.bf16.msra.mxu0 0
      %510 = vmatprep.subr.bf16.mxu0 0
      %511 = vmatpush1.bf16.msra.mxu0 0
      %512 = vmatprep.subr.bf16.mxu0 0
      %513 = vmatpush1.bf16.msra.mxu0 0
      %514 = vmatprep.subr.bf16.mxu0 0
      %515 = vmatpush1.bf16.msra.mxu0 0
      %516 = vmatprep.subr.bf16.mxu0 0
      %517 = vmatpush1.bf16.msra.mxu0 0
      %518 = vmatprep.subr.bf16.mxu0 0
      %519 = vmatpush1.bf16.msra.mxu0 0
      %520 = vmatprep.subr.bf16.mxu0 0
      %521 = vmatpush1.bf16.msra.mxu0 0
      %522 = vmatprep.subr.bf16.mxu0 0
      %523 = vmatpush1.bf16.msra.mxu0 0
      %524 = vmatprep.mubr.bf16.mxu0 0
      %525 = vmatmul.mubr.bf16.gmra.mrb[0].mxu0 %v441
      %v526 = vpop.f32.mrb[0].mxu0
      %v527 = vadd.f32 %v438, %v526
      %v528 = vpop.f32.mrb[0].mxu0
      %v529 = vpop.f32.mrb[0].mxu0
      %v530 = vadd.f32 %v438, %v529
      %v531 = vpop.f32.mrb[0].mxu0
      %532 = vmatprep.mubr.bf16.mxu0 0
      %533 = vmatmul.mubr.bf16.gmra.mrb[0].mxu0 %v444
      %v534 = vpop.f32.mrb[0].mxu0
      %v535 = vadd.f32 %v438, %v534
      %v536 = vpop.f32.mrb[0].mxu0
      %v537 = vpop.f32.mrb[0].mxu0
      %v538 = vadd.f32 %v438, %v537
      %v539 = vpop.f32.mrb[0].mxu0
      %540 = vmatprep.mubr.bf16.mxu0 0
      %541 = vmatmul.mubr.bf16.gmra.mrb[0].mxu0 %v447
      %v542 = vpop.f32.mrb[0].mxu0
      %v543 = vadd.f32 %v438, %v542
      %v544 = vpop.f32.mrb[0].mxu0
      %v545 = vpop.f32.mrb[0].mxu0
      %v546 = vadd.f32 %v438, %v545
      %v547 = vpop.f32.mrb[0].mxu0
      %548 = vmatprep.mubr.bf16.mxu0 0
      %549 = vmatmul.mubr.bf16.gmra.mrb[0].mxu0 %v450
      %v550 = vpop.f32.mrb[0].mxu0
      %v551 = vadd.f32 %v438, %v550
      %v552 = vpop.f32.mrb[0].mxu0
      %v553 = vpop.f32.mrb[0].mxu0
      %v554 = vadd.f32 %v438, %v553
      %v555 = vpop.f32.mrb[0].mxu0
      %556 = vmatprep.mubr.bf16.mxu0 0
      %557 = vmatmul.mubr.bf16.gmra.mrb[0].mxu0 %v453
      %v558 = vpop.f32.mrb[0].mxu0
      %v559 = vadd.f32 %v438, %v558
      %v560 = vpop.f32.mrb[0].mxu0
      %v561 = vpop.f32.mrb[0].mxu0
      %v562 = vadd.f32 %v438, %v561
      %v563 = vpop.f32.mrb[0].mxu0
      %564 = vmatprep.mubr.bf16.mxu0 0
      %565 = vmatmul.mubr.bf16.gmra.mrb[0].mxu0 %v456
      %v566 = vpop.f32.mrb[0].mxu0
      %v567 = vadd.f32 %v438, %v566
      %v568 = vpop.f32.mrb[0].mxu0
      %v569 = vpop.f32.mrb[0].mxu0
      %v570 = vadd.f32 %v438, %v569
      %v571 = vpop.f32.mrb[0].mxu0
      %572 = vmatprep.mubr.bf16.mxu0 0
      %573 = vmatmul.mubr.bf16.gmra.mrb[0].mxu0 %v459
      %v574 = vpop.f32.mrb[0].mxu0
      %v575 = vadd.f32 %v438, %v574
      %v576 = vpop.f32.mrb[0].mxu0
      %v577 = vpop.f32.mrb[0].mxu0
      %v578 = vadd.f32 %v438, %v577
      %v579 = vpop.f32.mrb[0].mxu0
      %580 = vmatprep.mubr.bf16.mxu0 0
      %581 = vmatmul.mubr.bf16.gmra.mrb[0].mxu0 %v462
      %v582 = vpop.f32.mrb[0].mxu0
      %v583 = vadd.f32 %v438, %v582
      %v584 = vpop.f32.mrb[0].mxu0
      %v585 = vpop.f32.mrb[0].mxu0
      %v586 = vadd.f32 %v438, %v585
      %v587 = vpop.f32.mrb[0].mxu0
      %588 = vmatprep.mubr.bf16.mxu0 0
      %589 = vmatmul.mubr.bf16.gmra.mrb[0].mxu0 %v465
      %v590 = vpop.f32.mrb[0].mxu0
      %v591 = vadd.f32 %v438, %v590
      %v592 = vpop.f32.mrb[0].mxu0
      %v593 = vpop.f32.mrb[0].mxu0
      %v594 = vadd.f32 %v438, %v593
      %v595 = vpop.f32.mrb[0].mxu0
      %596 = vmatprep.mubr.bf16.mxu0 0
      %597 = vmatmul.mubr.bf16.gmra.mrb[0].mxu0 %v468
      %v598 = vpop.f32.mrb[0].mxu0
      %v599 = vadd.f32 %v438, %v598
      %v600 = vpop.f32.mrb[0].mxu0
      %v601 = vpop.f32.mrb[0].mxu0
      %v602 = vadd.f32 %v438, %v601
      %v603 = vpop.f32.mrb[0].mxu0
      %604 = vmatprep.mubr.bf16.mxu0 0
      %605 = vmatmul.mubr.bf16.gmra.mrb[0].mxu0 %v471
      %v606 = vpop.f32.mrb[0].mxu0
      %v607 = vadd.f32 %v438, %v606
      %v608 = vpop.f32.mrb[0].mxu0
      %v609 = vpop.f32.mrb[0].mxu0
      %v610 = vadd.f32 %v438, %v609
      %v611 = vpop.f32.mrb[0].mxu0
      %612 = vmatprep.mubr.bf16.mxu0 0
      %613 = vmatmul.mubr.bf16.gmra.mrb[0].mxu0 %v474
      %v614 = vpop.f32.mrb[0].mxu0
      %v615 = vadd.f32 %v438, %v614
      %v616 = vpop.f32.mrb[0].mxu0
      %v617 = vpop.f32.mrb[0].mxu0
      %v618 = vadd.f32 %v438, %v617
      %v619 = vpop.f32.mrb[0].mxu0
      %620 = vmatprep.mubr.bf16.mxu0 0
      %621 = vmatmul.mubr.bf16.gmra.mrb[0].mxu0 %v477
      %v622 = vpop.f32.mrb[0].mxu0
      %v623 = vadd.f32 %v438, %v622
      %v624 = vpop.f32.mrb[0].mxu0
      %v625 = vpop.f32.mrb[0].mxu0
      %v626 = vadd.f32 %v438, %v625
      %v627 = vpop.f32.mrb[0].mxu0
      %628 = vmatprep.mubr.bf16.mxu0 0
      %629 = vmatmul.mubr.bf16.gmra.mrb[0].mxu0 %v480
      %v630 = vpop.f32.mrb[0].mxu0
      %v631 = vadd.f32 %v438, %v630
      %v632 = vpop.f32.mrb[0].mxu0
      %v633 = vpop.f32.mrb[0].mxu0
      %v634 = vadd.f32 %v438, %v633
      %v635 = vpop.f32.mrb[0].mxu0
      %636 = vmatprep.mubr.bf16.mxu0 0
      %637 = vmatmul.mubr.bf16.gmra.mrb[0].mxu0 %v483
      %v638 = vpop.f32.mrb[0].mxu0
      %v639 = vadd.f32 %v438, %v638
      %v640 = vpop.f32.mrb[0].mxu0
      %v641 = vpop.f32.mrb[0].mxu0
      %v642 = vadd.f32 %v438, %v641
      %v643 = vpop.f32.mrb[0].mxu0
      %644 = vmatprep.mubr.bf16.mxu0 0
      %645 = vmatmul.mubr.bf16.gmra.mrb[0].mxu0 %v486
      %v646 = vpop.f32.mrb[0].mxu0
      %v647 = vadd.f32 %v438, %v646
      %v648 = vpop.f32.mrb[0].mxu0
      %v649 = vpop.f32.mrb[0].mxu0
      %v650 = vadd.f32 %v438, %v649
      %v651 = vpop.f32.mrb[0].mxu0
      %652 = vdwg.mxu0
      %v653 = vmax.f32 %v527, 0.0
      %v654 = vmax.f32 %v530, 0.0
      %v655 = vmax.f32 %v535, 0.0
      %v656 = vmax.f32 %v538, 0.0
      %v657 = vmax.f32 %v543, 0.0
      %v658 = vmax.f32 %v546, 0.0
      %v659 = vmax.f32 %v551, 0.0
      %v660 = vmax.f32 %v554, 0.0
      %v661 = vmax.f32 %v559, 0.0
      %v662 = vmax.f32 %v562, 0.0
      %v663 = vmax.f32 %v567, 0.0
      %v664 = vmax.f32 %v570, 0.0
      %v665 = vmax.f32 %v575, 0.0
      %v666 = vmax.f32 %v578, 0.0
      %v667 = vmax.f32 %v583, 0.0
      %v668 = vmax.f32 %v586, 0.0
      %v669 = vmax.f32 %v591, 0.0
      %v670 = vmax.f32 %v594, 0.0
      %v671 = vmax.f32 %v599, 0.0
      %v672 = vmax.f32 %v602, 0.0
      %v673 = vmax.f32 %v607, 0.0
      %v674 = vmax.f32 %v610, 0.0
      %v675 = vmax.f32 %v615, 0.0
      %v676 = vmax.f32 %v618, 0.0
      %v677 = vmax.f32 %v623, 0.0
      %v678 = vmax.f32 %v626, 0.0
      %v679 = vmax.f32 %v631, 0.0
      %v680 = vmax.f32 %v634, 0.0
      %v681 = vmax.f32 %v639, 0.0
      %v682 = vmax.f32 %v642, 0.0
      %v683 = vmax.f32 %v647, 0.0
      %v684 = vmax.f32 %v650, 0.0
      %v685 = vpack.c.bf16 %v654, %v653
      %v686 = vpack.c.bf16 %v656, %v655
      %v687 = vpack.c.bf16 %v658, %v657
      %v688 = vpack.c.bf16 %v660, %v659
      %v689 = vpack.c.bf16 %v662, %v661
      %v690 = vpack.c.bf16 %v664, %v663
      %v691 = vpack.c.bf16 %v666, %v665
      %v692 = vpack.c.bf16 %v668, %v667
      %v693 = vpack.c.bf16 %v670, %v669
      %v694 = vpack.c.bf16 %v672, %v671
      %v695 = vpack.c.bf16 %v674, %v673
      %v696 = vpack.c.bf16 %v676, %v675
      %v697 = vpack.c.bf16 %v678, %v677
      %v698 = vpack.c.bf16 %v680, %v679
      %v699 = vpack.c.bf16 %v682, %v681
      %v700 = vpack.c.bf16 %v684, %v683
      %v701 = vlaneseq
      %v702 = vshrl.u32 %v701, 7
      %v703 = vsub.s32 0, %v702
      %v704 = vrot.slane %v381, %v703
      %v709 = vunpack.c.l.b16 %v373
      %v710 = vunpack.c.l.b16 %v374
      %v711 = vunpack.c.l.b16 %v375
      %v712 = vunpack.c.l.b16 %v376
      %v713 = vpack.c.b16 %v710, %v709
      %v714 = vpack.c.b16 %v712, %v711
      %vm717 = vcmask 261120
      %v719 = vsel %vm717, %v685, 0
      %v722 = vsel %vm717, %v686, 0
      %v725 = vsel %vm717, %v687, 0
      %v728 = vsel %vm717, %v688, 0
      %v731 = vsel %vm717, %v689, 0
      %v734 = vsel %vm717, %v690, 0
      %v737 = vsel %vm717, %v691, 0
      %v740 = vsel %vm717, %v692, 0
      %v743 = vsel %vm717, %v693, 0
      %v746 = vsel %vm717, %v694, 0
      %v749 = vsel %vm717, %v695, 0
      %v752 = vsel %vm717, %v696, 0
      %v755 = vsel %vm717, %v697, 0
      %v758 = vsel %vm717, %v698, 0
      %v761 = vsel %vm717, %v699, 0
      %v764 = vsel %vm717, %v700, 0
      %766 = vmatprep.subr.bf16.mxu0 0
      %767 = vmatpush1.bf16.msra.mxu0 %v713
      %768 = vmatprep.subr.bf16.mxu0 0
      %769 = vmatpush1.bf16.msra.mxu0 %v714
      %770 = vmatprep.subr.bf16.mxu0 0
      %771 = vmatpush1.bf16.msra.mxu0 0
      %772 = vmatprep.subr.bf16.mxu0 0
      %773 = vmatpush1.bf16.msra.mxu0 0
      %774 = vmatprep.subr.bf16.mxu0 0
      %775 = vmatpush1.bf16.msra.mxu0 0
      %776 = vmatprep.subr.bf16.mxu0 0
      %777 = vmatpush1.bf16.msra.mxu0 0
      %778 = vmatprep.subr.bf16.mxu0 0
      %779 = vmatpush1.bf16.msra.mxu0 0
      %780 = vmatprep.subr.bf16.mxu0 0
      %781 = vmatpush1.bf16.msra.mxu0 0
      %782 = vmatprep.subr.bf16.mxu0 0
      %783 = vmatpush1.bf16.msra.mxu0 0
      %784 = vmatprep.subr.bf16.mxu0 0
      %785 = vmatpush1.bf16.msra.mxu0 0
      %786 = vmatprep.subr.bf16.mxu0 0
      %787 = vmatpush1.bf16.msra.mxu0 0
      %788 = vmatprep.subr.bf16.mxu0 0
      %789 = vmatpush1.bf16.msra.mxu0 0
      %790 = vmatprep.subr.bf16.mxu0 0
      %791 = vmatpush1.bf16.msra.mxu0 0
      %792 = vmatprep.subr.bf16.mxu0 0
      %793 = vmatpush1.bf16.msra.mxu0 0
      %794 = vmatprep.subr.bf16.mxu0 0
      %795 = vmatpush1.bf16.msra.mxu0 0
      %796 = vmatprep.subr.bf16.mxu0 0
      %797 = vmatpush1.bf16.msra.mxu0 0
      %798 = vmatprep.mubr.bf16.mxu0 0
      %799 = vmatmul.mubr.bf16.gmra.mrb[0].mxu0 %v719
      %v800 = vpop.f32.mrb[0].mxu0
      %v801 = vadd.f32 %v704, %v800
      %v802 = vpop.f32.mrb[0].mxu0
      %v803 = vpop.f32.mrb[0].mxu0
      %v804 = vadd.f32 %v704, %v803
      %v805 = vpop.f32.mrb[0].mxu0
      %806 = vmatprep.mubr.bf16.mxu0 0
      %807 = vmatmul.mubr.bf16.gmra.mrb[0].mxu0 %v722
      %v808 = vpop.f32.mrb[0].mxu0
      %v809 = vadd.f32 %v704, %v808
      %v810 = vpop.f32.mrb[0].mxu0
      %v811 = vpop.f32.mrb[0].mxu0
      %v812 = vadd.f32 %v704, %v811
      %v813 = vpop.f32.mrb[0].mxu0
      %814 = vmatprep.mubr.bf16.mxu0 0
      %815 = vmatmul.mubr.bf16.gmra.mrb[0].mxu0 %v725
      %v816 = vpop.f32.mrb[0].mxu0
      %v817 = vadd.f32 %v704, %v816
      %v818 = vpop.f32.mrb[0].mxu0
      %v819 = vpop.f32.mrb[0].mxu0
      %v820 = vadd.f32 %v704, %v819
      %v821 = vpop.f32.mrb[0].mxu0
      %822 = vmatprep.mubr.bf16.mxu0 0
      %823 = vmatmul.mubr.bf16.gmra.mrb[0].mxu0 %v728
      %v824 = vpop.f32.mrb[0].mxu0
      %v825 = vadd.f32 %v704, %v824
      %v826 = vpop.f32.mrb[0].mxu0
      %v827 = vpop.f32.mrb[0].mxu0
      %v828 = vadd.f32 %v704, %v827
      %v829 = vpop.f32.mrb[0].mxu0
      %830 = vmatprep.mubr.bf16.mxu0 0
      %831 = vmatmul.mubr.bf16.gmra.mrb[0].mxu0 %v731
      %v832 = vpop.f32.mrb[0].mxu0
      %v833 = vadd.f32 %v704, %v832
      %v834 = vpop.f32.mrb[0].mxu0
      %v835 = vpop.f32.mrb[0].mxu0
      %v836 = vadd.f32 %v704, %v835
      %v837 = vpop.f32.mrb[0].mxu0
      %838 = vmatprep.mubr.bf16.mxu0 0
      %839 = vmatmul.mubr.bf16.gmra.mrb[0].mxu0 %v734
      %v840 = vpop.f32.mrb[0].mxu0
      %v841 = vadd.f32 %v704, %v840
      %v842 = vpop.f32.mrb[0].mxu0
      %v843 = vpop.f32.mrb[0].mxu0
      %v844 = vadd.f32 %v704, %v843
      %v845 = vpop.f32.mrb[0].mxu0
      %846 = vmatprep.mubr.bf16.mxu0 0
      %847 = vmatmul.mubr.bf16.gmra.mrb[0].mxu0 %v737
      %v848 = vpop.f32.mrb[0].mxu0
      %v849 = vadd.f32 %v704, %v848
      %v850 = vpop.f32.mrb[0].mxu0
      %v851 = vpop.f32.mrb[0].mxu0
      %v852 = vadd.f32 %v704, %v851
      %v853 = vpop.f32.mrb[0].mxu0
      %854 = vmatprep.mubr.bf16.mxu0 0
      %855 = vmatmul.mubr.bf16.gmra.mrb[0].mxu0 %v740
      %v856 = vpop.f32.mrb[0].mxu0
      %v857 = vadd.f32 %v704, %v856
      %v858 = vpop.f32.mrb[0].mxu0
      %v859 = vpop.f32.mrb[0].mxu0
      %v860 = vadd.f32 %v704, %v859
      %v861 = vpop.f32.mrb[0].mxu0
      %862 = vmatprep.mubr.bf16.mxu0 0
      %863 = vmatmul.mubr.bf16.gmra.mrb[0].mxu0 %v743
      %v864 = vpop.f32.mrb[0].mxu0
      %v865 = vadd.f32 %v704, %v864
      %v866 = vpop.f32.mrb[0].mxu0
      %v867 = vpop.f32.mrb[0].mxu0
      %v868 = vadd.f32 %v704, %v867
      %v869 = vpop.f32.mrb[0].mxu0
      %870 = vmatprep.mubr.bf16.mxu0 0
      %871 = vmatmul.mubr.bf16.gmra.mrb[0].mxu0 %v746
      %v872 = vpop.f32.mrb[0].mxu0
      %v873 = vadd.f32 %v704, %v872
      %v874 = vpop.f32.mrb[0].mxu0
      %v875 = vpop.f32.mrb[0].mxu0
      %v876 = vadd.f32 %v704, %v875
      %v877 = vpop.f32.mrb[0].mxu0
      %878 = vmatprep.mubr.bf16.mxu0 0
      %879 = vmatmul.mubr.bf16.gmra.mrb[0].mxu0 %v749
      %v880 = vpop.f32.mrb[0].mxu0
      %v881 = vadd.f32 %v704, %v880
      %v882 = vpop.f32.mrb[0].mxu0
      %v883 = vpop.f32.mrb[0].mxu0
      %v884 = vadd.f32 %v704, %v883
      %v885 = vpop.f32.mrb[0].mxu0
      %886 = vmatprep.mubr.bf16.mxu0 0
      %887 = vmatmul.mubr.bf16.gmra.mrb[0].mxu0 %v752
      %v888 = vpop.f32.mrb[0].mxu0
      %v889 = vadd.f32 %v704, %v888
      %v890 = vpop.f32.mrb[0].mxu0
      %v891 = vpop.f32.mrb[0].mxu0
      %v892 = vadd.f32 %v704, %v891
      %v893 = vpop.f32.mrb[0].mxu0
      %894 = vmatprep.mubr.bf16.mxu0 0
      %895 = vmatmul.mubr.bf16.gmra.mrb[0].mxu0 %v755
      %v896 = vpop.f32.mrb[0].mxu0
      %v897 = vadd.f32 %v704, %v896
      %v898 = vpop.f32.mrb[0].mxu0
      %v899 = vpop.f32.mrb[0].mxu0
      %v900 = vadd.f32 %v704, %v899
      %v901 = vpop.f32.mrb[0].mxu0
      %902 = vmatprep.mubr.bf16.mxu0 0
      %903 = vmatmul.mubr.bf16.gmra.mrb[0].mxu0 %v758
      %v904 = vpop.f32.mrb[0].mxu0
      %v905 = vadd.f32 %v704, %v904
      %v906 = vpop.f32.mrb[0].mxu0
      %v907 = vpop.f32.mrb[0].mxu0
      %v908 = vadd.f32 %v704, %v907
      %v909 = vpop.f32.mrb[0].mxu0
      %910 = vmatprep.mubr.bf16.mxu0 0
      %911 = vmatmul.mubr.bf16.gmra.mrb[0].mxu0 %v761
      %v912 = vpop.f32.mrb[0].mxu0
      %v913 = vadd.f32 %v704, %v912
      %v914 = vpop.f32.mrb[0].mxu0
      %v915 = vpop.f32.mrb[0].mxu0
      %v916 = vadd.f32 %v704, %v915
      %v917 = vpop.f32.mrb[0].mxu0
      %918 = vmatprep.mubr.bf16.mxu0 0
      %919 = vmatmul.mubr.bf16.gmra.mrb[0].mxu0 %v764
      %v920 = vpop.f32.mrb[0].mxu0
      %v921 = vadd.f32 %v704, %v920
      %v922 = vpop.f32.mrb[0].mxu0
      %v923 = vpop.f32.mrb[0].mxu0
      %v924 = vadd.f32 %v704, %v923
      %v925 = vpop.f32.mrb[0].mxu0
      %926 = vdwg.mxu0
      %v927 = vtanh.pop %v801
      %v928 = vtanh.pop %v804
      %v929 = vtanh.pop %v809
      %v930 = vtanh.pop %v812
      %v931 = vtanh.pop %v817
      %v932 = vtanh.pop %v820
      %v933 = vtanh.pop %v825
      %v934 = vtanh.pop %v828
      %v935 = vtanh.pop %v833
      %v936 = vtanh.pop %v836
      %v937 = vtanh.pop %v841
      %v938 = vtanh.pop %v844
      %v939 = vtanh.pop %v849
      %v940 = vtanh.pop %v852
      %v941 = vtanh.pop %v857
      %v942 = vtanh.pop %v860
      %v943 = vtanh.pop %v865
      %v944 = vtanh.pop %v868
      %v945 = vtanh.pop %v873
      %v946 = vtanh.pop %v876
      %v947 = vtanh.pop %v881
      %v948 = vtanh.pop %v884
      %v949 = vtanh.pop %v889
      %v950 = vtanh.pop %v892
      %v951 = vtanh.pop %v897
      %v952 = vtanh.pop %v900
      %v953 = vtanh.pop %v905
      %v954 = vtanh.pop %v908
      %v955 = vtanh.pop %v913
      %v956 = vtanh.pop %v916
      %v957 = vtanh.pop %v921
      %v958 = vtanh.pop %v924
      %v959 = vlaneseq
      %v960 = vshrl.u32 %v959, 7
      %v961 = vsub.s32 0, %v960
      %v962 = vrot.slane %v382, %v961
      %v967 = vunpack.c.l.b16 %v377
      %v968 = vunpack.c.l.b16 %v378
      %v969 = vunpack.c.l.b16 %v379
      %v970 = vunpack.c.l.b16 %v380
      %v971 = vpack.c.b16 %v968, %v967
      %v972 = vpack.c.b16 %v970, %v969
      %975 = vmatprep.subr.bf16.mxu0 0
      %976 = vmatpush1.bf16.msra.mxu0 %v971
      %977 = vmatprep.subr.bf16.mxu0 0
      %978 = vmatpush1.bf16.msra.mxu0 %v972
      %979 = vmatprep.subr.bf16.mxu0 0
      %980 = vmatpush1.bf16.msra.mxu0 0
      %981 = vmatprep.subr.bf16.mxu0 0
      %982 = vmatpush1.bf16.msra.mxu0 0
      %983 = vmatprep.subr.bf16.mxu0 0
      %984 = vmatpush1.bf16.msra.mxu0 0
      %985 = vmatprep.subr.bf16.mxu0 0
      %986 = vmatpush1.bf16.msra.mxu0 0
      %987 = vmatprep.subr.bf16.mxu0 0
      %988 = vmatpush1.bf16.msra.mxu0 0
      %989 = vmatprep.subr.bf16.mxu0 0
      %990 = vmatpush1.bf16.msra.mxu0 0
      %991 = vmatprep.subr.bf16.mxu0 0
      %992 = vmatpush1.bf16.msra.mxu0 0
      %993 = vmatprep.subr.bf16.mxu0 0
      %994 = vmatpush1.bf16.msra.mxu0 0
      %995 = vmatprep.subr.bf16.mxu0 0
      %996 = vmatpush1.bf16.msra.mxu0 0
      %997 = vmatprep.subr.bf16.mxu0 0
      %998 = vmatpush1.bf16.msra.mxu0 0
      %999 = vmatprep.subr.bf16.mxu0 0
      %1000 = vmatpush1.bf16.msra.mxu0 0
      %1001 = vmatprep.subr.bf16.mxu0 0
      %1002 = vmatpush1.bf16.msra.mxu0 0
      %1003 = vmatprep.subr.bf16.mxu0 0
      %1004 = vmatpush1.bf16.msra.mxu0 0
      %1005 = vmatprep.subr.bf16.mxu0 0
      %1006 = vmatpush1.bf16.msra.mxu0 0
      %1007 = vmatprep.mubr.bf16.mxu0 0
      %1008 = vmatmul.mubr.bf16.gmra.mrb[0].mxu0 %v719
      %v1009 = vpop.f32.mrb[0].mxu0
      %v1010 = vadd.f32 %v962, %v1009
      %v1011 = vpop.f32.mrb[0].mxu0
      %v1012 = vpop.f32.mrb[0].mxu0
      %v1013 = vadd.f32 %v962, %v1012
      %v1014 = vpop.f32.mrb[0].mxu0
      %1015 = vmatprep.mubr.bf16.mxu0 0
      %1016 = vmatmul.mubr.bf16.gmra.mrb[0].mxu0 %v722
      %v1017 = vpop.f32.mrb[0].mxu0
      %v1018 = vadd.f32 %v962, %v1017
      %v1019 = vpop.f32.mrb[0].mxu0
      %v1020 = vpop.f32.mrb[0].mxu0
      %v1021 = vadd.f32 %v962, %v1020
      %v1022 = vpop.f32.mrb[0].mxu0
      %1023 = vmatprep.mubr.bf16.mxu0 0
      %1024 = vmatmul.mubr.bf16.gmra.mrb[0].mxu0 %v725
      %v1025 = vpop.f32.mrb[0].mxu0
      %v1026 = vadd.f32 %v962, %v1025
      %v1027 = vpop.f32.mrb[0].mxu0
      %v1028 = vpop.f32.mrb[0].mxu0
      %v1029 = vadd.f32 %v962, %v1028
      %v1030 = vpop.f32.mrb[0].mxu0
      %1031 = vmatprep.mubr.bf16.mxu0 0
      %1032 = vmatmul.mubr.bf16.gmra.mrb[0].mxu0 %v728
      %v1033 = vpop.f32.mrb[0].mxu0
      %v1034 = vadd.f32 %v962, %v1033
      %v1035 = vpop.f32.mrb[0].mxu0
      %v1036 = vpop.f32.mrb[0].mxu0
      %v1037 = vadd.f32 %v962, %v1036
      %v1038 = vpop.f32.mrb[0].mxu0
      %1039 = vmatprep.mubr.bf16.mxu0 0
      %1040 = vmatmul.mubr.bf16.gmra.mrb[0].mxu0 %v731
      %v1041 = vpop.f32.mrb[0].mxu0
      %v1042 = vadd.f32 %v962, %v1041
      %v1043 = vpop.f32.mrb[0].mxu0
      %v1044 = vpop.f32.mrb[0].mxu0
      %v1045 = vadd.f32 %v962, %v1044
      %v1046 = vpop.f32.mrb[0].mxu0
      %1047 = vmatprep.mubr.bf16.mxu0 0
      %1048 = vmatmul.mubr.bf16.gmra.mrb[0].mxu0 %v734
      %v1049 = vpop.f32.mrb[0].mxu0
      %v1050 = vadd.f32 %v962, %v1049
      %v1051 = vpop.f32.mrb[0].mxu0
      %v1052 = vpop.f32.mrb[0].mxu0
      %v1053 = vadd.f32 %v962, %v1052
      %v1054 = vpop.f32.mrb[0].mxu0
      %1055 = vmatprep.mubr.bf16.mxu0 0
      %1056 = vmatmul.mubr.bf16.gmra.mrb[0].mxu0 %v737
      %v1057 = vpop.f32.mrb[0].mxu0
      %v1058 = vadd.f32 %v962, %v1057
      %v1059 = vpop.f32.mrb[0].mxu0
      %v1060 = vpop.f32.mrb[0].mxu0
      %v1061 = vadd.f32 %v962, %v1060
      %v1062 = vpop.f32.mrb[0].mxu0
      %1063 = vmatprep.mubr.bf16.mxu0 0
      %1064 = vmatmul.mubr.bf16.gmra.mrb[0].mxu0 %v740
      %v1065 = vpop.f32.mrb[0].mxu0
      %v1066 = vadd.f32 %v962, %v1065
      %v1067 = vpop.f32.mrb[0].mxu0
      %v1068 = vpop.f32.mrb[0].mxu0
      %v1069 = vadd.f32 %v962, %v1068
      %v1070 = vpop.f32.mrb[0].mxu0
      %1071 = vmatprep.mubr.bf16.mxu0 0
      %1072 = vmatmul.mubr.bf16.gmra.mrb[0].mxu0 %v743
      %v1073 = vpop.f32.mrb[0].mxu0
      %v1074 = vadd.f32 %v962, %v1073
      %v1075 = vpop.f32.mrb[0].mxu0
      %v1076 = vpop.f32.mrb[0].mxu0
      %v1077 = vadd.f32 %v962, %v1076
      %v1078 = vpop.f32.mrb[0].mxu0
      %1079 = vmatprep.mubr.bf16.mxu0 0
      %1080 = vmatmul.mubr.bf16.gmra.mrb[0].mxu0 %v746
      %v1081 = vpop.f32.mrb[0].mxu0
      %v1082 = vadd.f32 %v962, %v1081
      %v1083 = vpop.f32.mrb[0].mxu0
      %v1084 = vpop.f32.mrb[0].mxu0
      %v1085 = vadd.f32 %v962, %v1084
      %v1086 = vpop.f32.mrb[0].mxu0
      %1087 = vmatprep.mubr.bf16.mxu0 0
      %1088 = vmatmul.mubr.bf16.gmra.mrb[0].mxu0 %v749
      %v1089 = vpop.f32.mrb[0].mxu0
      %v1090 = vadd.f32 %v962, %v1089
      %v1091 = vpop.f32.mrb[0].mxu0
      %v1092 = vpop.f32.mrb[0].mxu0
      %v1093 = vadd.f32 %v962, %v1092
      %v1094 = vpop.f32.mrb[0].mxu0
      %1095 = vmatprep.mubr.bf16.mxu0 0
      %1096 = vmatmul.mubr.bf16.gmra.mrb[0].mxu0 %v752
      %v1097 = vpop.f32.mrb[0].mxu0
      %v1098 = vadd.f32 %v962, %v1097
      %v1099 = vpop.f32.mrb[0].mxu0
      %v1100 = vpop.f32.mrb[0].mxu0
      %v1101 = vadd.f32 %v962, %v1100
      %v1102 = vpop.f32.mrb[0].mxu0
      %1103 = vmatprep.mubr.bf16.mxu0 0
      %1104 = vmatmul.mubr.bf16.gmra.mrb[0].mxu0 %v755
      %v1105 = vpop.f32.mrb[0].mxu0
      %v1106 = vadd.f32 %v962, %v1105
      %v1107 = vpop.f32.mrb[0].mxu0
      %v1108 = vpop.f32.mrb[0].mxu0
      %v1109 = vadd.f32 %v962, %v1108
      %v1110 = vpop.f32.mrb[0].mxu0
      %1111 = vmatprep.mubr.bf16.mxu0 0
      %1112 = vmatmul.mubr.bf16.gmra.mrb[0].mxu0 %v758
      %v1113 = vpop.f32.mrb[0].mxu0
      %v1114 = vadd.f32 %v962, %v1113
      %v1115 = vpop.f32.mrb[0].mxu0
      %v1116 = vpop.f32.mrb[0].mxu0
      %v1117 = vadd.f32 %v962, %v1116
      %v1118 = vpop.f32.mrb[0].mxu0
      %1119 = vmatprep.mubr.bf16.mxu0 0
      %1120 = vmatmul.mubr.bf16.gmra.mrb[0].mxu0 %v761
      %v1121 = vpop.f32.mrb[0].mxu0
      %v1122 = vadd.f32 %v962, %v1121
      %v1123 = vpop.f32.mrb[0].mxu0
      %v1124 = vpop.f32.mrb[0].mxu0
      %v1125 = vadd.f32 %v962, %v1124
      %v1126 = vpop.f32.mrb[0].mxu0
      %1127 = vmatprep.mubr.bf16.mxu0 0
      %1128 = vmatmul.mubr.bf16.gmra.mrb[0].mxu0 %v764
      %v1129 = vpop.f32.mrb[0].mxu0
      %v1130 = vadd.f32 %v962, %v1129
      %v1131 = vpop.f32.mrb[0].mxu0
      %v1132 = vpop.f32.mrb[0].mxu0
      %v1133 = vadd.f32 %v962, %v1132
      %v1134 = vpop.f32.mrb[0].mxu0
      %1135 = vdwg.mxu0
      %v1136 = vmul.f32 %v927, 1.442695
      %v1137 = vpow.pop %v1136
      %v1138 = vmul.f32 %v928, 1.442695
      %v1139 = vpow.pop %v1138
      %v1140 = vmul.f32 %v929, 1.442695
      %v1141 = vpow.pop %v1140
      %v1142 = vmul.f32 %v930, 1.442695
      %v1143 = vpow.pop %v1142
      %v1144 = vmul.f32 %v931, 1.442695
      %v1145 = vpow.pop %v1144
      %v1146 = vmul.f32 %v932, 1.442695
      %v1147 = vpow.pop %v1146
      %v1148 = vmul.f32 %v933, 1.442695
      %v1149 = vpow.pop %v1148
      %v1150 = vmul.f32 %v934, 1.442695
      %v1151 = vpow.pop %v1150
      %v1152 = vmul.f32 %v935, 1.442695
      %v1153 = vpow.pop %v1152
      %v1154 = vmul.f32 %v936, 1.442695
      %v1155 = vpow.pop %v1154
      %v1156 = vmul.f32 %v937, 1.442695
      %v1157 = vpow.pop %v1156
      %v1158 = vmul.f32 %v938, 1.442695
      %v1159 = vpow.pop %v1158
      %v1160 = vmul.f32 %v939, 1.442695
      %v1161 = vpow.pop %v1160
      %v1162 = vmul.f32 %v940, 1.442695
      %v1163 = vpow.pop %v1162
      %v1164 = vmul.f32 %v941, 1.442695
      %v1165 = vpow.pop %v1164
      %v1166 = vmul.f32 %v942, 1.442695
      %v1167 = vpow.pop %v1166
      %v1168 = vmul.f32 %v943, 1.442695
      %v1169 = vpow.pop %v1168
      %v1170 = vmul.f32 %v944, 1.442695
      %v1171 = vpow.pop %v1170
      %v1172 = vmul.f32 %v945, 1.442695
      %v1173 = vpow.pop %v1172
      %v1174 = vmul.f32 %v946, 1.442695
      %v1175 = vpow.pop %v1174
      %v1176 = vmul.f32 %v947, 1.442695
      %v1177 = vpow.pop %v1176
      %v1178 = vmul.f32 %v948, 1.442695
      %v1179 = vpow.pop %v1178
      %v1180 = vmul.f32 %v949, 1.442695
      %v1181 = vpow.pop %v1180
      %v1182 = vmul.f32 %v950, 1.442695
      %v1183 = vpow.pop %v1182
      %v1184 = vmul.f32 %v951, 1.442695
      %v1185 = vpow.pop %v1184
      %v1186 = vmul.f32 %v952, 1.442695
      %v1187 = vpow.pop %v1186
      %v1188 = vmul.f32 %v953, 1.442695
      %v1189 = vpow.pop %v1188
      %v1190 = vmul.f32 %v954, 1.442695
      %v1191 = vpow.pop %v1190
      %v1192 = vmul.f32 %v955, 1.442695
      %v1193 = vpow.pop %v1192
      %v1194 = vmul.f32 %v956, 1.442695
      %v1195 = vpow.pop %v1194
      %v1196 = vmul.f32 %v957, 1.442695
      %v1197 = vpow.pop %v1196
      %v1198 = vmul.f32 %v958, 1.442695
      %v1199 = vpow.pop %v1198
      %v1200 = vmul.f32 %v337, %v1137
      %v1201 = vmul.f32 %v338, %v1139
      %v1202 = vmul.f32 %v339, %v1141
      %v1203 = vmul.f32 %v340, %v1143
      %v1204 = vmul.f32 %v341, %v1145
      %v1205 = vmul.f32 %v342, %v1147
      %v1206 = vmul.f32 %v343, %v1149
      %v1207 = vmul.f32 %v344, %v1151
      %v1208 = vmul.f32 %v345, %v1153
      %v1209 = vmul.f32 %v346, %v1155
      %v1210 = vmul.f32 %v347, %v1157
      %v1211 = vmul.f32 %v348, %v1159
      %v1212 = vmul.f32 %v349, %v1161
      %v1213 = vmul.f32 %v350, %v1163
      %v1214 = vmul.f32 %v351, %v1165
      %v1215 = vmul.f32 %v352, %v1167
      %v1216 = vmul.f32 %v353, %v1169
      %v1217 = vmul.f32 %v354, %v1171
      %v1218 = vmul.f32 %v355, %v1173
      %v1219 = vmul.f32 %v356, %v1175
      %v1220 = vmul.f32 %v357, %v1177
      %v1221 = vmul.f32 %v358, %v1179
      %v1222 = vmul.f32 %v359, %v1181
      %v1223 = vmul.f32 %v360, %v1183
      %v1224 = vmul.f32 %v361, %v1185
      %v1225 = vmul.f32 %v362, %v1187
      %v1226 = vmul.f32 %v363, %v1189
      %v1227 = vmul.f32 %v364, %v1191
      %v1228 = vmul.f32 %v365, %v1193
      %v1229 = vmul.f32 %v366, %v1195
      %v1230 = vmul.f32 %v367, %v1197
      %v1231 = vmul.f32 %v368, %v1199
      %v1232 = vadd.f32 %v1200, %v1010
      %v1233 = vadd.f32 %v1201, %v1013
      %v1234 = vadd.f32 %v1202, %v1018
      %v1235 = vadd.f32 %v1203, %v1021
      %v1236 = vadd.f32 %v1204, %v1026
      %v1237 = vadd.f32 %v1205, %v1029
      %v1238 = vadd.f32 %v1206, %v1034
      %v1239 = vadd.f32 %v1207, %v1037
      %v1240 = vadd.f32 %v1208, %v1042
      %v1241 = vadd.f32 %v1209, %v1045
      %v1242 = vadd.f32 %v1210, %v1050
      %v1243 = vadd.f32 %v1211, %v1053
      %v1244 = vadd.f32 %v1212, %v1058
      %v1245 = vadd.f32 %v1213, %v1061
      %v1246 = vadd.f32 %v1214, %v1066
      %v1247 = vadd.f32 %v1215, %v1069
      %v1248 = vadd.f32 %v1216, %v1074
      %v1249 = vadd.f32 %v1217, %v1077
      %v1250 = vadd.f32 %v1218, %v1082
      %v1251 = vadd.f32 %v1219, %v1085
      %v1252 = vadd.f32 %v1220, %v1090
      %v1253 = vadd.f32 %v1221, %v1093
      %v1254 = vadd.f32 %v1222, %v1098
      %v1255 = vadd.f32 %v1223, %v1101
      %v1256 = vadd.f32 %v1224, %v1106
      %v1257 = vadd.f32 %v1225, %v1109
      %v1258 = vadd.f32 %v1226, %v1114
      %v1259 = vadd.f32 %v1227, %v1117
      %v1260 = vadd.f32 %v1228, %v1122
      %v1261 = vadd.f32 %v1229, %v1125
      %v1262 = vadd.f32 %v1230, %v1130
      %v1263 = vadd.f32 %v1231, %v1133
      %v1264 = vlaneseq
      %v1265 = vshrl.u32 %v1264, 7
      %v1266 = vsub.s32 0, %v1265
      %v1267 = vrot.slane %v370, %v1266
      %v1268 = vmul.f32 %v1267, %v1232
      %v1269 = vmul.f32 %v1267, %v1233
      %v1270 = vmul.f32 %v1267, %v1234
      %v1271 = vmul.f32 %v1267, %v1235
      %v1272 = vmul.f32 %v1267, %v1236
      %v1273 = vmul.f32 %v1267, %v1237
      %v1274 = vmul.f32 %v1267, %v1238
      %v1275 = vmul.f32 %v1267, %v1239
      %v1276 = vmul.f32 %v1267, %v1240
      %v1277 = vmul.f32 %v1267, %v1241
      %v1278 = vmul.f32 %v1267, %v1242
      %v1279 = vmul.f32 %v1267, %v1243
      %v1280 = vmul.f32 %v1267, %v1244
      %v1281 = vmul.f32 %v1267, %v1245
      %v1282 = vmul.f32 %v1267, %v1246
      %v1283 = vmul.f32 %v1267, %v1247
      %v1284 = vmul.f32 %v1267, %v1248
      %v1285 = vmul.f32 %v1267, %v1249
      %v1286 = vmul.f32 %v1267, %v1250
      %v1287 = vmul.f32 %v1267, %v1251
      %v1288 = vmul.f32 %v1267, %v1252
      %v1289 = vmul.f32 %v1267, %v1253
      %v1290 = vmul.f32 %v1267, %v1254
      %v1291 = vmul.f32 %v1267, %v1255
      %v1292 = vmul.f32 %v1267, %v1256
      %v1293 = vmul.f32 %v1267, %v1257
      %v1294 = vmul.f32 %v1267, %v1258
      %v1295 = vmul.f32 %v1267, %v1259
      %v1296 = vmul.f32 %v1267, %v1260
      %v1297 = vmul.f32 %v1267, %v1261
      %v1298 = vmul.f32 %v1267, %v1262
      %v1299 = vmul.f32 %v1267, %v1263
      %v1300 = vadd.f32 %v387, %v1268
      %v1301 = vadd.f32 %v388, %v1269
      %v1302 = vadd.f32 %v389, %v1270
      %v1303 = vadd.f32 %v390, %v1271
      %v1304 = vadd.f32 %v391, %v1272
      %v1305 = vadd.f32 %v392, %v1273
      %v1306 = vadd.f32 %v393, %v1274
      %v1307 = vadd.f32 %v394, %v1275
      %v1308 = vadd.f32 %v395, %v1276
      %v1309 = vadd.f32 %v396, %v1277
      %v1310 = vadd.f32 %v397, %v1278
      %v1311 = vadd.f32 %v398, %v1279
      %v1312 = vadd.f32 %v399, %v1280
      %v1313 = vadd.f32 %v400, %v1281
      %v1314 = vadd.f32 %v401, %v1282
      %v1315 = vadd.f32 %v402, %v1283
      %v1316 = vadd.f32 %v403, %v1284
      %v1317 = vadd.f32 %v404, %v1285
      %v1318 = vadd.f32 %v405, %v1286
      %v1319 = vadd.f32 %v406, %v1287
      %v1320 = vadd.f32 %v407, %v1288
      %v1321 = vadd.f32 %v408, %v1289
      %v1322 = vadd.f32 %v409, %v1290
      %v1323 = vadd.f32 %v410, %v1291
      %v1324 = vadd.f32 %v411, %v1292
      %v1325 = vadd.f32 %v412, %v1293
      %v1326 = vadd.f32 %v413, %v1294
      %v1327 = vadd.f32 %v414, %v1295
      %v1328 = vadd.f32 %v415, %v1296
      %v1329 = vadd.f32 %v416, %v1297
      %v1330 = vadd.f32 %v417, %v1298
      %v1331 = vadd.f32 %v418, %v1299
      %v1332 = vld [vmem:[%s1 + $0x1] sm:$0x1]
      %v1333 = vld [vmem:[%s2 + $0x1] sm:$0x1]
      %s1334 = scalar_lea.vmem %s3, 4
      %v1335 = vld [vmem:[%s1334] sm:$0xf]
      %v1336 = vld [vmem:[%s4 + $0x1] sm:$0x1]
      %s1337 = scalar_lea.vmem %s5, 16
      %v1338 = vld [vmem:[%s1337] sm:$0xf]
      %v1339 = vld [vmem:[%s1337 + $0x4] sm:$0xf]
      %v1340 = vld [vmem:[%s1337 + $0x8] sm:$0xf]
      %v1341 = vld [vmem:[%s1337 + $0xc] sm:$0xf]
      %s1342 = scalar_lea.vmem %s6, 16
      %v1343 = vld [vmem:[%s1342] sm:$0xf]
      %v1344 = vld [vmem:[%s1342 + $0x4] sm:$0xf]
      %v1345 = vld [vmem:[%s1342 + $0x8] sm:$0xf]
      %v1346 = vld [vmem:[%s1342 + $0xc] sm:$0xf]
      %v1347 = vld [vmem:[%s7 + $0x1] sm:$0x1]
      %v1348 = vld [vmem:[%s8 + $0x1] sm:$0x1]
      %v1349 = vlaneseq
      %v1350 = vshrl.u32 %v1349, 7
      %v1351 = vsub.s32 0, %v1350
      %v1352 = vrot.slane %v1332, %v1351
      %v1353 = vmul.f32 %v1300, %v1352
      %v1354 = vmul.f32 %v1301, %v1352
      %v1355 = vmul.f32 %v1302, %v1352
      %v1356 = vmul.f32 %v1303, %v1352
      %v1357 = vmul.f32 %v1304, %v1352
      %v1358 = vmul.f32 %v1305, %v1352
      %v1359 = vmul.f32 %v1306, %v1352
      %v1360 = vmul.f32 %v1307, %v1352
      %v1361 = vmul.f32 %v1308, %v1352
      %v1362 = vmul.f32 %v1309, %v1352
      %v1363 = vmul.f32 %v1310, %v1352
      %v1364 = vmul.f32 %v1311, %v1352
      %v1365 = vmul.f32 %v1312, %v1352
      %v1366 = vmul.f32 %v1313, %v1352
      %v1367 = vmul.f32 %v1314, %v1352
      %v1368 = vmul.f32 %v1315, %v1352
      %v1369 = vmul.f32 %v1316, %v1352
      %v1370 = vmul.f32 %v1317, %v1352
      %v1371 = vmul.f32 %v1318, %v1352
      %v1372 = vmul.f32 %v1319, %v1352
      %v1373 = vmul.f32 %v1320, %v1352
      %v1374 = vmul.f32 %v1321, %v1352
      %v1375 = vmul.f32 %v1322, %v1352
      %v1376 = vmul.f32 %v1323, %v1352
      %v1377 = vmul.f32 %v1324, %v1352
      %v1378 = vmul.f32 %v1325, %v1352
      %v1379 = vmul.f32 %v1326, %v1352
      %v1380 = vmul.f32 %v1327, %v1352
      %v1381 = vmul.f32 %v1328, %v1352
      %v1382 = vmul.f32 %v1329, %v1352
      %v1383 = vmul.f32 %v1330, %v1352
      %v1384 = vmul.f32 %v1331, %v1352
      %v1385 = vpack.c.bf16 %v1354, %v1353
      %v1386 = vpack.c.bf16 %v1356, %v1355
      %v1387 = vpack.c.bf16 %v1358, %v1357
      %v1388 = vpack.c.bf16 %v1360, %v1359
      %v1389 = vpack.c.bf16 %v1362, %v1361
      %v1390 = vpack.c.bf16 %v1364, %v1363
      %v1391 = vpack.c.bf16 %v1366, %v1365
      %v1392 = vpack.c.bf16 %v1368, %v1367
      %v1393 = vpack.c.bf16 %v1370, %v1369
      %v1394 = vpack.c.bf16 %v1372, %v1371
      %v1395 = vpack.c.bf16 %v1374, %v1373
      %v1396 = vpack.c.bf16 %v1376, %v1375
      %v1397 = vpack.c.bf16 %v1378, %v1377
      %v1398 = vpack.c.bf16 %v1380, %v1379
      %v1399 = vpack.c.bf16 %v1382, %v1381
      %v1400 = vpack.c.bf16 %v1384, %v1383
      %v1401 = vlaneseq
      %v1402 = vshrl.u32 %v1401, 7
      %v1403 = vsub.s32 0, %v1402
      %v1404 = vrot.slane %v1336, %v1403
      %v1406 = vsel %vm439, %v1385, 0
      %v1409 = vsel %vm439, %v1386, 0
      %v1412 = vsel %vm439, %v1387, 0
      %v1415 = vsel %vm439, %v1388, 0
      %v1418 = vsel %vm439, %v1389, 0
      %v1421 = vsel %vm439, %v1390, 0
      %v1424 = vsel %vm439, %v1391, 0
      %v1427 = vsel %vm439, %v1392, 0
      %v1430 = vsel %vm439, %v1393, 0
      %v1433 = vsel %vm439, %v1394, 0
      %v1436 = vsel %vm439, %v1395, 0
      %v1439 = vsel %vm439, %v1396, 0
      %v1442 = vsel %vm439, %v1397, 0
      %v1445 = vsel %vm439, %v1398, 0
      %v1448 = vsel %vm439, %v1399, 0
      %v1451 = vsel %vm439, %v1400, 0
      %v1454 = vsel %vm488, %v1335, 0
      %1456 = vmatprep.subr.bf16.mxu0 0
      %1457 = vmatpush1.bf16.msra.mxu0 %v1454
      %1458 = vmatprep.subr.bf16.mxu0 0
      %1459 = vmatpush1.bf16.msra.mxu0 0
      %1460 = vmatprep.subr.bf16.mxu0 0
      %1461 = vmatpush1.bf16.msra.mxu0 0
      %1462 = vmatprep.subr.bf16.mxu0 0
      %1463 = vmatpush1.bf16.msra.mxu0 0
      %1464 = vmatprep.subr.bf16.mxu0 0
      %1465 = vmatpush1.bf16.msra.mxu0 0
      %1466 = vmatprep.subr.bf16.mxu0 0
      %1467 = vmatpush1.bf16.msra.mxu0 0
      %1468 = vmatprep.subr.bf16.mxu0 0
      %1469 = vmatpush1.bf16.msra.mxu0 0
      %1470 = vmatprep.subr.bf16.mxu0 0
      %1471 = vmatpush1.bf16.msra.mxu0 0
      %1472 = vmatprep.subr.bf16.mxu0 0
      %1473 = vmatpush1.bf16.msra.mxu0 0
      %1474 = vmatprep.subr.bf16.mxu0 0
      %1475 = vmatpush1.bf16.msra.mxu0 0
      %1476 = vmatprep.subr.bf16.mxu0 0
      %1477 = vmatpush1.bf16.msra.mxu0 0
      %1478 = vmatprep.subr.bf16.mxu0 0
      %1479 = vmatpush1.bf16.msra.mxu0 0
      %1480 = vmatprep.subr.bf16.mxu0 0
      %1481 = vmatpush1.bf16.msra.mxu0 0
      %1482 = vmatprep.subr.bf16.mxu0 0
      %1483 = vmatpush1.bf16.msra.mxu0 0
      %1484 = vmatprep.subr.bf16.mxu0 0
      %1485 = vmatpush1.bf16.msra.mxu0 0
      %1486 = vmatprep.subr.bf16.mxu0 0
      %1487 = vmatpush1.bf16.msra.mxu0 0
      %1488 = vmatprep.mubr.bf16.mxu0 0
      %1489 = vmatmul.mubr.bf16.gmra.mrb[0].mxu0 %v1406
      %v1490 = vpop.f32.mrb[0].mxu0
      %v1491 = vadd.f32 %v1404, %v1490
      %v1492 = vpop.f32.mrb[0].mxu0
      %v1493 = vpop.f32.mrb[0].mxu0
      %v1494 = vadd.f32 %v1404, %v1493
      %v1495 = vpop.f32.mrb[0].mxu0
      %1496 = vmatprep.mubr.bf16.mxu0 0
      %1497 = vmatmul.mubr.bf16.gmra.mrb[0].mxu0 %v1409
      %v1498 = vpop.f32.mrb[0].mxu0
      %v1499 = vadd.f32 %v1404, %v1498
      %v1500 = vpop.f32.mrb[0].mxu0
      %v1501 = vpop.f32.mrb[0].mxu0
      %v1502 = vadd.f32 %v1404, %v1501
      %v1503 = vpop.f32.mrb[0].mxu0
      %1504 = vmatprep.mubr.bf16.mxu0 0
      %1505 = vmatmul.mubr.bf16.gmra.mrb[0].mxu0 %v1412
      %v1506 = vpop.f32.mrb[0].mxu0
      %v1507 = vadd.f32 %v1404, %v1506
      %v1508 = vpop.f32.mrb[0].mxu0
      %v1509 = vpop.f32.mrb[0].mxu0
      %v1510 = vadd.f32 %v1404, %v1509
      %v1511 = vpop.f32.mrb[0].mxu0
      %1512 = vmatprep.mubr.bf16.mxu0 0
      %1513 = vmatmul.mubr.bf16.gmra.mrb[0].mxu0 %v1415
      %v1514 = vpop.f32.mrb[0].mxu0
      %v1515 = vadd.f32 %v1404, %v1514
      %v1516 = vpop.f32.mrb[0].mxu0
      %v1517 = vpop.f32.mrb[0].mxu0
      %v1518 = vadd.f32 %v1404, %v1517
      %v1519 = vpop.f32.mrb[0].mxu0
      %1520 = vmatprep.mubr.bf16.mxu0 0
      %1521 = vmatmul.mubr.bf16.gmra.mrb[0].mxu0 %v1418
      %v1522 = vpop.f32.mrb[0].mxu0
      %v1523 = vadd.f32 %v1404, %v1522
      %v1524 = vpop.f32.mrb[0].mxu0
      %v1525 = vpop.f32.mrb[0].mxu0
      %v1526 = vadd.f32 %v1404, %v1525
      %v1527 = vpop.f32.mrb[0].mxu0
      %1528 = vmatprep.mubr.bf16.mxu0 0
      %1529 = vmatmul.mubr.bf16.gmra.mrb[0].mxu0 %v1421
      %v1530 = vpop.f32.mrb[0].mxu0
      %v1531 = vadd.f32 %v1404, %v1530
      %v1532 = vpop.f32.mrb[0].mxu0
      %v1533 = vpop.f32.mrb[0].mxu0
      %v1534 = vadd.f32 %v1404, %v1533
      %v1535 = vpop.f32.mrb[0].mxu0
      %1536 = vmatprep.mubr.bf16.mxu0 0
      %1537 = vmatmul.mubr.bf16.gmra.mrb[0].mxu0 %v1424
      %v1538 = vpop.f32.mrb[0].mxu0
      %v1539 = vadd.f32 %v1404, %v1538
      %v1540 = vpop.f32.mrb[0].mxu0
      %v1541 = vpop.f32.mrb[0].mxu0
      %v1542 = vadd.f32 %v1404, %v1541
      %v1543 = vpop.f32.mrb[0].mxu0
      %1544 = vmatprep.mubr.bf16.mxu0 0
      %1545 = vmatmul.mubr.bf16.gmra.mrb[0].mxu0 %v1427
      %v1546 = vpop.f32.mrb[0].mxu0
      %v1547 = vadd.f32 %v1404, %v1546
      %v1548 = vpop.f32.mrb[0].mxu0
      %v1549 = vpop.f32.mrb[0].mxu0
      %v1550 = vadd.f32 %v1404, %v1549
      %v1551 = vpop.f32.mrb[0].mxu0
      %1552 = vmatprep.mubr.bf16.mxu0 0
      %1553 = vmatmul.mubr.bf16.gmra.mrb[0].mxu0 %v1430
      %v1554 = vpop.f32.mrb[0].mxu0
      %v1555 = vadd.f32 %v1404, %v1554
      %v1556 = vpop.f32.mrb[0].mxu0
      %v1557 = vpop.f32.mrb[0].mxu0
      %v1558 = vadd.f32 %v1404, %v1557
      %v1559 = vpop.f32.mrb[0].mxu0
      %1560 = vmatprep.mubr.bf16.mxu0 0
      %1561 = vmatmul.mubr.bf16.gmra.mrb[0].mxu0 %v1433
      %v1562 = vpop.f32.mrb[0].mxu0
      %v1563 = vadd.f32 %v1404, %v1562
      %v1564 = vpop.f32.mrb[0].mxu0
      %v1565 = vpop.f32.mrb[0].mxu0
      %v1566 = vadd.f32 %v1404, %v1565
      %v1567 = vpop.f32.mrb[0].mxu0
      %1568 = vmatprep.mubr.bf16.mxu0 0
      %1569 = vmatmul.mubr.bf16.gmra.mrb[0].mxu0 %v1436
      %v1570 = vpop.f32.mrb[0].mxu0
      %v1571 = vadd.f32 %v1404, %v1570
      %v1572 = vpop.f32.mrb[0].mxu0
      %v1573 = vpop.f32.mrb[0].mxu0
      %v1574 = vadd.f32 %v1404, %v1573
      %v1575 = vpop.f32.mrb[0].mxu0
      %1576 = vmatprep.mubr.bf16.mxu0 0
      %1577 = vmatmul.mubr.bf16.gmra.mrb[0].mxu0 %v1439
      %v1578 = vpop.f32.mrb[0].mxu0
      %v1579 = vadd.f32 %v1404, %v1578
      %v1580 = vpop.f32.mrb[0].mxu0
      %v1581 = vpop.f32.mrb[0].mxu0
      %v1582 = vadd.f32 %v1404, %v1581
      %v1583 = vpop.f32.mrb[0].mxu0
      %1584 = vmatprep.mubr.bf16.mxu0 0
      %1585 = vmatmul.mubr.bf16.gmra.mrb[0].mxu0 %v1442
      %v1586 = vpop.f32.mrb[0].mxu0
      %v1587 = vadd.f32 %v1404, %v1586
      %v1588 = vpop.f32.mrb[0].mxu0
      %v1589 = vpop.f32.mrb[0].mxu0
      %v1590 = vadd.f32 %v1404, %v1589
      %v1591 = vpop.f32.mrb[0].mxu0
      %1592 = vmatprep.mubr.bf16.mxu0 0
      %1593 = vmatmul.mubr.bf16.gmra.mrb[0].mxu0 %v1445
      %v1594 = vpop.f32.mrb[0].mxu0
      %v1595 = vadd.f32 %v1404, %v1594
      %v1596 = vpop.f32.mrb[0].mxu0
      %v1597 = vpop.f32.mrb[0].mxu0
      %v1598 = vadd.f32 %v1404, %v1597
      %v1599 = vpop.f32.mrb[0].mxu0
      %1600 = vmatprep.mubr.bf16.mxu0 0
      %1601 = vmatmul.mubr.bf16.gmra.mrb[0].mxu0 %v1448
      %v1602 = vpop.f32.mrb[0].mxu0
      %v1603 = vadd.f32 %v1404, %v1602
      %v1604 = vpop.f32.mrb[0].mxu0
      %v1605 = vpop.f32.mrb[0].mxu0
      %v1606 = vadd.f32 %v1404, %v1605
      %v1607 = vpop.f32.mrb[0].mxu0
      %1608 = vmatprep.mubr.bf16.mxu0 0
      %1609 = vmatmul.mubr.bf16.gmra.mrb[0].mxu0 %v1451
      %v1610 = vpop.f32.mrb[0].mxu0
      %v1611 = vadd.f32 %v1404, %v1610
      %v1612 = vpop.f32.mrb[0].mxu0
      %v1613 = vpop.f32.mrb[0].mxu0
      %v1614 = vadd.f32 %v1404, %v1613
      %v1615 = vpop.f32.mrb[0].mxu0
      %1616 = vdwg.mxu0
      %v1617 = vmax.f32 %v1491, 0.0
      %v1618 = vmax.f32 %v1494, 0.0
      %v1619 = vmax.f32 %v1499, 0.0
      %v1620 = vmax.f32 %v1502, 0.0
      %v1621 = vmax.f32 %v1507, 0.0
      %v1622 = vmax.f32 %v1510, 0.0
      %v1623 = vmax.f32 %v1515, 0.0
      %v1624 = vmax.f32 %v1518, 0.0
      %v1625 = vmax.f32 %v1523, 0.0
      %v1626 = vmax.f32 %v1526, 0.0
      %v1627 = vmax.f32 %v1531, 0.0
      %v1628 = vmax.f32 %v1534, 0.0
      %v1629 = vmax.f32 %v1539, 0.0
      %v1630 = vmax.f32 %v1542, 0.0
      %v1631 = vmax.f32 %v1547, 0.0
      %v1632 = vmax.f32 %v1550, 0.0
      %v1633 = vmax.f32 %v1555, 0.0
      %v1634 = vmax.f32 %v1558, 0.0
      %v1635 = vmax.f32 %v1563, 0.0
      %v1636 = vmax.f32 %v1566, 0.0
      %v1637 = vmax.f32 %v1571, 0.0
      %v1638 = vmax.f32 %v1574, 0.0
      %v1639 = vmax.f32 %v1579, 0.0
      %v1640 = vmax.f32 %v1582, 0.0
      %v1641 = vmax.f32 %v1587, 0.0
      %v1642 = vmax.f32 %v1590, 0.0
      %v1643 = vmax.f32 %v1595, 0.0
      %v1644 = vmax.f32 %v1598, 0.0
      %v1645 = vmax.f32 %v1603, 0.0
      %v1646 = vmax.f32 %v1606, 0.0
      %v1647 = vmax.f32 %v1611, 0.0
      %v1648 = vmax.f32 %v1614, 0.0
      %v1649 = vpack.c.bf16 %v1618, %v1617
      %v1650 = vpack.c.bf16 %v1620, %v1619
      %v1651 = vpack.c.bf16 %v1622, %v1621
      %v1652 = vpack.c.bf16 %v1624, %v1623
      %v1653 = vpack.c.bf16 %v1626, %v1625
      %v1654 = vpack.c.bf16 %v1628, %v1627
      %v1655 = vpack.c.bf16 %v1630, %v1629
      %v1656 = vpack.c.bf16 %v1632, %v1631
      %v1657 = vpack.c.bf16 %v1634, %v1633
      %v1658 = vpack.c.bf16 %v1636, %v1635
      %v1659 = vpack.c.bf16 %v1638, %v1637
      %v1660 = vpack.c.bf16 %v1640, %v1639
      %v1661 = vpack.c.bf16 %v1642, %v1641
      %v1662 = vpack.c.bf16 %v1644, %v1643
      %v1663 = vpack.c.bf16 %v1646, %v1645
      %v1664 = vpack.c.bf16 %v1648, %v1647
      %v1665 = vlaneseq
      %v1666 = vshrl.u32 %v1665, 7
      %v1667 = vsub.s32 0, %v1666
      %v1668 = vrot.slane %v1347, %v1667
      %v1673 = vunpack.c.l.b16 %v1338
      %v1674 = vunpack.c.l.b16 %v1339
      %v1675 = vunpack.c.l.b16 %v1340
      %v1676 = vunpack.c.l.b16 %v1341
      %v1677 = vpack.c.b16 %v1674, %v1673
      %v1678 = vpack.c.b16 %v1676, %v1675
      %v1682 = vsel %vm717, %v1649, 0
      %v1685 = vsel %vm717, %v1650, 0
      %v1688 = vsel %vm717, %v1651, 0
      %v1691 = vsel %vm717, %v1652, 0
      %v1694 = vsel %vm717, %v1653, 0
      %v1697 = vsel %vm717, %v1654, 0
      %v1700 = vsel %vm717, %v1655, 0
      %v1703 = vsel %vm717, %v1656, 0
      %v1706 = vsel %vm717, %v1657, 0
      %v1709 = vsel %vm717, %v1658, 0
      %v1712 = vsel %vm717, %v1659, 0
      %v1715 = vsel %vm717, %v1660, 0
      %v1718 = vsel %vm717, %v1661, 0
      %v1721 = vsel %vm717, %v1662, 0
      %v1724 = vsel %vm717, %v1663, 0
      %v1727 = vsel %vm717, %v1664, 0
      %1729 = vmatprep.subr.bf16.mxu0 0
      %1730 = vmatpush1.bf16.msra.mxu0 %v1677
      %1731 = vmatprep.subr.bf16.mxu0 0
      %1732 = vmatpush1.bf16.msra.mxu0 %v1678
      %1733 = vmatprep.subr.bf16.mxu0 0
      %1734 = vmatpush1.bf16.msra.mxu0 0
      %1735 = vmatprep.subr.bf16.mxu0 0
      %1736 = vmatpush1.bf16.msra.mxu0 0
      %1737 = vmatprep.subr.bf16.mxu0 0
      %1738 = vmatpush1.bf16.msra.mxu0 0
      %1739 = vmatprep.subr.bf16.mxu0 0
      %1740 = vmatpush1.bf16.msra.mxu0 0
      %1741 = vmatprep.subr.bf16.mxu0 0
      %1742 = vmatpush1.bf16.msra.mxu0 0
      %1743 = vmatprep.subr.bf16.mxu0 0
      %1744 = vmatpush1.bf16.msra.mxu0 0
      %1745 = vmatprep.subr.bf16.mxu0 0
      %1746 = vmatpush1.bf16.msra.mxu0 0
      %1747 = vmatprep.subr.bf16.mxu0 0
      %1748 = vmatpush1.bf16.msra.mxu0 0
      %1749 = vmatprep.subr.bf16.mxu0 0
      %1750 = vmatpush1.bf16.msra.mxu0 0
      %1751 = vmatprep.subr.bf16.mxu0 0
      %1752 = vmatpush1.bf16.msra.mxu0 0
      %1753 = vmatprep.subr.bf16.mxu0 0
      %1754 = vmatpush1.bf16.msra.mxu0 0
      %1755 = vmatprep.subr.bf16.mxu0 0
      %1756 = vmatpush1.bf16.msra.mxu0 0
      %1757 = vmatprep.subr.bf16.mxu0 0
      %1758 = vmatpush1.bf16.msra.mxu0 0
      %1759 = vmatprep.subr.bf16.mxu0 0
      %1760 = vmatpush1.bf16.msra.mxu0 0
      %1761 = vmatprep.mubr.bf16.mxu0 0
      %1762 = vmatmul.mubr.bf16.gmra.mrb[0].mxu0 %v1682
      %v1763 = vpop.f32.mrb[0].mxu0
      %v1764 = vadd.f32 %v1668, %v1763
      %v1765 = vpop.f32.mrb[0].mxu0
      %v1766 = vpop.f32.mrb[0].mxu0
      %v1767 = vadd.f32 %v1668, %v1766
      %v1768 = vpop.f32.mrb[0].mxu0
      %1769 = vmatprep.mubr.bf16.mxu0 0
      %1770 = vmatmul.mubr.bf16.gmra.mrb[0].mxu0 %v1685
      %v1771 = vpop.f32.mrb[0].mxu0
      %v1772 = vadd.f32 %v1668, %v1771
      %v1773 = vpop.f32.mrb[0].mxu0
      %v1774 = vpop.f32.mrb[0].mxu0
      %v1775 = vadd.f32 %v1668, %v1774
      %v1776 = vpop.f32.mrb[0].mxu0
      %1777 = vmatprep.mubr.bf16.mxu0 0
      %1778 = vmatmul.mubr.bf16.gmra.mrb[0].mxu0 %v1688
      %v1779 = vpop.f32.mrb[0].mxu0
      %v1780 = vadd.f32 %v1668, %v1779
      %v1781 = vpop.f32.mrb[0].mxu0
      %v1782 = vpop.f32.mrb[0].mxu0
      %v1783 = vadd.f32 %v1668, %v1782
      %v1784 = vpop.f32.mrb[0].mxu0
      %1785 = vmatprep.mubr.bf16.mxu0 0
      %1786 = vmatmul.mubr.bf16.gmra.mrb[0].mxu0 %v1691
      %v1787 = vpop.f32.mrb[0].mxu0
      %v1788 = vadd.f32 %v1668, %v1787
      %v1789 = vpop.f32.mrb[0].mxu0
      %v1790 = vpop.f32.mrb[0].mxu0
      %v1791 = vadd.f32 %v1668, %v1790
      %v1792 = vpop.f32.mrb[0].mxu0
      %1793 = vmatprep.mubr.bf16.mxu0 0
      %1794 = vmatmul.mubr.bf16.gmra.mrb[0].mxu0 %v1694
      %v1795 = vpop.f32.mrb[0].mxu0
      %v1796 = vadd.f32 %v1668, %v1795
      %v1797 = vpop.f32.mrb[0].mxu0
      %v1798 = vpop.f32.mrb[0].mxu0
      %v1799 = vadd.f32 %v1668, %v1798
      %v1800 = vpop.f32.mrb[0].mxu0
      %1801 = vmatprep.mubr.bf16.mxu0 0
      %1802 = vmatmul.mubr.bf16.gmra.mrb[0].mxu0 %v1697
      %v1803 = vpop.f32.mrb[0].mxu0
      %v1804 = vadd.f32 %v1668, %v1803
      %v1805 = vpop.f32.mrb[0].mxu0
      %v1806 = vpop.f32.mrb[0].mxu0
      %v1807 = vadd.f32 %v1668, %v1806
      %v1808 = vpop.f32.mrb[0].mxu0
      %1809 = vmatprep.mubr.bf16.mxu0 0
      %1810 = vmatmul.mubr.bf16.gmra.mrb[0].mxu0 %v1700
      %v1811 = vpop.f32.mrb[0].mxu0
      %v1812 = vadd.f32 %v1668, %v1811
      %v1813 = vpop.f32.mrb[0].mxu0
      %v1814 = vpop.f32.mrb[0].mxu0
      %v1815 = vadd.f32 %v1668, %v1814
      %v1816 = vpop.f32.mrb[0].mxu0
      %1817 = vmatprep.mubr.bf16.mxu0 0
      %1818 = vmatmul.mubr.bf16.gmra.mrb[0].mxu0 %v1703
      %v1819 = vpop.f32.mrb[0].mxu0
      %v1820 = vadd.f32 %v1668, %v1819
      %v1821 = vpop.f32.mrb[0].mxu0
      %v1822 = vpop.f32.mrb[0].mxu0
      %v1823 = vadd.f32 %v1668, %v1822
      %v1824 = vpop.f32.mrb[0].mxu0
      %1825 = vmatprep.mubr.bf16.mxu0 0
      %1826 = vmatmul.mubr.bf16.gmra.mrb[0].mxu0 %v1706
      %v1827 = vpop.f32.mrb[0].mxu0
      %v1828 = vadd.f32 %v1668, %v1827
      %v1829 = vpop.f32.mrb[0].mxu0
      %v1830 = vpop.f32.mrb[0].mxu0
      %v1831 = vadd.f32 %v1668, %v1830
      %v1832 = vpop.f32.mrb[0].mxu0
      %1833 = vmatprep.mubr.bf16.mxu0 0
      %1834 = vmatmul.mubr.bf16.gmra.mrb[0].mxu0 %v1709
      %v1835 = vpop.f32.mrb[0].mxu0
      %v1836 = vadd.f32 %v1668, %v1835
      %v1837 = vpop.f32.mrb[0].mxu0
      %v1838 = vpop.f32.mrb[0].mxu0
      %v1839 = vadd.f32 %v1668, %v1838
      %v1840 = vpop.f32.mrb[0].mxu0
      %1841 = vmatprep.mubr.bf16.mxu0 0
      %1842 = vmatmul.mubr.bf16.gmra.mrb[0].mxu0 %v1712
      %v1843 = vpop.f32.mrb[0].mxu0
      %v1844 = vadd.f32 %v1668, %v1843
      %v1845 = vpop.f32.mrb[0].mxu0
      %v1846 = vpop.f32.mrb[0].mxu0
      %v1847 = vadd.f32 %v1668, %v1846
      %v1848 = vpop.f32.mrb[0].mxu0
      %1849 = vmatprep.mubr.bf16.mxu0 0
      %1850 = vmatmul.mubr.bf16.gmra.mrb[0].mxu0 %v1715
      %v1851 = vpop.f32.mrb[0].mxu0
      %v1852 = vadd.f32 %v1668, %v1851
      %v1853 = vpop.f32.mrb[0].mxu0
      %v1854 = vpop.f32.mrb[0].mxu0
      %v1855 = vadd.f32 %v1668, %v1854
      %v1856 = vpop.f32.mrb[0].mxu0
      %1857 = vmatprep.mubr.bf16.mxu0 0
      %1858 = vmatmul.mubr.bf16.gmra.mrb[0].mxu0 %v1718
      %v1859 = vpop.f32.mrb[0].mxu0
      %v1860 = vadd.f32 %v1668, %v1859
      %v1861 = vpop.f32.mrb[0].mxu0
      %v1862 = vpop.f32.mrb[0].mxu0
      %v1863 = vadd.f32 %v1668, %v1862
      %v1864 = vpop.f32.mrb[0].mxu0
      %1865 = vmatprep.mubr.bf16.mxu0 0
      %1866 = vmatmul.mubr.bf16.gmra.mrb[0].mxu0 %v1721
      %v1867 = vpop.f32.mrb[0].mxu0
      %v1868 = vadd.f32 %v1668, %v1867
      %v1869 = vpop.f32.mrb[0].mxu0
      %v1870 = vpop.f32.mrb[0].mxu0
      %v1871 = vadd.f32 %v1668, %v1870
      %v1872 = vpop.f32.mrb[0].mxu0
      %1873 = vmatprep.mubr.bf16.mxu0 0
      %1874 = vmatmul.mubr.bf16.gmra.mrb[0].mxu0 %v1724
      %v1875 = vpop.f32.mrb[0].mxu0
      %v1876 = vadd.f32 %v1668, %v1875
      %v1877 = vpop.f32.mrb[0].mxu0
      %v1878 = vpop.f32.mrb[0].mxu0
      %v1879 = vadd.f32 %v1668, %v1878
      %v1880 = vpop.f32.mrb[0].mxu0
      %1881 = vmatprep.mubr.bf16.mxu0 0
      %1882 = vmatmul.mubr.bf16.gmra.mrb[0].mxu0 %v1727
      %v1883 = vpop.f32.mrb[0].mxu0
      %v1884 = vadd.f32 %v1668, %v1883
      %v1885 = vpop.f32.mrb[0].mxu0
      %v1886 = vpop.f32.mrb[0].mxu0
      %v1887 = vadd.f32 %v1668, %v1886
      %v1888 = vpop.f32.mrb[0].mxu0
      %1889 = vdwg.mxu0
      %v1890 = vtanh.pop %v1764
      %v1891 = vtanh.pop %v1767
      %v1892 = vtanh.pop %v1772
      %v1893 = vtanh.pop %v1775
      %v1894 = vtanh.pop %v1780
      %v1895 = vtanh.pop %v1783
      %v1896 = vtanh.pop %v1788
      %v1897 = vtanh.pop %v1791
      %v1898 = vtanh.pop %v1796
      %v1899 = vtanh.pop %v1799
      %v1900 = vtanh.pop %v1804
      %v1901 = vtanh.pop %v1807
      %v1902 = vtanh.pop %v1812
      %v1903 = vtanh.pop %v1815
      %v1904 = vtanh.pop %v1820
      %v1905 = vtanh.pop %v1823
      %v1906 = vtanh.pop %v1828
      %v1907 = vtanh.pop %v1831
      %v1908 = vtanh.pop %v1836
      %v1909 = vtanh.pop %v1839
      %v1910 = vtanh.pop %v1844
      %v1911 = vtanh.pop %v1847
      %v1912 = vtanh.pop %v1852
      %v1913 = vtanh.pop %v1855
      %v1914 = vtanh.pop %v1860
      %v1915 = vtanh.pop %v1863
      %v1916 = vtanh.pop %v1868
      %v1917 = vtanh.pop %v1871
      %v1918 = vtanh.pop %v1876
      %v1919 = vtanh.pop %v1879
      %v1920 = vtanh.pop %v1884
      %v1921 = vtanh.pop %v1887
      %v1922 = vlaneseq
      %v1923 = vshrl.u32 %v1922, 7
      %v1924 = vsub.s32 0, %v1923
      %v1925 = vrot.slane %v1348, %v1924
      %v1930 = vunpack.c.l.b16 %v1343
      %v1931 = vunpack.c.l.b16 %v1344
      %v1932 = vunpack.c.l.b16 %v1345
      %v1933 = vunpack.c.l.b16 %v1346
      %v1934 = vpack.c.b16 %v1931, %v1930
      %v1935 = vpack.c.b16 %v1933, %v1932
      %1938 = vmatprep.subr.bf16.mxu0 0
      %1939 = vmatpush1.bf16.msra.mxu0 %v1934
      %1940 = vmatprep.subr.bf16.mxu0 0
      %1941 = vmatpush1.bf16.msra.mxu0 %v1935
      %1942 = vmatprep.subr.bf16.mxu0 0
      %1943 = vmatpush1.bf16.msra.mxu0 0
      %1944 = vmatprep.subr.bf16.mxu0 0
      %1945 = vmatpush1.bf16.msra.mxu0 0
      %1946 = vmatprep.subr.bf16.mxu0 0
      %1947 = vmatpush1.bf16.msra.mxu0 0
      %1948 = vmatprep.subr.bf16.mxu0 0
      %1949 = vmatpush1.bf16.msra.mxu0 0
      %1950 = vmatprep.subr.bf16.mxu0 0
      %1951 = vmatpush1.bf16.msra.mxu0 0
      %1952 = vmatprep.subr.bf16.mxu0 0
      %1953 = vmatpush1.bf16.msra.mxu0 0
      %1954 = vmatprep.subr.bf16.mxu0 0
      %1955 = vmatpush1.bf16.msra.mxu0 0
      %1956 = vmatprep.subr.bf16.mxu0 0
      %1957 = vmatpush1.bf16.msra.mxu0 0
      %1958 = vmatprep.subr.bf16.mxu0 0
      %1959 = vmatpush1.bf16.msra.mxu0 0
      %1960 = vmatprep.subr.bf16.mxu0 0
      %1961 = vmatpush1.bf16.msra.mxu0 0
      %1962 = vmatprep.subr.bf16.mxu0 0
      %1963 = vmatpush1.bf16.msra.mxu0 0
      %1964 = vmatprep.subr.bf16.mxu0 0
      %1965 = vmatpush1.bf16.msra.mxu0 0
      %1966 = vmatprep.subr.bf16.mxu0 0
      %1967 = vmatpush1.bf16.msra.mxu0 0
      %1968 = vmatprep.subr.bf16.mxu0 0
      %1969 = vmatpush1.bf16.msra.mxu0 0
      %1970 = vmatprep.mubr.bf16.mxu0 0
      %1971 = vmatmul.mubr.bf16.gmra.mrb[0].mxu0 %v1682
      %v1972 = vpop.f32.mrb[0].mxu0
      %v1973 = vadd.f32 %v1925, %v1972
      %v1974 = vpop.f32.mrb[0].mxu0
      %v1975 = vpop.f32.mrb[0].mxu0
      %v1976 = vadd.f32 %v1925, %v1975
      %v1977 = vpop.f32.mrb[0].mxu0
      %1978 = vmatprep.mubr.bf16.mxu0 0
      %1979 = vmatmul.mubr.bf16.gmra.mrb[0].mxu0 %v1685
      %v1980 = vpop.f32.mrb[0].mxu0
      %v1981 = vadd.f32 %v1925, %v1980
      %v1982 = vpop.f32.mrb[0].mxu0
      %v1983 = vpop.f32.mrb[0].mxu0
      %v1984 = vadd.f32 %v1925, %v1983
      %v1985 = vpop.f32.mrb[0].mxu0
      %1986 = vmatprep.mubr.bf16.mxu0 0
      %1987 = vmatmul.mubr.bf16.gmra.mrb[0].mxu0 %v1688
      %v1988 = vpop.f32.mrb[0].mxu0
      %v1989 = vadd.f32 %v1925, %v1988
      %v1990 = vpop.f32.mrb[0].mxu0
      %v1991 = vpop.f32.mrb[0].mxu0
      %v1992 = vadd.f32 %v1925, %v1991
      %v1993 = vpop.f32.mrb[0].mxu0
      %1994 = vmatprep.mubr.bf16.mxu0 0
      %1995 = vmatmul.mubr.bf16.gmra.mrb[0].mxu0 %v1691
      %v1996 = vpop.f32.mrb[0].mxu0
      %v1997 = vadd.f32 %v1925, %v1996
      %v1998 = vpop.f32.mrb[0].mxu0
      %v1999 = vpop.f32.mrb[0].mxu0
      %v2000 = vadd.f32 %v1925, %v1999
      %v2001 = vpop.f32.mrb[0].mxu0
      %2002 = vmatprep.mubr.bf16.mxu0 0
      %2003 = vmatmul.mubr.bf16.gmra.mrb[0].mxu0 %v1694
      %v2004 = vpop.f32.mrb[0].mxu0
      %v2005 = vadd.f32 %v1925, %v2004
      %v2006 = vpop.f32.mrb[0].mxu0
      %v2007 = vpop.f32.mrb[0].mxu0
      %v2008 = vadd.f32 %v1925, %v2007
      %v2009 = vpop.f32.mrb[0].mxu0
      %2010 = vmatprep.mubr.bf16.mxu0 0
      %2011 = vmatmul.mubr.bf16.gmra.mrb[0].mxu0 %v1697
      %v2012 = vpop.f32.mrb[0].mxu0
      %v2013 = vadd.f32 %v1925, %v2012
      %v2014 = vpop.f32.mrb[0].mxu0
      %v2015 = vpop.f32.mrb[0].mxu0
      %v2016 = vadd.f32 %v1925, %v2015
      %v2017 = vpop.f32.mrb[0].mxu0
      %2018 = vmatprep.mubr.bf16.mxu0 0
      %2019 = vmatmul.mubr.bf16.gmra.mrb[0].mxu0 %v1700
      %v2020 = vpop.f32.mrb[0].mxu0
      %v2021 = vadd.f32 %v1925, %v2020
      %v2022 = vpop.f32.mrb[0].mxu0
      %v2023 = vpop.f32.mrb[0].mxu0
      %v2024 = vadd.f32 %v1925, %v2023
      %v2025 = vpop.f32.mrb[0].mxu0
      %2026 = vmatprep.mubr.bf16.mxu0 0
      %2027 = vmatmul.mubr.bf16.gmra.mrb[0].mxu0 %v1703
      %v2028 = vpop.f32.mrb[0].mxu0
      %v2029 = vadd.f32 %v1925, %v2028
      %v2030 = vpop.f32.mrb[0].mxu0
      %v2031 = vpop.f32.mrb[0].mxu0
      %v2032 = vadd.f32 %v1925, %v2031
      %v2033 = vpop.f32.mrb[0].mxu0
      %2034 = vmatprep.mubr.bf16.mxu0 0
      %2035 = vmatmul.mubr.bf16.gmra.mrb[0].mxu0 %v1706
      %v2036 = vpop.f32.mrb[0].mxu0
      %v2037 = vadd.f32 %v1925, %v2036
      %v2038 = vpop.f32.mrb[0].mxu0
      %v2039 = vpop.f32.mrb[0].mxu0
      %v2040 = vadd.f32 %v1925, %v2039
      %v2041 = vpop.f32.mrb[0].mxu0
      %2042 = vmatprep.mubr.bf16.mxu0 0
      %2043 = vmatmul.mubr.bf16.gmra.mrb[0].mxu0 %v1709
      %v2044 = vpop.f32.mrb[0].mxu0
      %v2045 = vadd.f32 %v1925, %v2044
      %v2046 = vpop.f32.mrb[0].mxu0
      %v2047 = vpop.f32.mrb[0].mxu0
      %v2048 = vadd.f32 %v1925, %v2047
      %v2049 = vpop.f32.mrb[0].mxu0
      %2050 = vmatprep.mubr.bf16.mxu0 0
      %2051 = vmatmul.mubr.bf16.gmra.mrb[0].mxu0 %v1712
      %v2052 = vpop.f32.mrb[0].mxu0
      %v2053 = vadd.f32 %v1925, %v2052
      %v2054 = vpop.f32.mrb[0].mxu0
      %v2055 = vpop.f32.mrb[0].mxu0
      %v2056 = vadd.f32 %v1925, %v2055
      %v2057 = vpop.f32.mrb[0].mxu0
      %2058 = vmatprep.mubr.bf16.mxu0 0
      %2059 = vmatmul.mubr.bf16.gmra.mrb[0].mxu0 %v1715
      %v2060 = vpop.f32.mrb[0].mxu0
      %v2061 = vadd.f32 %v1925, %v2060
      %v2062 = vpop.f32.mrb[0].mxu0
      %v2063 = vpop.f32.mrb[0].mxu0
      %v2064 = vadd.f32 %v1925, %v2063
      %v2065 = vpop.f32.mrb[0].mxu0
      %2066 = vmatprep.mubr.bf16.mxu0 0
      %2067 = vmatmul.mubr.bf16.gmra.mrb[0].mxu0 %v1718
      %v2068 = vpop.f32.mrb[0].mxu0
      %v2069 = vadd.f32 %v1925, %v2068
      %v2070 = vpop.f32.mrb[0].mxu0
      %v2071 = vpop.f32.mrb[0].mxu0
      %v2072 = vadd.f32 %v1925, %v2071
      %v2073 = vpop.f32.mrb[0].mxu0
      %2074 = vmatprep.mubr.bf16.mxu0 0
      %2075 = vmatmul.mubr.bf16.gmra.mrb[0].mxu0 %v1721
      %v2076 = vpop.f32.mrb[0].mxu0
      %v2077 = vadd.f32 %v1925, %v2076
      %v2078 = vpop.f32.mrb[0].mxu0
      %v2079 = vpop.f32.mrb[0].mxu0
      %v2080 = vadd.f32 %v1925, %v2079
      %v2081 = vpop.f32.mrb[0].mxu0
      %2082 = vmatprep.mubr.bf16.mxu0 0
      %2083 = vmatmul.mubr.bf16.gmra.mrb[0].mxu0 %v1724
      %v2084 = vpop.f32.mrb[0].mxu0
      %v2085 = vadd.f32 %v1925, %v2084
      %v2086 = vpop.f32.mrb[0].mxu0
      %v2087 = vpop.f32.mrb[0].mxu0
      %v2088 = vadd.f32 %v1925, %v2087
      %v2089 = vpop.f32.mrb[0].mxu0
      %2090 = vmatprep.mubr.bf16.mxu0 0
      %2091 = vmatmul.mubr.bf16.gmra.mrb[0].mxu0 %v1727
      %v2092 = vpop.f32.mrb[0].mxu0
      %v2093 = vadd.f32 %v1925, %v2092
      %v2094 = vpop.f32.mrb[0].mxu0
      %v2095 = vpop.f32.mrb[0].mxu0
      %v2096 = vadd.f32 %v1925, %v2095
      %v2097 = vpop.f32.mrb[0].mxu0
      %2098 = vdwg.mxu0
      %v2099 = vmul.f32 %v1890, 1.442695
      %v2100 = vpow.pop %v2099
      %v2101 = vmul.f32 %v1891, 1.442695
      %v2102 = vpow.pop %v2101
      %v2103 = vmul.f32 %v1892, 1.442695
      %v2104 = vpow.pop %v2103
      %v2105 = vmul.f32 %v1893, 1.442695
      %v2106 = vpow.pop %v2105
      %v2107 = vmul.f32 %v1894, 1.442695
      %v2108 = vpow.pop %v2107
      %v2109 = vmul.f32 %v1895, 1.442695
      %v2110 = vpow.pop %v2109
      %v2111 = vmul.f32 %v1896, 1.442695
      %v2112 = vpow.pop %v2111
      %v2113 = vmul.f32 %v1897, 1.442695
      %v2114 = vpow.pop %v2113
      %v2115 = vmul.f32 %v1898, 1.442695
      %v2116 = vpow.pop %v2115
      %v2117 = vmul.f32 %v1899, 1.442695
      %v2118 = vpow.pop %v2117
      %v2119 = vmul.f32 %v1900, 1.442695
      %v2120 = vpow.pop %v2119
      %v2121 = vmul.f32 %v1901, 1.442695
      %v2122 = vpow.pop %v2121
      %v2123 = vmul.f32 %v1902, 1.442695
      %v2124 = vpow.pop %v2123
      %v2125 = vmul.f32 %v1903, 1.442695
      %v2126 = vpow.pop %v2125
      %v2127 = vmul.f32 %v1904, 1.442695
      %v2128 = vpow.pop %v2127
      %v2129 = vmul.f32 %v1905, 1.442695
      %v2130 = vpow.pop %v2129
      %v2131 = vmul.f32 %v1906, 1.442695
      %v2132 = vpow.pop %v2131
      %v2133 = vmul.f32 %v1907, 1.442695
      %v2134 = vpow.pop %v2133
      %v2135 = vmul.f32 %v1908, 1.442695
      %v2136 = vpow.pop %v2135
      %v2137 = vmul.f32 %v1909, 1.442695
      %v2138 = vpow.pop %v2137
      %v2139 = vmul.f32 %v1910, 1.442695
      %v2140 = vpow.pop %v2139
      %v2141 = vmul.f32 %v1911, 1.442695
      %v2142 = vpow.pop %v2141
      %v2143 = vmul.f32 %v1912, 1.442695
      %v2144 = vpow.pop %v2143
      %v2145 = vmul.f32 %v1913, 1.442695
      %v2146 = vpow.pop %v2145
      %v2147 = vmul.f32 %v1914, 1.442695
      %v2148 = vpow.pop %v2147
      %v2149 = vmul.f32 %v1915, 1.442695
      %v2150 = vpow.pop %v2149
      %v2151 = vmul.f32 %v1916, 1.442695
      %v2152 = vpow.pop %v2151
      %v2153 = vmul.f32 %v1917, 1.442695
      %v2154 = vpow.pop %v2153
      %v2155 = vmul.f32 %v1918, 1.442695
      %v2156 = vpow.pop %v2155
      %v2157 = vmul.f32 %v1919, 1.442695
      %v2158 = vpow.pop %v2157
      %v2159 = vmul.f32 %v1920, 1.442695
      %v2160 = vpow.pop %v2159
      %v2161 = vmul.f32 %v1921, 1.442695
      %v2162 = vpow.pop %v2161
      %v2163 = vmul.f32 %v1300, %v2100
      %v2164 = vmul.f32 %v1301, %v2102
      %v2165 = vmul.f32 %v1302, %v2104
      %v2166 = vmul.f32 %v1303, %v2106
      %v2167 = vmul.f32 %v1304, %v2108
      %v2168 = vmul.f32 %v1305, %v2110
      %v2169 = vmul.f32 %v1306, %v2112
      %v2170 = vmul.f32 %v1307, %v2114
      %v2171 = vmul.f32 %v1308, %v2116
      %v2172 = vmul.f32 %v1309, %v2118
      %v2173 = vmul.f32 %v1310, %v2120
      %v2174 = vmul.f32 %v1311, %v2122
      %v2175 = vmul.f32 %v1312, %v2124
      %v2176 = vmul.f32 %v1313, %v2126
      %v2177 = vmul.f32 %v1314, %v2128
      %v2178 = vmul.f32 %v1315, %v2130
      %v2179 = vmul.f32 %v1316, %v2132
      %v2180 = vmul.f32 %v1317, %v2134
      %v2181 = vmul.f32 %v1318, %v2136
      %v2182 = vmul.f32 %v1319, %v2138
      %v2183 = vmul.f32 %v1320, %v2140
      %v2184 = vmul.f32 %v1321, %v2142
      %v2185 = vmul.f32 %v1322, %v2144
      %v2186 = vmul.f32 %v1323, %v2146
      %v2187 = vmul.f32 %v1324, %v2148
      %v2188 = vmul.f32 %v1325, %v2150
      %v2189 = vmul.f32 %v1326, %v2152
      %v2190 = vmul.f32 %v1327, %v2154
      %v2191 = vmul.f32 %v1328, %v2156
      %v2192 = vmul.f32 %v1329, %v2158
      %v2193 = vmul.f32 %v1330, %v2160
      %v2194 = vmul.f32 %v1331, %v2162
      %v2195 = vadd.f32 %v2163, %v1973
      %v2196 = vadd.f32 %v2164, %v1976
      %v2197 = vadd.f32 %v2165, %v1981
      %v2198 = vadd.f32 %v2166, %v1984
      %v2199 = vadd.f32 %v2167, %v1989
      %v2200 = vadd.f32 %v2168, %v1992
      %v2201 = vadd.f32 %v2169, %v1997
      %v2202 = vadd.f32 %v2170, %v2000
      %v2203 = vadd.f32 %v2171, %v2005
      %v2204 = vadd.f32 %v2172, %v2008
      %v2205 = vadd.f32 %v2173, %v2013
      %v2206 = vadd.f32 %v2174, %v2016
      %v2207 = vadd.f32 %v2175, %v2021
      %v2208 = vadd.f32 %v2176, %v2024
      %v2209 = vadd.f32 %v2177, %v2029
      %v2210 = vadd.f32 %v2178, %v2032
      %v2211 = vadd.f32 %v2179, %v2037
      %v2212 = vadd.f32 %v2180, %v2040
      %v2213 = vadd.f32 %v2181, %v2045
      %v2214 = vadd.f32 %v2182, %v2048
      %v2215 = vadd.f32 %v2183, %v2053
      %v2216 = vadd.f32 %v2184, %v2056
      %v2217 = vadd.f32 %v2185, %v2061
      %v2218 = vadd.f32 %v2186, %v2064
      %v2219 = vadd.f32 %v2187, %v2069
      %v2220 = vadd.f32 %v2188, %v2072
      %v2221 = vadd.f32 %v2189, %v2077
      %v2222 = vadd.f32 %v2190, %v2080
      %v2223 = vadd.f32 %v2191, %v2085
      %v2224 = vadd.f32 %v2192, %v2088
      %v2225 = vadd.f32 %v2193, %v2093
      %v2226 = vadd.f32 %v2194, %v2096
      %v2227 = vlaneseq
      %v2228 = vshrl.u32 %v2227, 7
      %v2229 = vsub.s32 0, %v2228
      %v2230 = vrot.slane %v1333, %v2229
      %v2231 = vmul.f32 %v2230, %v2195
      %v2232 = vmul.f32 %v2230, %v2196
      %v2233 = vmul.f32 %v2230, %v2197
      %v2234 = vmul.f32 %v2230, %v2198
      %v2235 = vmul.f32 %v2230, %v2199
      %v2236 = vmul.f32 %v2230, %v2200
      %v2237 = vmul.f32 %v2230, %v2201
      %v2238 = vmul.f32 %v2230, %v2202
      %v2239 = vmul.f32 %v2230, %v2203
      %v2240 = vmul.f32 %v2230, %v2204
      %v2241 = vmul.f32 %v2230, %v2205
      %v2242 = vmul.f32 %v2230, %v2206
      %v2243 = vmul.f32 %v2230, %v2207
      %v2244 = vmul.f32 %v2230, %v2208
      %v2245 = vmul.f32 %v2230, %v2209
      %v2246 = vmul.f32 %v2230, %v2210
      %v2247 = vmul.f32 %v2230, %v2211
      %v2248 = vmul.f32 %v2230, %v2212
      %v2249 = vmul.f32 %v2230, %v2213
      %v2250 = vmul.f32 %v2230, %v2214
      %v2251 = vmul.f32 %v2230, %v2215
      %v2252 = vmul.f32 %v2230, %v2216
      %v2253 = vmul.f32 %v2230, %v2217
      %v2254 = vmul.f32 %v2230, %v2218
      %v2255 = vmul.f32 %v2230, %v2219
      %v2256 = vmul.f32 %v2230, %v2220
      %v2257 = vmul.f32 %v2230, %v2221
      %v2258 = vmul.f32 %v2230, %v2222
      %v2259 = vmul.f32 %v2230, %v2223
      %v2260 = vmul.f32 %v2230, %v2224
      %v2261 = vmul.f32 %v2230, %v2225
      %v2262 = vmul.f32 %v2230, %v2226
      %v2263 = vadd.f32 %v1353, %v2231
      %v2264 = vadd.f32 %v1354, %v2232
      %v2265 = vadd.f32 %v1355, %v2233
      %v2266 = vadd.f32 %v1356, %v2234
      %v2267 = vadd.f32 %v1357, %v2235
      %v2268 = vadd.f32 %v1358, %v2236
      %v2269 = vadd.f32 %v1359, %v2237
      %v2270 = vadd.f32 %v1360, %v2238
      %v2271 = vadd.f32 %v1361, %v2239
      %v2272 = vadd.f32 %v1362, %v2240
      %v2273 = vadd.f32 %v1363, %v2241
      %v2274 = vadd.f32 %v1364, %v2242
      %v2275 = vadd.f32 %v1365, %v2243
      %v2276 = vadd.f32 %v1366, %v2244
      %v2277 = vadd.f32 %v1367, %v2245
      %v2278 = vadd.f32 %v1368, %v2246
      %v2279 = vadd.f32 %v1369, %v2247
      %v2280 = vadd.f32 %v1370, %v2248
      %v2281 = vadd.f32 %v1371, %v2249
      %v2282 = vadd.f32 %v1372, %v2250
      %v2283 = vadd.f32 %v1373, %v2251
      %v2284 = vadd.f32 %v1374, %v2252
      %v2285 = vadd.f32 %v1375, %v2253
      %v2286 = vadd.f32 %v1376, %v2254
      %v2287 = vadd.f32 %v1377, %v2255
      %v2288 = vadd.f32 %v1378, %v2256
      %v2289 = vadd.f32 %v1379, %v2257
      %v2290 = vadd.f32 %v1380, %v2258
      %v2291 = vadd.f32 %v1381, %v2259
      %v2292 = vadd.f32 %v1382, %v2260
      %v2293 = vadd.f32 %v1383, %v2261
      %v2294 = vadd.f32 %v1384, %v2262
      %v2295 = vld [vmem:[%s1 + $0x2] sm:$0x1]
      %v2296 = vld [vmem:[%s2 + $0x2] sm:$0x1]
      %s2297 = scalar_lea.vmem %s3, 8
      %v2298 = vld [vmem:[%s2297] sm:$0xf]
      %v2299 = vld [vmem:[%s4 + $0x2] sm:$0x1]
      %s2300 = scalar_lea.vmem %s5, 32
      %v2301 = vld [vmem:[%s2300] sm:$0xf]
      %v2302 = vld [vmem:[%s2300 + $0x4] sm:$0xf]
      %v2303 = vld [vmem:[%s2300 + $0x8] sm:$0xf]
      %v2304 = vld [vmem:[%s2300 + $0xc] sm:$0xf]
      %s2305 = scalar_lea.vmem %s6, 32
      %v2306 = vld [vmem:[%s2305] sm:$0xf]
      %v2307 = vld [vmem:[%s2305 + $0x4] sm:$0xf]
      %v2308 = vld [vmem:[%s2305 + $0x8] sm:$0xf]
      %v2309 = vld [vmem:[%s2305 + $0xc] sm:$0xf]
      %v2310 = vld [vmem:[%s7 + $0x2] sm:$0x1]
      %v2311 = vld [vmem:[%s8 + $0x2] sm:$0x1]
      %v2312 = vlaneseq
      %v2313 = vshrl.u32 %v2312, 7
      %v2314 = vsub.s32 0, %v2313
      %v2315 = vrot.slane %v2295, %v2314
      %v2316 = vmul.f32 %v2263, %v2315
      %v2317 = vmul.f32 %v2264, %v2315
      %v2318 = vmul.f32 %v2265, %v2315
      %v2319 = vmul.f32 %v2266, %v2315
      %v2320 = vmul.f32 %v2267, %v2315
      %v2321 = vmul.f32 %v2268, %v2315
      %v2322 = vmul.f32 %v2269, %v2315
      %v2323 = vmul.f32 %v2270, %v2315
      %v2324 = vmul.f32 %v2271, %v2315
      %v2325 = vmul.f32 %v2272, %v2315
      %v2326 = vmul.f32 %v2273, %v2315
      %v2327 = vmul.f32 %v2274, %v2315
      %v2328 = vmul.f32 %v2275, %v2315
      %v2329 = vmul.f32 %v2276, %v2315
      %v2330 = vmul.f32 %v2277, %v2315
      %v2331 = vmul.f32 %v2278, %v2315
      %v2332 = vmul.f32 %v2279, %v2315
      %v2333 = vmul.f32 %v2280, %v2315
      %v2334 = vmul.f32 %v2281, %v2315
      %v2335 = vmul.f32 %v2282, %v2315
      %v2336 = vmul.f32 %v2283, %v2315
      %v2337 = vmul.f32 %v2284, %v2315
      %v2338 = vmul.f32 %v2285, %v2315
      %v2339 = vmul.f32 %v2286, %v2315
      %v2340 = vmul.f32 %v2287, %v2315
      %v2341 = vmul.f32 %v2288, %v2315
      %v2342 = vmul.f32 %v2289, %v2315
      %v2343 = vmul.f32 %v2290, %v2315
      %v2344 = vmul.f32 %v2291, %v2315
      %v2345 = vmul.f32 %v2292, %v2315
      %v2346 = vmul.f32 %v2293, %v2315
      %v2347 = vmul.f32 %v2294, %v2315
      %v2348 = vpack.c.bf16 %v2317, %v2316
      %v2349 = vpack.c.bf16 %v2319, %v2318
      %v2350 = vpack.c.bf16 %v2321, %v2320
      %v2351 = vpack.c.bf16 %v2323, %v2322
      %v2352 = vpack.c.bf16 %v2325, %v2324
      %v2353 = vpack.c.bf16 %v2327, %v2326
      %v2354 = vpack.c.bf16 %v2329, %v2328
      %v2355 = vpack.c.bf16 %v2331, %v2330
      %v2356 = vpack.c.bf16 %v2333, %v2332
      %v2357 = vpack.c.bf16 %v2335, %v2334
      %v2358 = vpack.c.bf16 %v2337, %v2336
      %v2359 = vpack.c.bf16 %v2339, %v2338
      %v2360 = vpack.c.bf16 %v2341, %v2340
      %v2361 = vpack.c.bf16 %v2343, %v2342
      %v2362 = vpack.c.bf16 %v2345, %v2344
      %v2363 = vpack.c.bf16 %v2347, %v2346
      %v2364 = vlaneseq
      %v2365 = vshrl.u32 %v2364, 7
      %v2366 = vsub.s32 0, %v2365
      %v2367 = vrot.slane %v2299, %v2366
      %v2369 = vsel %vm439, %v2348, 0
      %v2372 = vsel %vm439, %v2349, 0
      %v2375 = vsel %vm439, %v2350, 0
      %v2378 = vsel %vm439, %v2351, 0
      %v2381 = vsel %vm439, %v2352, 0
      %v2384 = vsel %vm439, %v2353, 0
      %v2387 = vsel %vm439, %v2354, 0
      %v2390 = vsel %vm439, %v2355, 0
      %v2393 = vsel %vm439, %v2356, 0
      %v2396 = vsel %vm439, %v2357, 0
      %v2399 = vsel %vm439, %v2358, 0
      %v2402 = vsel %vm439, %v2359, 0
      %v2405 = vsel %vm439, %v2360, 0
      %v2408 = vsel %vm439, %v2361, 0
      %v2411 = vsel %vm439, %v2362, 0
      %v2414 = vsel %vm439, %v2363, 0
      %v2417 = vsel %vm488, %v2298, 0
      %2419 = vmatprep.subr.bf16.mxu0 0
      %2420 = vmatpush1.bf16.msra.mxu0 %v2417
      %2421 = vmatprep.subr.bf16.mxu0 0
      %2422 = vmatpush1.bf16.msra.mxu0 0
      %2423 = vmatprep.subr.bf16.mxu0 0
      %2424 = vmatpush1.bf16.msra.mxu0 0
      %2425 = vmatprep.subr.bf16.mxu0 0
      %2426 = vmatpush1.bf16.msra.mxu0 0
      %2427 = vmatprep.subr.bf16.mxu0 0
      %2428 = vmatpush1.bf16.msra.mxu0 0
      %2429 = vmatprep.subr.bf16.mxu0 0
      %2430 = vmatpush1.bf16.msra.mxu0 0
      %2431 = vmatprep.subr.bf16.mxu0 0
      %2432 = vmatpush1.bf16.msra.mxu0 0
      %2433 = vmatprep.subr.bf16.mxu0 0
      %2434 = vmatpush1.bf16.msra.mxu0 0
      %2435 = vmatprep.subr.bf16.mxu0 0
      %2436 = vmatpush1.bf16.msra.mxu0 0
      %2437 = vmatprep.subr.bf16.mxu0 0
      %2438 = vmatpush1.bf16.msra.mxu0 0
      %2439 = vmatprep.subr.bf16.mxu0 0
      %2440 = vmatpush1.bf16.msra.mxu0 0
      %2441 = vmatprep.subr.bf16.mxu0 0
      %2442 = vmatpush1.bf16.msra.mxu0 0
      %2443 = vmatprep.subr.bf16.mxu0 0
      %2444 = vmatpush1.bf16.msra.mxu0 0
      %2445 = vmatprep.subr.bf16.mxu0 0
      %2446 = vmatpush1.bf16.msra.mxu0 0
      %2447 = vmatprep.subr.bf16.mxu0 0
      %2448 = vmatpush1.bf16.msra.mxu0 0
      %2449 = vmatprep.subr.bf16.mxu0 0
      %2450 = vmatpush1.bf16.msra.mxu0 0
      %2451 = vmatprep.mubr.bf16.mxu0 0
      %2452 = vmatmul.mubr.bf16.gmra.mrb[0].mxu0 %v2369
      %v2453 = vpop.f32.mrb[0].mxu0
      %v2454 = vadd.f32 %v2367, %v2453
      %v2455 = vpop.f32.mrb[0].mxu0
      %v2456 = vpop.f32.mrb[0].mxu0
      %v2457 = vadd.f32 %v2367, %v2456
      %v2458 = vpop.f32.mrb[0].mxu0
      %2459 = vmatprep.mubr.bf16.mxu0 0
      %2460 = vmatmul.mubr.bf16.gmra.mrb[0].mxu0 %v2372
      %v2461 = vpop.f32.mrb[0].mxu0
      %v2462 = vadd.f32 %v2367, %v2461
      %v2463 = vpop.f32.mrb[0].mxu0
      %v2464 = vpop.f32.mrb[0].mxu0
      %v2465 = vadd.f32 %v2367, %v2464
      %v2466 = vpop.f32.mrb[0].mxu0
      %2467 = vmatprep.mubr.bf16.mxu0 0
      %2468 = vmatmul.mubr.bf16.gmra.mrb[0].mxu0 %v2375
      %v2469 = vpop.f32.mrb[0].mxu0
      %v2470 = vadd.f32 %v2367, %v2469
      %v2471 = vpop.f32.mrb[0].mxu0
      %v2472 = vpop.f32.mrb[0].mxu0
      %v2473 = vadd.f32 %v2367, %v2472
      %v2474 = vpop.f32.mrb[0].mxu0
      %2475 = vmatprep.mubr.bf16.mxu0 0
      %2476 = vmatmul.mubr.bf16.gmra.mrb[0].mxu0 %v2378
      %v2477 = vpop.f32.mrb[0].mxu0
      %v2478 = vadd.f32 %v2367, %v2477
      %v2479 = vpop.f32.mrb[0].mxu0
      %v2480 = vpop.f32.mrb[0].mxu0
      %v2481 = vadd.f32 %v2367, %v2480
      %v2482 = vpop.f32.mrb[0].mxu0
      %2483 = vmatprep.mubr.bf16.mxu0 0
      %2484 = vmatmul.mubr.bf16.gmra.mrb[0].mxu0 %v2381
      %v2485 = vpop.f32.mrb[0].mxu0
      %v2486 = vadd.f32 %v2367, %v2485
      %v2487 = vpop.f32.mrb[0].mxu0
      %v2488 = vpop.f32.mrb[0].mxu0
      %v2489 = vadd.f32 %v2367, %v2488
      %v2490 = vpop.f32.mrb[0].mxu0
      %2491 = vmatprep.mubr.bf16.mxu0 0
      %2492 = vmatmul.mubr.bf16.gmra.mrb[0].mxu0 %v2384
      %v2493 = vpop.f32.mrb[0].mxu0
      %v2494 = vadd.f32 %v2367, %v2493
      %v2495 = vpop.f32.mrb[0].mxu0
      %v2496 = vpop.f32.mrb[0].mxu0
      %v2497 = vadd.f32 %v2367, %v2496
      %v2498 = vpop.f32.mrb[0].mxu0
      %2499 = vmatprep.mubr.bf16.mxu0 0
      %2500 = vmatmul.mubr.bf16.gmra.mrb[0].mxu0 %v2387
      %v2501 = vpop.f32.mrb[0].mxu0
      %v2502 = vadd.f32 %v2367, %v2501
      %v2503 = vpop.f32.mrb[0].mxu0
      %v2504 = vpop.f32.mrb[0].mxu0
      %v2505 = vadd.f32 %v2367, %v2504
      %v2506 = vpop.f32.mrb[0].mxu0
      %2507 = vmatprep.mubr.bf16.mxu0 0
      %2508 = vmatmul.mubr.bf16.gmra.mrb[0].mxu0 %v2390
      %v2509 = vpop.f32.mrb[0].mxu0
      %v2510 = vadd.f32 %v2367, %v2509
      %v2511 = vpop.f32.mrb[0].mxu0
      %v2512 = vpop.f32.mrb[0].mxu0
      %v2513 = vadd.f32 %v2367, %v2512
      %v2514 = vpop.f32.mrb[0].mxu0
      %2515 = vmatprep.mubr.bf16.mxu0 0
      %2516 = vmatmul.mubr.bf16.gmra.mrb[0].mxu0 %v2393
      %v2517 = vpop.f32.mrb[0].mxu0
      %v2518 = vadd.f32 %v2367, %v2517
      %v2519 = vpop.f32.mrb[0].mxu0
      %v2520 = vpop.f32.mrb[0].mxu0
      %v2521 = vadd.f32 %v2367, %v2520
      %v2522 = vpop.f32.mrb[0].mxu0
      %2523 = vmatprep.mubr.bf16.mxu0 0
      %2524 = vmatmul.mubr.bf16.gmra.mrb[0].mxu0 %v2396
      %v2525 = vpop.f32.mrb[0].mxu0
      %v2526 = vadd.f32 %v2367, %v2525
      %v2527 = vpop.f32.mrb[0].mxu0
      %v2528 = vpop.f32.mrb[0].mxu0
      %v2529 = vadd.f32 %v2367, %v2528
      %v2530 = vpop.f32.mrb[0].mxu0
      %2531 = vmatprep.mubr.bf16.mxu0 0
      %2532 = vmatmul.mubr.bf16.gmra.mrb[0].mxu0 %v2399
      %v2533 = vpop.f32.mrb[0].mxu0
      %v2534 = vadd.f32 %v2367, %v2533
      %v2535 = vpop.f32.mrb[0].mxu0
      %v2536 = vpop.f32.mrb[0].mxu0
      %v2537 = vadd.f32 %v2367, %v2536
      %v2538 = vpop.f32.mrb[0].mxu0
      %2539 = vmatprep.mubr.bf16.mxu0 0
      %2540 = vmatmul.mubr.bf16.gmra.mrb[0].mxu0 %v2402
      %v2541 = vpop.f32.mrb[0].mxu0
      %v2542 = vadd.f32 %v2367, %v2541
      %v2543 = vpop.f32.mrb[0].mxu0
      %v2544 = vpop.f32.mrb[0].mxu0
      %v2545 = vadd.f32 %v2367, %v2544
      %v2546 = vpop.f32.mrb[0].mxu0
      %2547 = vmatprep.mubr.bf16.mxu0 0
      %2548 = vmatmul.mubr.bf16.gmra.mrb[0].mxu0 %v2405
      %v2549 = vpop.f32.mrb[0].mxu0
      %v2550 = vadd.f32 %v2367, %v2549
      %v2551 = vpop.f32.mrb[0].mxu0
      %v2552 = vpop.f32.mrb[0].mxu0
      %v2553 = vadd.f32 %v2367, %v2552
      %v2554 = vpop.f32.mrb[0].mxu0
      %2555 = vmatprep.mubr.bf16.mxu0 0
      %2556 = vmatmul.mubr.bf16.gmra.mrb[0].mxu0 %v2408
      %v2557 = vpop.f32.mrb[0].mxu0
      %v2558 = vadd.f32 %v2367, %v2557
      %v2559 = vpop.f32.mrb[0].mxu0
      %v2560 = vpop.f32.mrb[0].mxu0
      %v2561 = vadd.f32 %v2367, %v2560
      %v2562 = vpop.f32.mrb[0].mxu0
      %2563 = vmatprep.mubr.bf16.mxu0 0
      %2564 = vmatmul.mubr.bf16.gmra.mrb[0].mxu0 %v2411
      %v2565 = vpop.f32.mrb[0].mxu0
      %v2566 = vadd.f32 %v2367, %v2565
      %v2567 = vpop.f32.mrb[0].mxu0
      %v2568 = vpop.f32.mrb[0].mxu0
      %v2569 = vadd.f32 %v2367, %v2568
      %v2570 = vpop.f32.mrb[0].mxu0
      %2571 = vmatprep.mubr.bf16.mxu0 0
      %2572 = vmatmul.mubr.bf16.gmra.mrb[0].mxu0 %v2414
      %v2573 = vpop.f32.mrb[0].mxu0
      %v2574 = vadd.f32 %v2367, %v2573
      %v2575 = vpop.f32.mrb[0].mxu0
      %v2576 = vpop.f32.mrb[0].mxu0
      %v2577 = vadd.f32 %v2367, %v2576
      %v2578 = vpop.f32.mrb[0].mxu0
      %2579 = vdwg.mxu0
      %v2580 = vmax.f32 %v2454, 0.0
      %v2581 = vmax.f32 %v2457, 0.0
      %v2582 = vmax.f32 %v2462, 0.0
      %v2583 = vmax.f32 %v2465, 0.0
      %v2584 = vmax.f32 %v2470, 0.0
      %v2585 = vmax.f32 %v2473, 0.0
      %v2586 = vmax.f32 %v2478, 0.0
      %v2587 = vmax.f32 %v2481, 0.0
      %v2588 = vmax.f32 %v2486, 0.0
      %v2589 = vmax.f32 %v2489, 0.0
      %v2590 = vmax.f32 %v2494, 0.0
      %v2591 = vmax.f32 %v2497, 0.0
      %v2592 = vmax.f32 %v2502, 0.0
      %v2593 = vmax.f32 %v2505, 0.0
      %v2594 = vmax.f32 %v2510, 0.0
      %v2595 = vmax.f32 %v2513, 0.0
      %v2596 = vmax.f32 %v2518, 0.0
      %v2597 = vmax.f32 %v2521, 0.0
      %v2598 = vmax.f32 %v2526, 0.0
      %v2599 = vmax.f32 %v2529, 0.0
      %v2600 = vmax.f32 %v2534, 0.0
      %v2601 = vmax.f32 %v2537, 0.0
      %v2602 = vmax.f32 %v2542, 0.0
      %v2603 = vmax.f32 %v2545, 0.0
      %v2604 = vmax.f32 %v2550, 0.0
      %v2605 = vmax.f32 %v2553, 0.0
      %v2606 = vmax.f32 %v2558, 0.0
      %v2607 = vmax.f32 %v2561, 0.0
      %v2608 = vmax.f32 %v2566, 0.0
      %v2609 = vmax.f32 %v2569, 0.0
      %v2610 = vmax.f32 %v2574, 0.0
      %v2611 = vmax.f32 %v2577, 0.0
      %v2612 = vpack.c.bf16 %v2581, %v2580
      %v2613 = vpack.c.bf16 %v2583, %v2582
      %v2614 = vpack.c.bf16 %v2585, %v2584
      %v2615 = vpack.c.bf16 %v2587, %v2586
      %v2616 = vpack.c.bf16 %v2589, %v2588
      %v2617 = vpack.c.bf16 %v2591, %v2590
      %v2618 = vpack.c.bf16 %v2593, %v2592
      %v2619 = vpack.c.bf16 %v2595, %v2594
      %v2620 = vpack.c.bf16 %v2597, %v2596
      %v2621 = vpack.c.bf16 %v2599, %v2598
      %v2622 = vpack.c.bf16 %v2601, %v2600
      %v2623 = vpack.c.bf16 %v2603, %v2602
      %v2624 = vpack.c.bf16 %v2605, %v2604
      %v2625 = vpack.c.bf16 %v2607, %v2606
      %v2626 = vpack.c.bf16 %v2609, %v2608
      %v2627 = vpack.c.bf16 %v2611, %v2610
      %v2628 = vlaneseq
      %v2629 = vshrl.u32 %v2628, 7
      %v2630 = vsub.s32 0, %v2629
      %v2631 = vrot.slane %v2310, %v2630
      %v2636 = vunpack.c.l.b16 %v2301
      %v2637 = vunpack.c.l.b16 %v2302
      %v2638 = vunpack.c.l.b16 %v2303
      %v2639 = vunpack.c.l.b16 %v2304
      %v2640 = vpack.c.b16 %v2637, %v2636
      %v2641 = vpack.c.b16 %v2639, %v2638
      %v2645 = vsel %vm717, %v2612, 0
      %v2648 = vsel %vm717, %v2613, 0
      %v2651 = vsel %vm717, %v2614, 0
      %v2654 = vsel %vm717, %v2615, 0
      %v2657 = vsel %vm717, %v2616, 0
      %v2660 = vsel %vm717, %v2617, 0
      %v2663 = vsel %vm717, %v2618, 0
      %v2666 = vsel %vm717, %v2619, 0
      %v2669 = vsel %vm717, %v2620, 0
      %v2672 = vsel %vm717, %v2621, 0
      %v2675 = vsel %vm717, %v2622, 0
      %v2678 = vsel %vm717, %v2623, 0
      %v2681 = vsel %vm717, %v2624, 0
      %v2684 = vsel %vm717, %v2625, 0
      %v2687 = vsel %vm717, %v2626, 0
      %v2690 = vsel %vm717, %v2627, 0
      %2692 = vmatprep.subr.bf16.mxu0 0
      %2693 = vmatpush1.bf16.msra.mxu0 %v2640
      %2694 = vmatprep.subr.bf16.mxu0 0
      %2695 = vmatpush1.bf16.msra.mxu0 %v2641
      %2696 = vmatprep.subr.bf16.mxu0 0
      %2697 = vmatpush1.bf16.msra.mxu0 0
      %2698 = vmatprep.subr.bf16.mxu0 0
      %2699 = vmatpush1.bf16.msra.mxu0 0
      %2700 = vmatprep.subr.bf16.mxu0 0
      %2701 = vmatpush1.bf16.msra.mxu0 0
      %2702 = vmatprep.subr.bf16.mxu0 0
      %2703 = vmatpush1.bf16.msra.mxu0 0
      %2704 = vmatprep.subr.bf16.mxu0 0
      %2705 = vmatpush1.bf16.msra.mxu0 0
      %2706 = vmatprep.subr.bf16.mxu0 0
      %2707 = vmatpush1.bf16.msra.mxu0 0
      %2708 = vmatprep.subr.bf16.mxu0 0
      %2709 = vmatpush1.bf16.msra.mxu0 0
      %2710 = vmatprep.subr.bf16.mxu0 0
      %2711 = vmatpush1.bf16.msra.mxu0 0
      %2712 = vmatprep.subr.bf16.mxu0 0
      %2713 = vmatpush1.bf16.msra.mxu0 0
      %2714 = vmatprep.subr.bf16.mxu0 0
      %2715 = vmatpush1.bf16.msra.mxu0 0
      %2716 = vmatprep.subr.bf16.mxu0 0
      %2717 = vmatpush1.bf16.msra.mxu0 0
      %2718 = vmatprep.subr.bf16.mxu0 0
      %2719 = vmatpush1.bf16.msra.mxu0 0
      %2720 = vmatprep.subr.bf16.mxu0 0
      %2721 = vmatpush1.bf16.msra.mxu0 0
      %2722 = vmatprep.subr.bf16.mxu0 0
      %2723 = vmatpush1.bf16.msra.mxu0 0
      %2724 = vmatprep.mubr.bf16.mxu0 0
      %2725 = vmatmul.mubr.bf16.gmra.mrb[0].mxu0 %v2645
      %v2726 = vpop.f32.mrb[0].mxu0
      %v2727 = vadd.f32 %v2631, %v2726
      %v2728 = vpop.f32.mrb[0].mxu0
      %v2729 = vpop.f32.mrb[0].mxu0
      %v2730 = vadd.f32 %v2631, %v2729
      %v2731 = vpop.f32.mrb[0].mxu0
      %2732 = vmatprep.mubr.bf16.mxu0 0
      %2733 = vmatmul.mubr.bf16.gmra.mrb[0].mxu0 %v2648
      %v2734 = vpop.f32.mrb[0].mxu0
      %v2735 = vadd.f32 %v2631, %v2734
      %v2736 = vpop.f32.mrb[0].mxu0
      %v2737 = vpop.f32.mrb[0].mxu0
      %v2738 = vadd.f32 %v2631, %v2737
      %v2739 = vpop.f32.mrb[0].mxu0
      %2740 = vmatprep.mubr.bf16.mxu0 0
      %2741 = vmatmul.mubr.bf16.gmra.mrb[0].mxu0 %v2651
      %v2742 = vpop.f32.mrb[0].mxu0
      %v2743 = vadd.f32 %v2631, %v2742
      %v2744 = vpop.f32.mrb[0].mxu0
      %v2745 = vpop.f32.mrb[0].mxu0
      %v2746 = vadd.f32 %v2631, %v2745
      %v2747 = vpop.f32.mrb[0].mxu0
      %2748 = vmatprep.mubr.bf16.mxu0 0
      %2749 = vmatmul.mubr.bf16.gmra.mrb[0].mxu0 %v2654
      %v2750 = vpop.f32.mrb[0].mxu0
      %v2751 = vadd.f32 %v2631, %v2750
      %v2752 = vpop.f32.mrb[0].mxu0
      %v2753 = vpop.f32.mrb[0].mxu0
      %v2754 = vadd.f32 %v2631, %v2753
      %v2755 = vpop.f32.mrb[0].mxu0
      %2756 = vmatprep.mubr.bf16.mxu0 0
      %2757 = vmatmul.mubr.bf16.gmra.mrb[0].mxu0 %v2657
      %v2758 = vpop.f32.mrb[0].mxu0
      %v2759 = vadd.f32 %v2631, %v2758
      %v2760 = vpop.f32.mrb[0].mxu0
      %v2761 = vpop.f32.mrb[0].mxu0
      %v2762 = vadd.f32 %v2631, %v2761
      %v2763 = vpop.f32.mrb[0].mxu0
      %2764 = vmatprep.mubr.bf16.mxu0 0
      %2765 = vmatmul.mubr.bf16.gmra.mrb[0].mxu0 %v2660
      %v2766 = vpop.f32.mrb[0].mxu0
      %v2767 = vadd.f32 %v2631, %v2766
      %v2768 = vpop.f32.mrb[0].mxu0
      %v2769 = vpop.f32.mrb[0].mxu0
      %v2770 = vadd.f32 %v2631, %v2769
      %v2771 = vpop.f32.mrb[0].mxu0
      %2772 = vmatprep.mubr.bf16.mxu0 0
      %2773 = vmatmul.mubr.bf16.gmra.mrb[0].mxu0 %v2663
      %v2774 = vpop.f32.mrb[0].mxu0
      %v2775 = vadd.f32 %v2631, %v2774
      %v2776 = vpop.f32.mrb[0].mxu0
      %v2777 = vpop.f32.mrb[0].mxu0
      %v2778 = vadd.f32 %v2631, %v2777
      %v2779 = vpop.f32.mrb[0].mxu0
      %2780 = vmatprep.mubr.bf16.mxu0 0
      %2781 = vmatmul.mubr.bf16.gmra.mrb[0].mxu0 %v2666
      %v2782 = vpop.f32.mrb[0].mxu0
      %v2783 = vadd.f32 %v2631, %v2782
      %v2784 = vpop.f32.mrb[0].mxu0
      %v2785 = vpop.f32.mrb[0].mxu0
      %v2786 = vadd.f32 %v2631, %v2785
      %v2787 = vpop.f32.mrb[0].mxu0
      %2788 = vmatprep.mubr.bf16.mxu0 0
      %2789 = vmatmul.mubr.bf16.gmra.mrb[0].mxu0 %v2669
      %v2790 = vpop.f32.mrb[0].mxu0
      %v2791 = vadd.f32 %v2631, %v2790
      %v2792 = vpop.f32.mrb[0].mxu0
      %v2793 = vpop.f32.mrb[0].mxu0
      %v2794 = vadd.f32 %v2631, %v2793
      %v2795 = vpop.f32.mrb[0].mxu0
      %2796 = vmatprep.mubr.bf16.mxu0 0
      %2797 = vmatmul.mubr.bf16.gmra.mrb[0].mxu0 %v2672
      %v2798 = vpop.f32.mrb[0].mxu0
      %v2799 = vadd.f32 %v2631, %v2798
      %v2800 = vpop.f32.mrb[0].mxu0
      %v2801 = vpop.f32.mrb[0].mxu0
      %v2802 = vadd.f32 %v2631, %v2801
      %v2803 = vpop.f32.mrb[0].mxu0
      %2804 = vmatprep.mubr.bf16.mxu0 0
      %2805 = vmatmul.mubr.bf16.gmra.mrb[0].mxu0 %v2675
      %v2806 = vpop.f32.mrb[0].mxu0
      %v2807 = vadd.f32 %v2631, %v2806
      %v2808 = vpop.f32.mrb[0].mxu0
      %v2809 = vpop.f32.mrb[0].mxu0
      %v2810 = vadd.f32 %v2631, %v2809
      %v2811 = vpop.f32.mrb[0].mxu0
      %2812 = vmatprep.mubr.bf16.mxu0 0
      %2813 = vmatmul.mubr.bf16.gmra.mrb[0].mxu0 %v2678
      %v2814 = vpop.f32.mrb[0].mxu0
      %v2815 = vadd.f32 %v2631, %v2814
      %v2816 = vpop.f32.mrb[0].mxu0
      %v2817 = vpop.f32.mrb[0].mxu0
      %v2818 = vadd.f32 %v2631, %v2817
      %v2819 = vpop.f32.mrb[0].mxu0
      %2820 = vmatprep.mubr.bf16.mxu0 0
      %2821 = vmatmul.mubr.bf16.gmra.mrb[0].mxu0 %v2681
      %v2822 = vpop.f32.mrb[0].mxu0
      %v2823 = vadd.f32 %v2631, %v2822
      %v2824 = vpop.f32.mrb[0].mxu0
      %v2825 = vpop.f32.mrb[0].mxu0
      %v2826 = vadd.f32 %v2631, %v2825
      %v2827 = vpop.f32.mrb[0].mxu0
      %2828 = vmatprep.mubr.bf16.mxu0 0
      %2829 = vmatmul.mubr.bf16.gmra.mrb[0].mxu0 %v2684
      %v2830 = vpop.f32.mrb[0].mxu0
      %v2831 = vadd.f32 %v2631, %v2830
      %v2832 = vpop.f32.mrb[0].mxu0
      %v2833 = vpop.f32.mrb[0].mxu0
      %v2834 = vadd.f32 %v2631, %v2833
      %v2835 = vpop.f32.mrb[0].mxu0
      %2836 = vmatprep.mubr.bf16.mxu0 0
      %2837 = vmatmul.mubr.bf16.gmra.mrb[0].mxu0 %v2687
      %v2838 = vpop.f32.mrb[0].mxu0
      %v2839 = vadd.f32 %v2631, %v2838
      %v2840 = vpop.f32.mrb[0].mxu0
      %v2841 = vpop.f32.mrb[0].mxu0
      %v2842 = vadd.f32 %v2631, %v2841
      %v2843 = vpop.f32.mrb[0].mxu0
      %2844 = vmatprep.mubr.bf16.mxu0 0
      %2845 = vmatmul.mubr.bf16.gmra.mrb[0].mxu0 %v2690
      %v2846 = vpop.f32.mrb[0].mxu0
      %v2847 = vadd.f32 %v2631, %v2846
      %v2848 = vpop.f32.mrb[0].mxu0
      %v2849 = vpop.f32.mrb[0].mxu0
      %v2850 = vadd.f32 %v2631, %v2849
      %v2851 = vpop.f32.mrb[0].mxu0
      %2852 = vdwg.mxu0
      %v2853 = vtanh.pop %v2727
      %v2854 = vtanh.pop %v2730
      %v2855 = vtanh.pop %v2735
      %v2856 = vtanh.pop %v2738
      %v2857 = vtanh.pop %v2743
      %v2858 = vtanh.pop %v2746
      %v2859 = vtanh.pop %v2751
      %v2860 = vtanh.pop %v2754
      %v2861 = vtanh.pop %v2759
      %v2862 = vtanh.pop %v2762
      %v2863 = vtanh.pop %v2767
      %v2864 = vtanh.pop %v2770
      %v2865 = vtanh.pop %v2775
      %v2866 = vtanh.pop %v2778
      %v2867 = vtanh.pop %v2783
      %v2868 = vtanh.pop %v2786
      %v2869 = vtanh.pop %v2791
      %v2870 = vtanh.pop %v2794
      %v2871 = vtanh.pop %v2799
      %v2872 = vtanh.pop %v2802
      %v2873 = vtanh.pop %v2807
      %v2874 = vtanh.pop %v2810
      %v2875 = vtanh.pop %v2815
      %v2876 = vtanh.pop %v2818
      %v2877 = vtanh.pop %v2823
      %v2878 = vtanh.pop %v2826
      %v2879 = vtanh.pop %v2831
      %v2880 = vtanh.pop %v2834
      %v2881 = vtanh.pop %v2839
      %v2882 = vtanh.pop %v2842
      %v2883 = vtanh.pop %v2847
      %v2884 = vtanh.pop %v2850
      %v2885 = vlaneseq
      %v2886 = vshrl.u32 %v2885, 7
      %v2887 = vsub.s32 0, %v2886
      %v2888 = vrot.slane %v2311, %v2887
      %v2893 = vunpack.c.l.b16 %v2306
      %v2894 = vunpack.c.l.b16 %v2307
      %v2895 = vunpack.c.l.b16 %v2308
      %v2896 = vunpack.c.l.b16 %v2309
      %v2897 = vpack.c.b16 %v2894, %v2893
      %v2898 = vpack.c.b16 %v2896, %v2895
      %2901 = vmatprep.subr.bf16.mxu0 0
      %2902 = vmatpush1.bf16.msra.mxu0 %v2897
      %2903 = vmatprep.subr.bf16.mxu0 0
      %2904 = vmatpush1.bf16.msra.mxu0 %v2898
      %2905 = vmatprep.subr.bf16.mxu0 0
      %2906 = vmatpush1.bf16.msra.mxu0 0
      %2907 = vmatprep.subr.bf16.mxu0 0
      %2908 = vmatpush1.bf16.msra.mxu0 0
      %2909 = vmatprep.subr.bf16.mxu0 0
      %2910 = vmatpush1.bf16.msra.mxu0 0
      %2911 = vmatprep.subr.bf16.mxu0 0
      %2912 = vmatpush1.bf16.msra.mxu0 0
      %2913 = vmatprep.subr.bf16.mxu0 0
      %2914 = vmatpush1.bf16.msra.mxu0 0
      %2915 = vmatprep.subr.bf16.mxu0 0
      %2916 = vmatpush1.bf16.msra.mxu0 0
      %2917 = vmatprep.subr.bf16.mxu0 0
      %2918 = vmatpush1.bf16.msra.mxu0 0
      %2919 = vmatprep.subr.bf16.mxu0 0
      %2920 = vmatpush1.bf16.msra.mxu0 0
      %2921 = vmatprep.subr.bf16.mxu0 0
      %2922 = vmatpush1.bf16.msra.mxu0 0
      %2923 = vmatprep.subr.bf16.mxu0 0
      %2924 = vmatpush1.bf16.msra.mxu0 0
      %2925 = vmatprep.subr.bf16.mxu0 0
      %2926 = vmatpush1.bf16.msra.mxu0 0
      %2927 = vmatprep.subr.bf16.mxu0 0
      %2928 = vmatpush1.bf16.msra.mxu0 0
      %2929 = vmatprep.subr.bf16.mxu0 0
      %2930 = vmatpush1.bf16.msra.mxu0 0
      %2931 = vmatprep.subr.bf16.mxu0 0
      %2932 = vmatpush1.bf16.msra.mxu0 0
      %2933 = vmatprep.mubr.bf16.mxu0 0
      %2934 = vmatmul.mubr.bf16.gmra.mrb[0].mxu0 %v2645
      %v2935 = vpop.f32.mrb[0].mxu0
      %v2936 = vadd.f32 %v2888, %v2935
      %v2937 = vpop.f32.mrb[0].mxu0
      %v2938 = vpop.f32.mrb[0].mxu0
      %v2939 = vadd.f32 %v2888, %v2938
      %v2940 = vpop.f32.mrb[0].mxu0
      %2941 = vmatprep.mubr.bf16.mxu0 0
      %2942 = vmatmul.mubr.bf16.gmra.mrb[0].mxu0 %v2648
      %v2943 = vpop.f32.mrb[0].mxu0
      %v2944 = vadd.f32 %v2888, %v2943
      %v2945 = vpop.f32.mrb[0].mxu0
      %v2946 = vpop.f32.mrb[0].mxu0
      %v2947 = vadd.f32 %v2888, %v2946
      %v2948 = vpop.f32.mrb[0].mxu0
      %2949 = vmatprep.mubr.bf16.mxu0 0
      %2950 = vmatmul.mubr.bf16.gmra.mrb[0].mxu0 %v2651
      %v2951 = vpop.f32.mrb[0].mxu0
      %v2952 = vadd.f32 %v2888, %v2951
      %v2953 = vpop.f32.mrb[0].mxu0
      %v2954 = vpop.f32.mrb[0].mxu0
      %v2955 = vadd.f32 %v2888, %v2954
      %v2956 = vpop.f32.mrb[0].mxu0
      %2957 = vmatprep.mubr.bf16.mxu0 0
      %2958 = vmatmul.mubr.bf16.gmra.mrb[0].mxu0 %v2654
      %v2959 = vpop.f32.mrb[0].mxu0
      %v2960 = vadd.f32 %v2888, %v2959
      %v2961 = vpop.f32.mrb[0].mxu0
      %v2962 = vpop.f32.mrb[0].mxu0
      %v2963 = vadd.f32 %v2888, %v2962
      %v2964 = vpop.f32.mrb[0].mxu0
      %2965 = vmatprep.mubr.bf16.mxu0 0
      %2966 = vmatmul.mubr.bf16.gmra.mrb[0].mxu0 %v2657
      %v2967 = vpop.f32.mrb[0].mxu0
      %v2968 = vadd.f32 %v2888, %v2967
      %v2969 = vpop.f32.mrb[0].mxu0
      %v2970 = vpop.f32.mrb[0].mxu0
      %v2971 = vadd.f32 %v2888, %v2970
      %v2972 = vpop.f32.mrb[0].mxu0
      %2973 = vmatprep.mubr.bf16.mxu0 0
      %2974 = vmatmul.mubr.bf16.gmra.mrb[0].mxu0 %v2660
      %v2975 = vpop.f32.mrb[0].mxu0
      %v2976 = vadd.f32 %v2888, %v2975
      %v2977 = vpop.f32.mrb[0].mxu0
      %v2978 = vpop.f32.mrb[0].mxu0
      %v2979 = vadd.f32 %v2888, %v2978
      %v2980 = vpop.f32.mrb[0].mxu0
      %2981 = vmatprep.mubr.bf16.mxu0 0
      %2982 = vmatmul.mubr.bf16.gmra.mrb[0].mxu0 %v2663
      %v2983 = vpop.f32.mrb[0].mxu0
      %v2984 = vadd.f32 %v2888, %v2983
      %v2985 = vpop.f32.mrb[0].mxu0
      %v2986 = vpop.f32.mrb[0].mxu0
      %v2987 = vadd.f32 %v2888, %v2986
      %v2988 = vpop.f32.mrb[0].mxu0
      %2989 = vmatprep.mubr.bf16.mxu0 0
      %2990 = vmatmul.mubr.bf16.gmra.mrb[0].mxu0 %v2666
      %v2991 = vpop.f32.mrb[0].mxu0
      %v2992 = vadd.f32 %v2888, %v2991
      %v2993 = vpop.f32.mrb[0].mxu0
      %v2994 = vpop.f32.mrb[0].mxu0
      %v2995 = vadd.f32 %v2888, %v2994
      %v2996 = vpop.f32.mrb[0].mxu0
      %2997 = vmatprep.mubr.bf16.mxu0 0
      %2998 = vmatmul.mubr.bf16.gmra.mrb[0].mxu0 %v2669
      %v2999 = vpop.f32.mrb[0].mxu0
      %v3000 = vadd.f32 %v2888, %v2999
      %v3001 = vpop.f32.mrb[0].mxu0
      %v3002 = vpop.f32.mrb[0].mxu0
      %v3003 = vadd.f32 %v2888, %v3002
      %v3004 = vpop.f32.mrb[0].mxu0
      %3005 = vmatprep.mubr.bf16.mxu0 0
      %3006 = vmatmul.mubr.bf16.gmra.mrb[0].mxu0 %v2672
      %v3007 = vpop.f32.mrb[0].mxu0
      %v3008 = vadd.f32 %v2888, %v3007
      %v3009 = vpop.f32.mrb[0].mxu0
      %v3010 = vpop.f32.mrb[0].mxu0
      %v3011 = vadd.f32 %v2888, %v3010
      %v3012 = vpop.f32.mrb[0].mxu0
      %3013 = vmatprep.mubr.bf16.mxu0 0
      %3014 = vmatmul.mubr.bf16.gmra.mrb[0].mxu0 %v2675
      %v3015 = vpop.f32.mrb[0].mxu0
      %v3016 = vadd.f32 %v2888, %v3015
      %v3017 = vpop.f32.mrb[0].mxu0
      %v3018 = vpop.f32.mrb[0].mxu0
      %v3019 = vadd.f32 %v2888, %v3018
      %v3020 = vpop.f32.mrb[0].mxu0
      %3021 = vmatprep.mubr.bf16.mxu0 0
      %3022 = vmatmul.mubr.bf16.gmra.mrb[0].mxu0 %v2678
      %v3023 = vpop.f32.mrb[0].mxu0
      %v3024 = vadd.f32 %v2888, %v3023
      %v3025 = vpop.f32.mrb[0].mxu0
      %v3026 = vpop.f32.mrb[0].mxu0
      %v3027 = vadd.f32 %v2888, %v3026
      %v3028 = vpop.f32.mrb[0].mxu0
      %3029 = vmatprep.mubr.bf16.mxu0 0
      %3030 = vmatmul.mubr.bf16.gmra.mrb[0].mxu0 %v2681
      %v3031 = vpop.f32.mrb[0].mxu0
      %v3032 = vadd.f32 %v2888, %v3031
      %v3033 = vpop.f32.mrb[0].mxu0
      %v3034 = vpop.f32.mrb[0].mxu0
      %v3035 = vadd.f32 %v2888, %v3034
      %v3036 = vpop.f32.mrb[0].mxu0
      %3037 = vmatprep.mubr.bf16.mxu0 0
      %3038 = vmatmul.mubr.bf16.gmra.mrb[0].mxu0 %v2684
      %v3039 = vpop.f32.mrb[0].mxu0
      %v3040 = vadd.f32 %v2888, %v3039
      %v3041 = vpop.f32.mrb[0].mxu0
      %v3042 = vpop.f32.mrb[0].mxu0
      %v3043 = vadd.f32 %v2888, %v3042
      %v3044 = vpop.f32.mrb[0].mxu0
      %3045 = vmatprep.mubr.bf16.mxu0 0
      %3046 = vmatmul.mubr.bf16.gmra.mrb[0].mxu0 %v2687
      %v3047 = vpop.f32.mrb[0].mxu0
      %v3048 = vadd.f32 %v2888, %v3047
      %v3049 = vpop.f32.mrb[0].mxu0
      %v3050 = vpop.f32.mrb[0].mxu0
      %v3051 = vadd.f32 %v2888, %v3050
      %v3052 = vpop.f32.mrb[0].mxu0
      %3053 = vmatprep.mubr.bf16.mxu0 0
      %3054 = vmatmul.mubr.bf16.gmra.mrb[0].mxu0 %v2690
      %v3055 = vpop.f32.mrb[0].mxu0
      %v3056 = vadd.f32 %v2888, %v3055
      %v3057 = vpop.f32.mrb[0].mxu0
      %v3058 = vpop.f32.mrb[0].mxu0
      %v3059 = vadd.f32 %v2888, %v3058
      %v3060 = vpop.f32.mrb[0].mxu0
      %3061 = vdwg.mxu0
      %v3062 = vmul.f32 %v2853, 1.442695
      %v3063 = vpow.pop %v3062
      %v3064 = vmul.f32 %v2854, 1.442695
      %v3065 = vpow.pop %v3064
      %v3066 = vmul.f32 %v2855, 1.442695
      %v3067 = vpow.pop %v3066
      %v3068 = vmul.f32 %v2856, 1.442695
      %v3069 = vpow.pop %v3068
      %v3070 = vmul.f32 %v2857, 1.442695
      %v3071 = vpow.pop %v3070
      %v3072 = vmul.f32 %v2858, 1.442695
      %v3073 = vpow.pop %v3072
      %v3074 = vmul.f32 %v2859, 1.442695
      %v3075 = vpow.pop %v3074
      %v3076 = vmul.f32 %v2860, 1.442695
      %v3077 = vpow.pop %v3076
      %v3078 = vmul.f32 %v2861, 1.442695
      %v3079 = vpow.pop %v3078
      %v3080 = vmul.f32 %v2862, 1.442695
      %v3081 = vpow.pop %v3080
      %v3082 = vmul.f32 %v2863, 1.442695
      %v3083 = vpow.pop %v3082
      %v3084 = vmul.f32 %v2864, 1.442695
      %v3085 = vpow.pop %v3084
      %v3086 = vmul.f32 %v2865, 1.442695
      %v3087 = vpow.pop %v3086
      %v3088 = vmul.f32 %v2866, 1.442695
      %v3089 = vpow.pop %v3088
      %v3090 = vmul.f32 %v2867, 1.442695
      %v3091 = vpow.pop %v3090
      %v3092 = vmul.f32 %v2868, 1.442695
      %v3093 = vpow.pop %v3092
      %v3094 = vmul.f32 %v2869, 1.442695
      %v3095 = vpow.pop %v3094
      %v3096 = vmul.f32 %v2870, 1.442695
      %v3097 = vpow.pop %v3096
      %v3098 = vmul.f32 %v2871, 1.442695
      %v3099 = vpow.pop %v3098
      %v3100 = vmul.f32 %v2872, 1.442695
      %v3101 = vpow.pop %v3100
      %v3102 = vmul.f32 %v2873, 1.442695
      %v3103 = vpow.pop %v3102
      %v3104 = vmul.f32 %v2874, 1.442695
      %v3105 = vpow.pop %v3104
      %v3106 = vmul.f32 %v2875, 1.442695
      %v3107 = vpow.pop %v3106
      %v3108 = vmul.f32 %v2876, 1.442695
      %v3109 = vpow.pop %v3108
      %v3110 = vmul.f32 %v2877, 1.442695
      %v3111 = vpow.pop %v3110
      %v3112 = vmul.f32 %v2878, 1.442695
      %v3113 = vpow.pop %v3112
      %v3114 = vmul.f32 %v2879, 1.442695
      %v3115 = vpow.pop %v3114
      %v3116 = vmul.f32 %v2880, 1.442695
      %v3117 = vpow.pop %v3116
      %v3118 = vmul.f32 %v2881, 1.442695
      %v3119 = vpow.pop %v3118
      %v3120 = vmul.f32 %v2882, 1.442695
      %v3121 = vpow.pop %v3120
      %v3122 = vmul.f32 %v2883, 1.442695
      %v3123 = vpow.pop %v3122
      %v3124 = vmul.f32 %v2884, 1.442695
      %v3125 = vpow.pop %v3124
      %v3126 = vmul.f32 %v2263, %v3063
      %v3127 = vmul.f32 %v2264, %v3065
      %v3128 = vmul.f32 %v2265, %v3067
      %v3129 = vmul.f32 %v2266, %v3069
      %v3130 = vmul.f32 %v2267, %v3071
      %v3131 = vmul.f32 %v2268, %v3073
      %v3132 = vmul.f32 %v2269, %v3075
      %v3133 = vmul.f32 %v2270, %v3077
      %v3134 = vmul.f32 %v2271, %v3079
      %v3135 = vmul.f32 %v2272, %v3081
      %v3136 = vmul.f32 %v2273, %v3083
      %v3137 = vmul.f32 %v2274, %v3085
      %v3138 = vmul.f32 %v2275, %v3087
      %v3139 = vmul.f32 %v2276, %v3089
      %v3140 = vmul.f32 %v2277, %v3091
      %v3141 = vmul.f32 %v2278, %v3093
      %v3142 = vmul.f32 %v2279, %v3095
      %v3143 = vmul.f32 %v2280, %v3097
      %v3144 = vmul.f32 %v2281, %v3099
      %v3145 = vmul.f32 %v2282, %v3101
      %v3146 = vmul.f32 %v2283, %v3103
      %v3147 = vmul.f32 %v2284, %v3105
      %v3148 = vmul.f32 %v2285, %v3107
      %v3149 = vmul.f32 %v2286, %v3109
      %v3150 = vmul.f32 %v2287, %v3111
      %v3151 = vmul.f32 %v2288, %v3113
      %v3152 = vmul.f32 %v2289, %v3115
      %v3153 = vmul.f32 %v2290, %v3117
      %v3154 = vmul.f32 %v2291, %v3119
      %v3155 = vmul.f32 %v2292, %v3121
      %v3156 = vmul.f32 %v2293, %v3123
      %v3157 = vmul.f32 %v2294, %v3125
      %v3158 = vadd.f32 %v3126, %v2936
      %v3159 = vadd.f32 %v3127, %v2939
      %v3160 = vadd.f32 %v3128, %v2944
      %v3161 = vadd.f32 %v3129, %v2947
      %v3162 = vadd.f32 %v3130, %v2952
      %v3163 = vadd.f32 %v3131, %v2955
      %v3164 = vadd.f32 %v3132, %v2960
      %v3165 = vadd.f32 %v3133, %v2963
      %v3166 = vadd.f32 %v3134, %v2968
      %v3167 = vadd.f32 %v3135, %v2971
      %v3168 = vadd.f32 %v3136, %v2976
      %v3169 = vadd.f32 %v3137, %v2979
      %v3170 = vadd.f32 %v3138, %v2984
      %v3171 = vadd.f32 %v3139, %v2987
      %v3172 = vadd.f32 %v3140, %v2992
      %v3173 = vadd.f32 %v3141, %v2995
      %v3174 = vadd.f32 %v3142, %v3000
      %v3175 = vadd.f32 %v3143, %v3003
      %v3176 = vadd.f32 %v3144, %v3008
      %v3177 = vadd.f32 %v3145, %v3011
      %v3178 = vadd.f32 %v3146, %v3016
      %v3179 = vadd.f32 %v3147, %v3019
      %v3180 = vadd.f32 %v3148, %v3024
      %v3181 = vadd.f32 %v3149, %v3027
      %v3182 = vadd.f32 %v3150, %v3032
      %v3183 = vadd.f32 %v3151, %v3035
      %v3184 = vadd.f32 %v3152, %v3040
      %v3185 = vadd.f32 %v3153, %v3043
      %v3186 = vadd.f32 %v3154, %v3048
      %v3187 = vadd.f32 %v3155, %v3051
      %v3188 = vadd.f32 %v3156, %v3056
      %v3189 = vadd.f32 %v3157, %v3059
      %v3190 = vlaneseq
      %v3191 = vshrl.u32 %v3190, 7
      %v3192 = vsub.s32 0, %v3191
      %v3193 = vrot.slane %v2296, %v3192
      %v3194 = vmul.f32 %v3193, %v3158
      %v3195 = vmul.f32 %v3193, %v3159
      %v3196 = vmul.f32 %v3193, %v3160
      %v3197 = vmul.f32 %v3193, %v3161
      %v3198 = vmul.f32 %v3193, %v3162
      %v3199 = vmul.f32 %v3193, %v3163
      %v3200 = vmul.f32 %v3193, %v3164
      %v3201 = vmul.f32 %v3193, %v3165
      %v3202 = vmul.f32 %v3193, %v3166
      %v3203 = vmul.f32 %v3193, %v3167
      %v3204 = vmul.f32 %v3193, %v3168
      %v3205 = vmul.f32 %v3193, %v3169
      %v3206 = vmul.f32 %v3193, %v3170
      %v3207 = vmul.f32 %v3193, %v3171
      %v3208 = vmul.f32 %v3193, %v3172
      %v3209 = vmul.f32 %v3193, %v3173
      %v3210 = vmul.f32 %v3193, %v3174
      %v3211 = vmul.f32 %v3193, %v3175
      %v3212 = vmul.f32 %v3193, %v3176
      %v3213 = vmul.f32 %v3193, %v3177
      %v3214 = vmul.f32 %v3193, %v3178
      %v3215 = vmul.f32 %v3193, %v3179
      %v3216 = vmul.f32 %v3193, %v3180
      %v3217 = vmul.f32 %v3193, %v3181
      %v3218 = vmul.f32 %v3193, %v3182
      %v3219 = vmul.f32 %v3193, %v3183
      %v3220 = vmul.f32 %v3193, %v3184
      %v3221 = vmul.f32 %v3193, %v3185
      %v3222 = vmul.f32 %v3193, %v3186
      %v3223 = vmul.f32 %v3193, %v3187
      %v3224 = vmul.f32 %v3193, %v3188
      %v3225 = vmul.f32 %v3193, %v3189
      %v3226 = vadd.f32 %v2316, %v3194
      %v3227 = vadd.f32 %v2317, %v3195
      %v3228 = vadd.f32 %v2318, %v3196
      %v3229 = vadd.f32 %v2319, %v3197
      %v3230 = vadd.f32 %v2320, %v3198
      %v3231 = vadd.f32 %v2321, %v3199
      %v3232 = vadd.f32 %v2322, %v3200
      %v3233 = vadd.f32 %v2323, %v3201
      %v3234 = vadd.f32 %v2324, %v3202
      %v3235 = vadd.f32 %v2325, %v3203
      %v3236 = vadd.f32 %v2326, %v3204
      %v3237 = vadd.f32 %v2327, %v3205
      %v3238 = vadd.f32 %v2328, %v3206
      %v3239 = vadd.f32 %v2329, %v3207
      %v3240 = vadd.f32 %v2330, %v3208
      %v3241 = vadd.f32 %v2331, %v3209
      %v3242 = vadd.f32 %v2332, %v3210
      %v3243 = vadd.f32 %v2333, %v3211
      %v3244 = vadd.f32 %v2334, %v3212
      %v3245 = vadd.f32 %v2335, %v3213
      %v3246 = vadd.f32 %v2336, %v3214
      %v3247 = vadd.f32 %v2337, %v3215
      %v3248 = vadd.f32 %v2338, %v3216
      %v3249 = vadd.f32 %v2339, %v3217
      %v3250 = vadd.f32 %v2340, %v3218
      %v3251 = vadd.f32 %v2341, %v3219
      %v3252 = vadd.f32 %v2342, %v3220
      %v3253 = vadd.f32 %v2343, %v3221
      %v3254 = vadd.f32 %v2344, %v3222
      %v3255 = vadd.f32 %v2345, %v3223
      %v3256 = vadd.f32 %v2346, %v3224
      %v3257 = vadd.f32 %v2347, %v3225
      %v3258 = vld [vmem:[%s1 + $0x3] sm:$0x1]
      %v3259 = vld [vmem:[%s2 + $0x3] sm:$0x1]
      %s3260 = scalar_lea.vmem %s3, 12
      %v3261 = vld [vmem:[%s3260] sm:$0xf]
      %v3262 = vld [vmem:[%s4 + $0x3] sm:$0x1]
      %s3263 = scalar_lea.vmem %s5, 48
      %v3264 = vld [vmem:[%s3263] sm:$0xf]
      %v3265 = vld [vmem:[%s3263 + $0x4] sm:$0xf]
      %v3266 = vld [vmem:[%s3263 + $0x8] sm:$0xf]
      %v3267 = vld [vmem:[%s3263 + $0xc] sm:$0xf]
      %s3268 = scalar_lea.vmem %s6, 48
      %v3269 = vld [vmem:[%s3268] sm:$0xf]
      %v3270 = vld [vmem:[%s3268 + $0x4] sm:$0xf]
      %v3271 = vld [vmem:[%s3268 + $0x8] sm:$0xf]
      %v3272 = vld [vmem:[%s3268 + $0xc] sm:$0xf]
      %v3273 = vld [vmem:[%s7 + $0x3] sm:$0x1]
      %v3274 = vld [vmem:[%s8 + $0x3] sm:$0x1]
      %v3275 = vlaneseq
      %v3276 = vshrl.u32 %v3275, 7
      %v3277 = vsub.s32 0, %v3276
      %v3278 = vrot.slane %v3258, %v3277
      %v3279 = vmul.f32 %v3226, %v3278
      %v3280 = vmul.f32 %v3227, %v3278
      %v3281 = vmul.f32 %v3228, %v3278
      %v3282 = vmul.f32 %v3229, %v3278
      %v3283 = vmul.f32 %v3230, %v3278
      %v3284 = vmul.f32 %v3231, %v3278
      %v3285 = vmul.f32 %v3232, %v3278
      %v3286 = vmul.f32 %v3233, %v3278
      %v3287 = vmul.f32 %v3234, %v3278
      %v3288 = vmul.f32 %v3235, %v3278
      %v3289 = vmul.f32 %v3236, %v3278
      %v3290 = vmul.f32 %v3237, %v3278
      %v3291 = vmul.f32 %v3238, %v3278
      %v3292 = vmul.f32 %v3239, %v3278
      %v3293 = vmul.f32 %v3240, %v3278
      %v3294 = vmul.f32 %v3241, %v3278
      %v3295 = vmul.f32 %v3242, %v3278
      %v3296 = vmul.f32 %v3243, %v3278
      %v3297 = vmul.f32 %v3244, %v3278
      %v3298 = vmul.f32 %v3245, %v3278
      %v3299 = vmul.f32 %v3246, %v3278
      %v3300 = vmul.f32 %v3247, %v3278
      %v3301 = vmul.f32 %v3248, %v3278
      %v3302 = vmul.f32 %v3249, %v3278
      %v3303 = vmul.f32 %v3250, %v3278
      %v3304 = vmul.f32 %v3251, %v3278
      %v3305 = vmul.f32 %v3252, %v3278
      %v3306 = vmul.f32 %v3253, %v3278
      %v3307 = vmul.f32 %v3254, %v3278
      %v3308 = vmul.f32 %v3255, %v3278
      %v3309 = vmul.f32 %v3256, %v3278
      %v3310 = vmul.f32 %v3257, %v3278
      %v3311 = vpack.c.bf16 %v3280, %v3279
      %v3312 = vpack.c.bf16 %v3282, %v3281
      %v3313 = vpack.c.bf16 %v3284, %v3283
      %v3314 = vpack.c.bf16 %v3286, %v3285
      %v3315 = vpack.c.bf16 %v3288, %v3287
      %v3316 = vpack.c.bf16 %v3290, %v3289
      %v3317 = vpack.c.bf16 %v3292, %v3291
      %v3318 = vpack.c.bf16 %v3294, %v3293
      %v3319 = vpack.c.bf16 %v3296, %v3295
      %v3320 = vpack.c.bf16 %v3298, %v3297
      %v3321 = vpack.c.bf16 %v3300, %v3299
      %v3322 = vpack.c.bf16 %v3302, %v3301
      %v3323 = vpack.c.bf16 %v3304, %v3303
      %v3324 = vpack.c.bf16 %v3306, %v3305
      %v3325 = vpack.c.bf16 %v3308, %v3307
      %v3326 = vpack.c.bf16 %v3310, %v3309
      %v3327 = vlaneseq
      %v3328 = vshrl.u32 %v3327, 7
      %v3329 = vsub.s32 0, %v3328
      %v3330 = vrot.slane %v3262, %v3329
      %v3332 = vsel %vm439, %v3311, 0
      %v3335 = vsel %vm439, %v3312, 0
      %v3338 = vsel %vm439, %v3313, 0
      %v3341 = vsel %vm439, %v3314, 0
      %v3344 = vsel %vm439, %v3315, 0
      %v3347 = vsel %vm439, %v3316, 0
      %v3350 = vsel %vm439, %v3317, 0
      %v3353 = vsel %vm439, %v3318, 0
      %v3356 = vsel %vm439, %v3319, 0
      %v3359 = vsel %vm439, %v3320, 0
      %v3362 = vsel %vm439, %v3321, 0
      %v3365 = vsel %vm439, %v3322, 0
      %v3368 = vsel %vm439, %v3323, 0
      %v3371 = vsel %vm439, %v3324, 0
      %v3374 = vsel %vm439, %v3325, 0
      %v3377 = vsel %vm439, %v3326, 0
      %v3380 = vsel %vm488, %v3261, 0
      %3382 = vmatprep.subr.bf16.mxu0 0
      %3383 = vmatpush1.bf16.msra.mxu0 %v3380
      %3384 = vmatprep.subr.bf16.mxu0 0
      %3385 = vmatpush1.bf16.msra.mxu0 0
      %3386 = vmatprep.subr.bf16.mxu0 0
      %3387 = vmatpush1.bf16.msra.mxu0 0
      %3388 = vmatprep.subr.bf16.mxu0 0
      %3389 = vmatpush1.bf16.msra.mxu0 0
      %3390 = vmatprep.subr.bf16.mxu0 0
      %3391 = vmatpush1.bf16.msra.mxu0 0
      %3392 = vmatprep.subr.bf16.mxu0 0
      %3393 = vmatpush1.bf16.msra.mxu0 0
      %3394 = vmatprep.subr.bf16.mxu0 0
      %3395 = vmatpush1.bf16.msra.mxu0 0
      %3396 = vmatprep.subr.bf16.mxu0 0
      %3397 = vmatpush1.bf16.msra.mxu0 0
      %3398 = vmatprep.subr.bf16.mxu0 0
      %3399 = vmatpush1.bf16.msra.mxu0 0
      %3400 = vmatprep.subr.bf16.mxu0 0
      %3401 = vmatpush1.bf16.msra.mxu0 0
      %3402 = vmatprep.subr.bf16.mxu0 0
      %3403 = vmatpush1.bf16.msra.mxu0 0
      %3404 = vmatprep.subr.bf16.mxu0 0
      %3405 = vmatpush1.bf16.msra.mxu0 0
      %3406 = vmatprep.subr.bf16.mxu0 0
      %3407 = vmatpush1.bf16.msra.mxu0 0
      %3408 = vmatprep.subr.bf16.mxu0 0
      %3409 = vmatpush1.bf16.msra.mxu0 0
      %3410 = vmatprep.subr.bf16.mxu0 0
      %3411 = vmatpush1.bf16.msra.mxu0 0
      %3412 = vmatprep.subr.bf16.mxu0 0
      %3413 = vmatpush1.bf16.msra.mxu0 0
      %3414 = vmatprep.mubr.bf16.mxu0 0
      %3415 = vmatmul.mubr.bf16.gmra.mrb[0].mxu0 %v3332
      %v3416 = vpop.f32.mrb[0].mxu0
      %v3417 = vadd.f32 %v3330, %v3416
      %v3418 = vpop.f32.mrb[0].mxu0
      %v3419 = vpop.f32.mrb[0].mxu0
      %v3420 = vadd.f32 %v3330, %v3419
      %v3421 = vpop.f32.mrb[0].mxu0
      %3422 = vmatprep.mubr.bf16.mxu0 0
      %3423 = vmatmul.mubr.bf16.gmra.mrb[0].mxu0 %v3335
      %v3424 = vpop.f32.mrb[0].mxu0
      %v3425 = vadd.f32 %v3330, %v3424
      %v3426 = vpop.f32.mrb[0].mxu0
      %v3427 = vpop.f32.mrb[0].mxu0
      %v3428 = vadd.f32 %v3330, %v3427
      %v3429 = vpop.f32.mrb[0].mxu0
      %3430 = vmatprep.mubr.bf16.mxu0 0
      %3431 = vmatmul.mubr.bf16.gmra.mrb[0].mxu0 %v3338
      %v3432 = vpop.f32.mrb[0].mxu0
      %v3433 = vadd.f32 %v3330, %v3432
      %v3434 = vpop.f32.mrb[0].mxu0
      %v3435 = vpop.f32.mrb[0].mxu0
      %v3436 = vadd.f32 %v3330, %v3435
      %v3437 = vpop.f32.mrb[0].mxu0
      %3438 = vmatprep.mubr.bf16.mxu0 0
      %3439 = vmatmul.mubr.bf16.gmra.mrb[0].mxu0 %v3341
      %v3440 = vpop.f32.mrb[0].mxu0
      %v3441 = vadd.f32 %v3330, %v3440
      %v3442 = vpop.f32.mrb[0].mxu0
      %v3443 = vpop.f32.mrb[0].mxu0
      %v3444 = vadd.f32 %v3330, %v3443
      %v3445 = vpop.f32.mrb[0].mxu0
      %3446 = vmatprep.mubr.bf16.mxu0 0
      %3447 = vmatmul.mubr.bf16.gmra.mrb[0].mxu0 %v3344
      %v3448 = vpop.f32.mrb[0].mxu0
      %v3449 = vadd.f32 %v3330, %v3448
      %v3450 = vpop.f32.mrb[0].mxu0
      %v3451 = vpop.f32.mrb[0].mxu0
      %v3452 = vadd.f32 %v3330, %v3451
      %v3453 = vpop.f32.mrb[0].mxu0
      %3454 = vmatprep.mubr.bf16.mxu0 0
      %3455 = vmatmul.mubr.bf16.gmra.mrb[0].mxu0 %v3347
      %v3456 = vpop.f32.mrb[0].mxu0
      %v3457 = vadd.f32 %v3330, %v3456
      %v3458 = vpop.f32.mrb[0].mxu0
      %v3459 = vpop.f32.mrb[0].mxu0
      %v3460 = vadd.f32 %v3330, %v3459
      %v3461 = vpop.f32.mrb[0].mxu0
      %3462 = vmatprep.mubr.bf16.mxu0 0
      %3463 = vmatmul.mubr.bf16.gmra.mrb[0].mxu0 %v3350
      %v3464 = vpop.f32.mrb[0].mxu0
      %v3465 = vadd.f32 %v3330, %v3464
      %v3466 = vpop.f32.mrb[0].mxu0
      %v3467 = vpop.f32.mrb[0].mxu0
      %v3468 = vadd.f32 %v3330, %v3467
      %v3469 = vpop.f32.mrb[0].mxu0
      %3470 = vmatprep.mubr.bf16.mxu0 0
      %3471 = vmatmul.mubr.bf16.gmra.mrb[0].mxu0 %v3353
      %v3472 = vpop.f32.mrb[0].mxu0
      %v3473 = vadd.f32 %v3330, %v3472
      %v3474 = vpop.f32.mrb[0].mxu0
      %v3475 = vpop.f32.mrb[0].mxu0
      %v3476 = vadd.f32 %v3330, %v3475
      %v3477 = vpop.f32.mrb[0].mxu0
      %3478 = vmatprep.mubr.bf16.mxu0 0
      %3479 = vmatmul.mubr.bf16.gmra.mrb[0].mxu0 %v3356
      %v3480 = vpop.f32.mrb[0].mxu0
      %v3481 = vadd.f32 %v3330, %v3480
      %v3482 = vpop.f32.mrb[0].mxu0
      %v3483 = vpop.f32.mrb[0].mxu0
      %v3484 = vadd.f32 %v3330, %v3483
      %v3485 = vpop.f32.mrb[0].mxu0
      %3486 = vmatprep.mubr.bf16.mxu0 0
      %3487 = vmatmul.mubr.bf16.gmra.mrb[0].mxu0 %v3359
      %v3488 = vpop.f32.mrb[0].mxu0
      %v3489 = vadd.f32 %v3330, %v3488
      %v3490 = vpop.f32.mrb[0].mxu0
      %v3491 = vpop.f32.mrb[0].mxu0
      %v3492 = vadd.f32 %v3330, %v3491
      %v3493 = vpop.f32.mrb[0].mxu0
      %3494 = vmatprep.mubr.bf16.mxu0 0
      %3495 = vmatmul.mubr.bf16.gmra.mrb[0].mxu0 %v3362
      %v3496 = vpop.f32.mrb[0].mxu0
      %v3497 = vadd.f32 %v3330, %v3496
      %v3498 = vpop.f32.mrb[0].mxu0
      %v3499 = vpop.f32.mrb[0].mxu0
      %v3500 = vadd.f32 %v3330, %v3499
      %v3501 = vpop.f32.mrb[0].mxu0
      %3502 = vmatprep.mubr.bf16.mxu0 0
      %3503 = vmatmul.mubr.bf16.gmra.mrb[0].mxu0 %v3365
      %v3504 = vpop.f32.mrb[0].mxu0
      %v3505 = vadd.f32 %v3330, %v3504
      %v3506 = vpop.f32.mrb[0].mxu0
      %v3507 = vpop.f32.mrb[0].mxu0
      %v3508 = vadd.f32 %v3330, %v3507
      %v3509 = vpop.f32.mrb[0].mxu0
      %3510 = vmatprep.mubr.bf16.mxu0 0
      %3511 = vmatmul.mubr.bf16.gmra.mrb[0].mxu0 %v3368
      %v3512 = vpop.f32.mrb[0].mxu0
      %v3513 = vadd.f32 %v3330, %v3512
      %v3514 = vpop.f32.mrb[0].mxu0
      %v3515 = vpop.f32.mrb[0].mxu0
      %v3516 = vadd.f32 %v3330, %v3515
      %v3517 = vpop.f32.mrb[0].mxu0
      %3518 = vmatprep.mubr.bf16.mxu0 0
      %3519 = vmatmul.mubr.bf16.gmra.mrb[0].mxu0 %v3371
      %v3520 = vpop.f32.mrb[0].mxu0
      %v3521 = vadd.f32 %v3330, %v3520
      %v3522 = vpop.f32.mrb[0].mxu0
      %v3523 = vpop.f32.mrb[0].mxu0
      %v3524 = vadd.f32 %v3330, %v3523
      %v3525 = vpop.f32.mrb[0].mxu0
      %3526 = vmatprep.mubr.bf16.mxu0 0
      %3527 = vmatmul.mubr.bf16.gmra.mrb[0].mxu0 %v3374
      %v3528 = vpop.f32.mrb[0].mxu0
      %v3529 = vadd.f32 %v3330, %v3528
      %v3530 = vpop.f32.mrb[0].mxu0
      %v3531 = vpop.f32.mrb[0].mxu0
      %v3532 = vadd.f32 %v3330, %v3531
      %v3533 = vpop.f32.mrb[0].mxu0
      %3534 = vmatprep.mubr.bf16.mxu0 0
      %3535 = vmatmul.mubr.bf16.gmra.mrb[0].mxu0 %v3377
      %v3536 = vpop.f32.mrb[0].mxu0
      %v3537 = vadd.f32 %v3330, %v3536
      %v3538 = vpop.f32.mrb[0].mxu0
      %v3539 = vpop.f32.mrb[0].mxu0
      %v3540 = vadd.f32 %v3330, %v3539
      %v3541 = vpop.f32.mrb[0].mxu0
      %3542 = vdwg.mxu0
      %v3543 = vmax.f32 %v3417, 0.0
      %v3544 = vmax.f32 %v3420, 0.0
      %v3545 = vmax.f32 %v3425, 0.0
      %v3546 = vmax.f32 %v3428, 0.0
      %v3547 = vmax.f32 %v3433, 0.0
      %v3548 = vmax.f32 %v3436, 0.0
      %v3549 = vmax.f32 %v3441, 0.0
      %v3550 = vmax.f32 %v3444, 0.0
      %v3551 = vmax.f32 %v3449, 0.0
      %v3552 = vmax.f32 %v3452, 0.0
      %v3553 = vmax.f32 %v3457, 0.0
      %v3554 = vmax.f32 %v3460, 0.0
      %v3555 = vmax.f32 %v3465, 0.0
      %v3556 = vmax.f32 %v3468, 0.0
      %v3557 = vmax.f32 %v3473, 0.0
      %v3558 = vmax.f32 %v3476, 0.0
      %v3559 = vmax.f32 %v3481, 0.0
      %v3560 = vmax.f32 %v3484, 0.0
      %v3561 = vmax.f32 %v3489, 0.0
      %v3562 = vmax.f32 %v3492, 0.0
      %v3563 = vmax.f32 %v3497, 0.0
      %v3564 = vmax.f32 %v3500, 0.0
      %v3565 = vmax.f32 %v3505, 0.0
      %v3566 = vmax.f32 %v3508, 0.0
      %v3567 = vmax.f32 %v3513, 0.0
      %v3568 = vmax.f32 %v3516, 0.0
      %v3569 = vmax.f32 %v3521, 0.0
      %v3570 = vmax.f32 %v3524, 0.0
      %v3571 = vmax.f32 %v3529, 0.0
      %v3572 = vmax.f32 %v3532, 0.0
      %v3573 = vmax.f32 %v3537, 0.0
      %v3574 = vmax.f32 %v3540, 0.0
      %v3575 = vpack.c.bf16 %v3544, %v3543
      %v3576 = vpack.c.bf16 %v3546, %v3545
      %v3577 = vpack.c.bf16 %v3548, %v3547
      %v3578 = vpack.c.bf16 %v3550, %v3549
      %v3579 = vpack.c.bf16 %v3552, %v3551
      %v3580 = vpack.c.bf16 %v3554, %v3553
      %v3581 = vpack.c.bf16 %v3556, %v3555
      %v3582 = vpack.c.bf16 %v3558, %v3557
      %v3583 = vpack.c.bf16 %v3560, %v3559
      %v3584 = vpack.c.bf16 %v3562, %v3561
      %v3585 = vpack.c.bf16 %v3564, %v3563
      %v3586 = vpack.c.bf16 %v3566, %v3565
      %v3587 = vpack.c.bf16 %v3568, %v3567
      %v3588 = vpack.c.bf16 %v3570, %v3569
      %v3589 = vpack.c.bf16 %v3572, %v3571
      %v3590 = vpack.c.bf16 %v3574, %v3573
      %v3591 = vlaneseq
      %v3592 = vshrl.u32 %v3591, 7
      %v3593 = vsub.s32 0, %v3592
      %v3594 = vrot.slane %v3273, %v3593
      %v3599 = vunpack.c.l.b16 %v3264
      %v3600 = vunpack.c.l.b16 %v3265
      %v3601 = vunpack.c.l.b16 %v3266
      %v3602 = vunpack.c.l.b16 %v3267
      %v3603 = vpack.c.b16 %v3600, %v3599
      %v3604 = vpack.c.b16 %v3602, %v3601
      %v3608 = vsel %vm717, %v3575, 0
      %v3611 = vsel %vm717, %v3576, 0
      %v3614 = vsel %vm717, %v3577, 0
      %v3617 = vsel %vm717, %v3578, 0
      %v3620 = vsel %vm717, %v3579, 0
      %v3623 = vsel %vm717, %v3580, 0
      %v3626 = vsel %vm717, %v3581, 0
      %v3629 = vsel %vm717, %v3582, 0
      %v3632 = vsel %vm717, %v3583, 0
      %v3635 = vsel %vm717, %v3584, 0
      %v3638 = vsel %vm717, %v3585, 0
      %v3641 = vsel %vm717, %v3586, 0
      %v3644 = vsel %vm717, %v3587, 0
      %v3647 = vsel %vm717, %v3588, 0
      %v3650 = vsel %vm717, %v3589, 0
      %v3653 = vsel %vm717, %v3590, 0
      %3655 = vmatprep.subr.bf16.mxu0 0
      %3656 = vmatpush1.bf16.msra.mxu0 %v3603
      %3657 = vmatprep.subr.bf16.mxu0 0
      %3658 = vmatpush1.bf16.msra.mxu0 %v3604
      %3659 = vmatprep.subr.bf16.mxu0 0
      %3660 = vmatpush1.bf16.msra.mxu0 0
      %3661 = vmatprep.subr.bf16.mxu0 0
      %3662 = vmatpush1.bf16.msra.mxu0 0
      %3663 = vmatprep.subr.bf16.mxu0 0
      %3664 = vmatpush1.bf16.msra.mxu0 0
      %3665 = vmatprep.subr.bf16.mxu0 0
      %3666 = vmatpush1.bf16.msra.mxu0 0
      %3667 = vmatprep.subr.bf16.mxu0 0
      %3668 = vmatpush1.bf16.msra.mxu0 0
      %3669 = vmatprep.subr.bf16.mxu0 0
      %3670 = vmatpush1.bf16.msra.mxu0 0
      %3671 = vmatprep.subr.bf16.mxu0 0
      %3672 = vmatpush1.bf16.msra.mxu0 0
      %3673 = vmatprep.subr.bf16.mxu0 0
      %3674 = vmatpush1.bf16.msra.mxu0 0
      %3675 = vmatprep.subr.bf16.mxu0 0
      %3676 = vmatpush1.bf16.msra.mxu0 0
      %3677 = vmatprep.subr.bf16.mxu0 0
      %3678 = vmatpush1.bf16.msra.mxu0 0
      %3679 = vmatprep.subr.bf16.mxu0 0
      %3680 = vmatpush1.bf16.msra.mxu0 0
      %3681 = vmatprep.subr.bf16.mxu0 0
      %3682 = vmatpush1.bf16.msra.mxu0 0
      %3683 = vmatprep.subr.bf16.mxu0 0
      %3684 = vmatpush1.bf16.msra.mxu0 0
      %3685 = vmatprep.subr.bf16.mxu0 0
      %3686 = vmatpush1.bf16.msra.mxu0 0
      %3687 = vmatprep.mubr.bf16.mxu0 0
      %3688 = vmatmul.mubr.bf16.gmra.mrb[0].mxu0 %v3608
      %v3689 = vpop.f32.mrb[0].mxu0
      %v3690 = vadd.f32 %v3594, %v3689
      %v3691 = vpop.f32.mrb[0].mxu0
      %v3692 = vpop.f32.mrb[0].mxu0
      %v3693 = vadd.f32 %v3594, %v3692
      %v3694 = vpop.f32.mrb[0].mxu0
      %3695 = vmatprep.mubr.bf16.mxu0 0
      %3696 = vmatmul.mubr.bf16.gmra.mrb[0].mxu0 %v3611
      %v3697 = vpop.f32.mrb[0].mxu0
      %v3698 = vadd.f32 %v3594, %v3697
      %v3699 = vpop.f32.mrb[0].mxu0
      %v3700 = vpop.f32.mrb[0].mxu0
      %v3701 = vadd.f32 %v3594, %v3700
      %v3702 = vpop.f32.mrb[0].mxu0
      %3703 = vmatprep.mubr.bf16.mxu0 0
      %3704 = vmatmul.mubr.bf16.gmra.mrb[0].mxu0 %v3614
      %v3705 = vpop.f32.mrb[0].mxu0
      %v3706 = vadd.f32 %v3594, %v3705
      %v3707 = vpop.f32.mrb[0].mxu0
      %v3708 = vpop.f32.mrb[0].mxu0
      %v3709 = vadd.f32 %v3594, %v3708
      %v3710 = vpop.f32.mrb[0].mxu0
      %3711 = vmatprep.mubr.bf16.mxu0 0
      %3712 = vmatmul.mubr.bf16.gmra.mrb[0].mxu0 %v3617
      %v3713 = vpop.f32.mrb[0].mxu0
      %v3714 = vadd.f32 %v3594, %v3713
      %v3715 = vpop.f32.mrb[0].mxu0
      %v3716 = vpop.f32.mrb[0].mxu0
      %v3717 = vadd.f32 %v3594, %v3716
      %v3718 = vpop.f32.mrb[0].mxu0
      %3719 = vmatprep.mubr.bf16.mxu0 0
      %3720 = vmatmul.mubr.bf16.gmra.mrb[0].mxu0 %v3620
      %v3721 = vpop.f32.mrb[0].mxu0
      %v3722 = vadd.f32 %v3594, %v3721
      %v3723 = vpop.f32.mrb[0].mxu0
      %v3724 = vpop.f32.mrb[0].mxu0
      %v3725 = vadd.f32 %v3594, %v3724
      %v3726 = vpop.f32.mrb[0].mxu0
      %3727 = vmatprep.mubr.bf16.mxu0 0
      %3728 = vmatmul.mubr.bf16.gmra.mrb[0].mxu0 %v3623
      %v3729 = vpop.f32.mrb[0].mxu0
      %v3730 = vadd.f32 %v3594, %v3729
      %v3731 = vpop.f32.mrb[0].mxu0
      %v3732 = vpop.f32.mrb[0].mxu0
      %v3733 = vadd.f32 %v3594, %v3732
      %v3734 = vpop.f32.mrb[0].mxu0
      %3735 = vmatprep.mubr.bf16.mxu0 0
      %3736 = vmatmul.mubr.bf16.gmra.mrb[0].mxu0 %v3626
      %v3737 = vpop.f32.mrb[0].mxu0
      %v3738 = vadd.f32 %v3594, %v3737
      %v3739 = vpop.f32.mrb[0].mxu0
      %v3740 = vpop.f32.mrb[0].mxu0
      %v3741 = vadd.f32 %v3594, %v3740
      %v3742 = vpop.f32.mrb[0].mxu0
      %3743 = vmatprep.mubr.bf16.mxu0 0
      %3744 = vmatmul.mubr.bf16.gmra.mrb[0].mxu0 %v3629
      %v3745 = vpop.f32.mrb[0].mxu0
      %v3746 = vadd.f32 %v3594, %v3745
      %v3747 = vpop.f32.mrb[0].mxu0
      %v3748 = vpop.f32.mrb[0].mxu0
      %v3749 = vadd.f32 %v3594, %v3748
      %v3750 = vpop.f32.mrb[0].mxu0
      %3751 = vmatprep.mubr.bf16.mxu0 0
      %3752 = vmatmul.mubr.bf16.gmra.mrb[0].mxu0 %v3632
      %v3753 = vpop.f32.mrb[0].mxu0
      %v3754 = vadd.f32 %v3594, %v3753
      %v3755 = vpop.f32.mrb[0].mxu0
      %v3756 = vpop.f32.mrb[0].mxu0
      %v3757 = vadd.f32 %v3594, %v3756
      %v3758 = vpop.f32.mrb[0].mxu0
      %3759 = vmatprep.mubr.bf16.mxu0 0
      %3760 = vmatmul.mubr.bf16.gmra.mrb[0].mxu0 %v3635
      %v3761 = vpop.f32.mrb[0].mxu0
      %v3762 = vadd.f32 %v3594, %v3761
      %v3763 = vpop.f32.mrb[0].mxu0
      %v3764 = vpop.f32.mrb[0].mxu0
      %v3765 = vadd.f32 %v3594, %v3764
      %v3766 = vpop.f32.mrb[0].mxu0
      %3767 = vmatprep.mubr.bf16.mxu0 0
      %3768 = vmatmul.mubr.bf16.gmra.mrb[0].mxu0 %v3638
      %v3769 = vpop.f32.mrb[0].mxu0
      %v3770 = vadd.f32 %v3594, %v3769
      %v3771 = vpop.f32.mrb[0].mxu0
      %v3772 = vpop.f32.mrb[0].mxu0
      %v3773 = vadd.f32 %v3594, %v3772
      %v3774 = vpop.f32.mrb[0].mxu0
      %3775 = vmatprep.mubr.bf16.mxu0 0
      %3776 = vmatmul.mubr.bf16.gmra.mrb[0].mxu0 %v3641
      %v3777 = vpop.f32.mrb[0].mxu0
      %v3778 = vadd.f32 %v3594, %v3777
      %v3779 = vpop.f32.mrb[0].mxu0
      %v3780 = vpop.f32.mrb[0].mxu0
      %v3781 = vadd.f32 %v3594, %v3780
      %v3782 = vpop.f32.mrb[0].mxu0
      %3783 = vmatprep.mubr.bf16.mxu0 0
      %3784 = vmatmul.mubr.bf16.gmra.mrb[0].mxu0 %v3644
      %v3785 = vpop.f32.mrb[0].mxu0
      %v3786 = vadd.f32 %v3594, %v3785
      %v3787 = vpop.f32.mrb[0].mxu0
      %v3788 = vpop.f32.mrb[0].mxu0
      %v3789 = vadd.f32 %v3594, %v3788
      %v3790 = vpop.f32.mrb[0].mxu0
      %3791 = vmatprep.mubr.bf16.mxu0 0
      %3792 = vmatmul.mubr.bf16.gmra.mrb[0].mxu0 %v3647
      %v3793 = vpop.f32.mrb[0].mxu0
      %v3794 = vadd.f32 %v3594, %v3793
      %v3795 = vpop.f32.mrb[0].mxu0
      %v3796 = vpop.f32.mrb[0].mxu0
      %v3797 = vadd.f32 %v3594, %v3796
      %v3798 = vpop.f32.mrb[0].mxu0
      %3799 = vmatprep.mubr.bf16.mxu0 0
      %3800 = vmatmul.mubr.bf16.gmra.mrb[0].mxu0 %v3650
      %v3801 = vpop.f32.mrb[0].mxu0
      %v3802 = vadd.f32 %v3594, %v3801
      %v3803 = vpop.f32.mrb[0].mxu0
      %v3804 = vpop.f32.mrb[0].mxu0
      %v3805 = vadd.f32 %v3594, %v3804
      %v3806 = vpop.f32.mrb[0].mxu0
      %3807 = vmatprep.mubr.bf16.mxu0 0
      %3808 = vmatmul.mubr.bf16.gmra.mrb[0].mxu0 %v3653
      %v3809 = vpop.f32.mrb[0].mxu0
      %v3810 = vadd.f32 %v3594, %v3809
      %v3811 = vpop.f32.mrb[0].mxu0
      %v3812 = vpop.f32.mrb[0].mxu0
      %v3813 = vadd.f32 %v3594, %v3812
      %v3814 = vpop.f32.mrb[0].mxu0
      %3815 = vdwg.mxu0
      %v3816 = vtanh.pop %v3690
      %v3817 = vtanh.pop %v3693
      %v3818 = vtanh.pop %v3698
      %v3819 = vtanh.pop %v3701
      %v3820 = vtanh.pop %v3706
      %v3821 = vtanh.pop %v3709
      %v3822 = vtanh.pop %v3714
      %v3823 = vtanh.pop %v3717
      %v3824 = vtanh.pop %v3722
      %v3825 = vtanh.pop %v3725
      %v3826 = vtanh.pop %v3730
      %v3827 = vtanh.pop %v3733
      %v3828 = vtanh.pop %v3738
      %v3829 = vtanh.pop %v3741
      %v3830 = vtanh.pop %v3746
      %v3831 = vtanh.pop %v3749
      %v3832 = vtanh.pop %v3754
      %v3833 = vtanh.pop %v3757
      %v3834 = vtanh.pop %v3762
      %v3835 = vtanh.pop %v3765
      %v3836 = vtanh.pop %v3770
      %v3837 = vtanh.pop %v3773
      %v3838 = vtanh.pop %v3778
      %v3839 = vtanh.pop %v3781
      %v3840 = vtanh.pop %v3786
      %v3841 = vtanh.pop %v3789
      %v3842 = vtanh.pop %v3794
      %v3843 = vtanh.pop %v3797
      %v3844 = vtanh.pop %v3802
      %v3845 = vtanh.pop %v3805
      %v3846 = vtanh.pop %v3810
      %v3847 = vtanh.pop %v3813
      %v3848 = vlaneseq
      %v3849 = vshrl.u32 %v3848, 7
      %v3850 = vsub.s32 0, %v3849
      %v3851 = vrot.slane %v3274, %v3850
      %v3856 = vunpack.c.l.b16 %v3269
      %v3857 = vunpack.c.l.b16 %v3270
      %v3858 = vunpack.c.l.b16 %v3271
      %v3859 = vunpack.c.l.b16 %v3272
      %v3860 = vpack.c.b16 %v3857, %v3856
      %v3861 = vpack.c.b16 %v3859, %v3858
      %3864 = vmatprep.subr.bf16.mxu0 0
      %3865 = vmatpush1.bf16.msra.mxu0 %v3860
      %3866 = vmatprep.subr.bf16.mxu0 0
      %3867 = vmatpush1.bf16.msra.mxu0 %v3861
      %3868 = vmatprep.subr.bf16.mxu0 0
      %3869 = vmatpush1.bf16.msra.mxu0 0
      %3870 = vmatprep.subr.bf16.mxu0 0
      %3871 = vmatpush1.bf16.msra.mxu0 0
      %3872 = vmatprep.subr.bf16.mxu0 0
      %3873 = vmatpush1.bf16.msra.mxu0 0
      %3874 = vmatprep.subr.bf16.mxu0 0
      %3875 = vmatpush1.bf16.msra.mxu0 0
      %3876 = vmatprep.subr.bf16.mxu0 0
      %3877 = vmatpush1.bf16.msra.mxu0 0
      %3878 = vmatprep.subr.bf16.mxu0 0
      %3879 = vmatpush1.bf16.msra.mxu0 0
      %3880 = vmatprep.subr.bf16.mxu0 0
      %3881 = vmatpush1.bf16.msra.mxu0 0
      %3882 = vmatprep.subr.bf16.mxu0 0
      %3883 = vmatpush1.bf16.msra.mxu0 0
      %3884 = vmatprep.subr.bf16.mxu0 0
      %3885 = vmatpush1.bf16.msra.mxu0 0
      %3886 = vmatprep.subr.bf16.mxu0 0
      %3887 = vmatpush1.bf16.msra.mxu0 0
      %3888 = vmatprep.subr.bf16.mxu0 0
      %3889 = vmatpush1.bf16.msra.mxu0 0
      %3890 = vmatprep.subr.bf16.mxu0 0
      %3891 = vmatpush1.bf16.msra.mxu0 0
      %3892 = vmatprep.subr.bf16.mxu0 0
      %3893 = vmatpush1.bf16.msra.mxu0 0
      %3894 = vmatprep.subr.bf16.mxu0 0
      %3895 = vmatpush1.bf16.msra.mxu0 0
      %3896 = vmatprep.mubr.bf16.mxu0 0
      %3897 = vmatmul.mubr.bf16.gmra.mrb[0].mxu0 %v3608
      %v3898 = vpop.f32.mrb[0].mxu0
      %v3899 = vadd.f32 %v3851, %v3898
      %v3900 = vpop.f32.mrb[0].mxu0
      %v3901 = vpop.f32.mrb[0].mxu0
      %v3902 = vadd.f32 %v3851, %v3901
      %v3903 = vpop.f32.mrb[0].mxu0
      %3904 = vmatprep.mubr.bf16.mxu0 0
      %3905 = vmatmul.mubr.bf16.gmra.mrb[0].mxu0 %v3611
      %v3906 = vpop.f32.mrb[0].mxu0
      %v3907 = vadd.f32 %v3851, %v3906
      %v3908 = vpop.f32.mrb[0].mxu0
      %v3909 = vpop.f32.mrb[0].mxu0
      %v3910 = vadd.f32 %v3851, %v3909
      %v3911 = vpop.f32.mrb[0].mxu0
      %3912 = vmatprep.mubr.bf16.mxu0 0
      %3913 = vmatmul.mubr.bf16.gmra.mrb[0].mxu0 %v3614
      %v3914 = vpop.f32.mrb[0].mxu0
      %v3915 = vadd.f32 %v3851, %v3914
      %v3916 = vpop.f32.mrb[0].mxu0
      %v3917 = vpop.f32.mrb[0].mxu0
      %v3918 = vadd.f32 %v3851, %v3917
      %v3919 = vpop.f32.mrb[0].mxu0
      %3920 = vmatprep.mubr.bf16.mxu0 0
      %3921 = vmatmul.mubr.bf16.gmra.mrb[0].mxu0 %v3617
      %v3922 = vpop.f32.mrb[0].mxu0
      %v3923 = vadd.f32 %v3851, %v3922
      %v3924 = vpop.f32.mrb[0].mxu0
      %v3925 = vpop.f32.mrb[0].mxu0
      %v3926 = vadd.f32 %v3851, %v3925
      %v3927 = vpop.f32.mrb[0].mxu0
      %3928 = vmatprep.mubr.bf16.mxu0 0
      %3929 = vmatmul.mubr.bf16.gmra.mrb[0].mxu0 %v3620
      %v3930 = vpop.f32.mrb[0].mxu0
      %v3931 = vadd.f32 %v3851, %v3930
      %v3932 = vpop.f32.mrb[0].mxu0
      %v3933 = vpop.f32.mrb[0].mxu0
      %v3934 = vadd.f32 %v3851, %v3933
      %v3935 = vpop.f32.mrb[0].mxu0
      %3936 = vmatprep.mubr.bf16.mxu0 0
      %3937 = vmatmul.mubr.bf16.gmra.mrb[0].mxu0 %v3623
      %v3938 = vpop.f32.mrb[0].mxu0
      %v3939 = vadd.f32 %v3851, %v3938
      %v3940 = vpop.f32.mrb[0].mxu0
      %v3941 = vpop.f32.mrb[0].mxu0
      %v3942 = vadd.f32 %v3851, %v3941
      %v3943 = vpop.f32.mrb[0].mxu0
      %3944 = vmatprep.mubr.bf16.mxu0 0
      %3945 = vmatmul.mubr.bf16.gmra.mrb[0].mxu0 %v3626
      %v3946 = vpop.f32.mrb[0].mxu0
      %v3947 = vadd.f32 %v3851, %v3946
      %v3948 = vpop.f32.mrb[0].mxu0
      %v3949 = vpop.f32.mrb[0].mxu0
      %v3950 = vadd.f32 %v3851, %v3949
      %v3951 = vpop.f32.mrb[0].mxu0
      %3952 = vmatprep.mubr.bf16.mxu0 0
      %3953 = vmatmul.mubr.bf16.gmra.mrb[0].mxu0 %v3629
      %v3954 = vpop.f32.mrb[0].mxu0
      %v3955 = vadd.f32 %v3851, %v3954
      %v3956 = vpop.f32.mrb[0].mxu0
      %v3957 = vpop.f32.mrb[0].mxu0
      %v3958 = vadd.f32 %v3851, %v3957
      %v3959 = vpop.f32.mrb[0].mxu0
      %3960 = vmatprep.mubr.bf16.mxu0 0
      %3961 = vmatmul.mubr.bf16.gmra.mrb[0].mxu0 %v3632
      %v3962 = vpop.f32.mrb[0].mxu0
      %v3963 = vadd.f32 %v3851, %v3962
      %v3964 = vpop.f32.mrb[0].mxu0
      %v3965 = vpop.f32.mrb[0].mxu0
      %v3966 = vadd.f32 %v3851, %v3965
      %v3967 = vpop.f32.mrb[0].mxu0
      %3968 = vmatprep.mubr.bf16.mxu0 0
      %3969 = vmatmul.mubr.bf16.gmra.mrb[0].mxu0 %v3635
      %v3970 = vpop.f32.mrb[0].mxu0
      %v3971 = vadd.f32 %v3851, %v3970
      %v3972 = vpop.f32.mrb[0].mxu0
      %v3973 = vpop.f32.mrb[0].mxu0
      %v3974 = vadd.f32 %v3851, %v3973
      %v3975 = vpop.f32.mrb[0].mxu0
      %3976 = vmatprep.mubr.bf16.mxu0 0
      %3977 = vmatmul.mubr.bf16.gmra.mrb[0].mxu0 %v3638
      %v3978 = vpop.f32.mrb[0].mxu0
      %v3979 = vadd.f32 %v3851, %v3978
      %v3980 = vpop.f32.mrb[0].mxu0
      %v3981 = vpop.f32.mrb[0].mxu0
      %v3982 = vadd.f32 %v3851, %v3981
      %v3983 = vpop.f32.mrb[0].mxu0
      %3984 = vmatprep.mubr.bf16.mxu0 0
      %3985 = vmatmul.mubr.bf16.gmra.mrb[0].mxu0 %v3641
      %v3986 = vpop.f32.mrb[0].mxu0
      %v3987 = vadd.f32 %v3851, %v3986
      %v3988 = vpop.f32.mrb[0].mxu0
      %v3989 = vpop.f32.mrb[0].mxu0
      %v3990 = vadd.f32 %v3851, %v3989
      %v3991 = vpop.f32.mrb[0].mxu0
      %3992 = vmatprep.mubr.bf16.mxu0 0
      %3993 = vmatmul.mubr.bf16.gmra.mrb[0].mxu0 %v3644
      %v3994 = vpop.f32.mrb[0].mxu0
      %v3995 = vadd.f32 %v3851, %v3994
      %v3996 = vpop.f32.mrb[0].mxu0
      %v3997 = vpop.f32.mrb[0].mxu0
      %v3998 = vadd.f32 %v3851, %v3997
      %v3999 = vpop.f32.mrb[0].mxu0
      %4000 = vmatprep.mubr.bf16.mxu0 0
      %4001 = vmatmul.mubr.bf16.gmra.mrb[0].mxu0 %v3647
      %v4002 = vpop.f32.mrb[0].mxu0
      %v4003 = vadd.f32 %v3851, %v4002
      %v4004 = vpop.f32.mrb[0].mxu0
      %v4005 = vpop.f32.mrb[0].mxu0
      %v4006 = vadd.f32 %v3851, %v4005
      %v4007 = vpop.f32.mrb[0].mxu0
      %4008 = vmatprep.mubr.bf16.mxu0 0
      %4009 = vmatmul.mubr.bf16.gmra.mrb[0].mxu0 %v3650
      %v4010 = vpop.f32.mrb[0].mxu0
      %v4011 = vadd.f32 %v3851, %v4010
      %v4012 = vpop.f32.mrb[0].mxu0
      %v4013 = vpop.f32.mrb[0].mxu0
      %v4014 = vadd.f32 %v3851, %v4013
      %v4015 = vpop.f32.mrb[0].mxu0
      %4016 = vmatprep.mubr.bf16.mxu0 0
      %4017 = vmatmul.mubr.bf16.gmra.mrb[0].mxu0 %v3653
      %v4018 = vpop.f32.mrb[0].mxu0
      %v4019 = vadd.f32 %v3851, %v4018
      %v4020 = vpop.f32.mrb[0].mxu0
      %v4021 = vpop.f32.mrb[0].mxu0
      %v4022 = vadd.f32 %v3851, %v4021
      %v4023 = vpop.f32.mrb[0].mxu0
      %4024 = vdwg.mxu0
      %v4025 = vmul.f32 %v3816, 1.442695
      %v4026 = vpow.pop %v4025
      %v4027 = vmul.f32 %v3817, 1.442695
      %v4028 = vpow.pop %v4027
      %v4029 = vmul.f32 %v3818, 1.442695
      %v4030 = vpow.pop %v4029
      %v4031 = vmul.f32 %v3819, 1.442695
      %v4032 = vpow.pop %v4031
      %v4033 = vmul.f32 %v3820, 1.442695
      %v4034 = vpow.pop %v4033
      %v4035 = vmul.f32 %v3821, 1.442695
      %v4036 = vpow.pop %v4035
      %v4037 = vmul.f32 %v3822, 1.442695
      %v4038 = vpow.pop %v4037
      %v4039 = vmul.f32 %v3823, 1.442695
      %v4040 = vpow.pop %v4039
      %v4041 = vmul.f32 %v3824, 1.442695
      %v4042 = vpow.pop %v4041
      %v4043 = vmul.f32 %v3825, 1.442695
      %v4044 = vpow.pop %v4043
      %v4045 = vmul.f32 %v3826, 1.442695
      %v4046 = vpow.pop %v4045
      %v4047 = vmul.f32 %v3827, 1.442695
      %v4048 = vpow.pop %v4047
      %v4049 = vmul.f32 %v3828, 1.442695
      %v4050 = vpow.pop %v4049
      %v4051 = vmul.f32 %v3829, 1.442695
      %v4052 = vpow.pop %v4051
      %v4053 = vmul.f32 %v3830, 1.442695
      %v4054 = vpow.pop %v4053
      %v4055 = vmul.f32 %v3831, 1.442695
      %v4056 = vpow.pop %v4055
      %v4057 = vmul.f32 %v3832, 1.442695
      %v4058 = vpow.pop %v4057
      %v4059 = vmul.f32 %v3833, 1.442695
      %v4060 = vpow.pop %v4059
      %v4061 = vmul.f32 %v3834, 1.442695
      %v4062 = vpow.pop %v4061
      %v4063 = vmul.f32 %v3835, 1.442695
      %v4064 = vpow.pop %v4063
      %v4065 = vmul.f32 %v3836, 1.442695
      %v4066 = vpow.pop %v4065
      %v4067 = vmul.f32 %v3837, 1.442695
      %v4068 = vpow.pop %v4067
      %v4069 = vmul.f32 %v3838, 1.442695
      %v4070 = vpow.pop %v4069
      %v4071 = vmul.f32 %v3839, 1.442695
      %v4072 = vpow.pop %v4071
      %v4073 = vmul.f32 %v3840, 1.442695
      %v4074 = vpow.pop %v4073
      %v4075 = vmul.f32 %v3841, 1.442695
      %v4076 = vpow.pop %v4075
      %v4077 = vmul.f32 %v3842, 1.442695
      %v4078 = vpow.pop %v4077
      %v4079 = vmul.f32 %v3843, 1.442695
      %v4080 = vpow.pop %v4079
      %v4081 = vmul.f32 %v3844, 1.442695
      %v4082 = vpow.pop %v4081
      %v4083 = vmul.f32 %v3845, 1.442695
      %v4084 = vpow.pop %v4083
      %v4085 = vmul.f32 %v3846, 1.442695
      %v4086 = vpow.pop %v4085
      %v4087 = vmul.f32 %v3847, 1.442695
      %v4088 = vpow.pop %v4087
      %v4089 = vmul.f32 %v3226, %v4026
      %v4090 = vmul.f32 %v3227, %v4028
      %v4091 = vmul.f32 %v3228, %v4030
      %v4092 = vmul.f32 %v3229, %v4032
      %v4093 = vmul.f32 %v3230, %v4034
      %v4094 = vmul.f32 %v3231, %v4036
      %v4095 = vmul.f32 %v3232, %v4038
      %v4096 = vmul.f32 %v3233, %v4040
      %v4097 = vmul.f32 %v3234, %v4042
      %v4098 = vmul.f32 %v3235, %v4044
      %v4099 = vmul.f32 %v3236, %v4046
      %v4100 = vmul.f32 %v3237, %v4048
      %v4101 = vmul.f32 %v3238, %v4050
      %v4102 = vmul.f32 %v3239, %v4052
      %v4103 = vmul.f32 %v3240, %v4054
      %v4104 = vmul.f32 %v3241, %v4056
      %v4105 = vmul.f32 %v3242, %v4058
      %v4106 = vmul.f32 %v3243, %v4060
      %v4107 = vmul.f32 %v3244, %v4062
      %v4108 = vmul.f32 %v3245, %v4064
      %v4109 = vmul.f32 %v3246, %v4066
      %v4110 = vmul.f32 %v3247, %v4068
      %v4111 = vmul.f32 %v3248, %v4070
      %v4112 = vmul.f32 %v3249, %v4072
      %v4113 = vmul.f32 %v3250, %v4074
      %v4114 = vmul.f32 %v3251, %v4076
      %v4115 = vmul.f32 %v3252, %v4078
      %v4116 = vmul.f32 %v3253, %v4080
      %v4117 = vmul.f32 %v3254, %v4082
      %v4118 = vmul.f32 %v3255, %v4084
      %v4119 = vmul.f32 %v3256, %v4086
      %v4120 = vmul.f32 %v3257, %v4088
      %v4121 = vadd.f32 %v4089, %v3899
      %v4122 = vadd.f32 %v4090, %v3902
      %v4123 = vadd.f32 %v4091, %v3907
      %v4124 = vadd.f32 %v4092, %v3910
      %v4125 = vadd.f32 %v4093, %v3915
      %v4126 = vadd.f32 %v4094, %v3918
      %v4127 = vadd.f32 %v4095, %v3923
      %v4128 = vadd.f32 %v4096, %v3926
      %v4129 = vadd.f32 %v4097, %v3931
      %v4130 = vadd.f32 %v4098, %v3934
      %v4131 = vadd.f32 %v4099, %v3939
      %v4132 = vadd.f32 %v4100, %v3942
      %v4133 = vadd.f32 %v4101, %v3947
      %v4134 = vadd.f32 %v4102, %v3950
      %v4135 = vadd.f32 %v4103, %v3955
      %v4136 = vadd.f32 %v4104, %v3958
      %v4137 = vadd.f32 %v4105, %v3963
      %v4138 = vadd.f32 %v4106, %v3966
      %v4139 = vadd.f32 %v4107, %v3971
      %v4140 = vadd.f32 %v4108, %v3974
      %v4141 = vadd.f32 %v4109, %v3979
      %v4142 = vadd.f32 %v4110, %v3982
      %v4143 = vadd.f32 %v4111, %v3987
      %v4144 = vadd.f32 %v4112, %v3990
      %v4145 = vadd.f32 %v4113, %v3995
      %v4146 = vadd.f32 %v4114, %v3998
      %v4147 = vadd.f32 %v4115, %v4003
      %v4148 = vadd.f32 %v4116, %v4006
      %v4149 = vadd.f32 %v4117, %v4011
      %v4150 = vadd.f32 %v4118, %v4014
      %v4151 = vadd.f32 %v4119, %v4019
      %v4152 = vadd.f32 %v4120, %v4022
      %v4153 = vlaneseq
      %v4154 = vshrl.u32 %v4153, 7
      %v4155 = vsub.s32 0, %v4154
      %v4156 = vrot.slane %v3259, %v4155
      %v4157 = vmul.f32 %v4156, %v4121
      %v4158 = vmul.f32 %v4156, %v4122
      %v4159 = vmul.f32 %v4156, %v4123
      %v4160 = vmul.f32 %v4156, %v4124
      %v4161 = vmul.f32 %v4156, %v4125
      %v4162 = vmul.f32 %v4156, %v4126
      %v4163 = vmul.f32 %v4156, %v4127
      %v4164 = vmul.f32 %v4156, %v4128
      %v4165 = vmul.f32 %v4156, %v4129
      %v4166 = vmul.f32 %v4156, %v4130
      %v4167 = vmul.f32 %v4156, %v4131
      %v4168 = vmul.f32 %v4156, %v4132
      %v4169 = vmul.f32 %v4156, %v4133
      %v4170 = vmul.f32 %v4156, %v4134
      %v4171 = vmul.f32 %v4156, %v4135
      %v4172 = vmul.f32 %v4156, %v4136
      %v4173 = vmul.f32 %v4156, %v4137
      %v4174 = vmul.f32 %v4156, %v4138
      %v4175 = vmul.f32 %v4156, %v4139
      %v4176 = vmul.f32 %v4156, %v4140
      %v4177 = vmul.f32 %v4156, %v4141
      %v4178 = vmul.f32 %v4156, %v4142
      %v4179 = vmul.f32 %v4156, %v4143
      %v4180 = vmul.f32 %v4156, %v4144
      %v4181 = vmul.f32 %v4156, %v4145
      %v4182 = vmul.f32 %v4156, %v4146
      %v4183 = vmul.f32 %v4156, %v4147
      %v4184 = vmul.f32 %v4156, %v4148
      %v4185 = vmul.f32 %v4156, %v4149
      %v4186 = vmul.f32 %v4156, %v4150
      %v4187 = vmul.f32 %v4156, %v4151
      %v4188 = vmul.f32 %v4156, %v4152
      %v4189 = vadd.f32 %v3279, %v4157
      %v4190 = vadd.f32 %v3280, %v4158
      %v4191 = vadd.f32 %v3281, %v4159
      %v4192 = vadd.f32 %v3282, %v4160
      %v4193 = vadd.f32 %v3283, %v4161
      %v4194 = vadd.f32 %v3284, %v4162
      %v4195 = vadd.f32 %v3285, %v4163
      %v4196 = vadd.f32 %v3286, %v4164
      %v4197 = vadd.f32 %v3287, %v4165
      %v4198 = vadd.f32 %v3288, %v4166
      %v4199 = vadd.f32 %v3289, %v4167
      %v4200 = vadd.f32 %v3290, %v4168
      %v4201 = vadd.f32 %v3291, %v4169
      %v4202 = vadd.f32 %v3292, %v4170
      %v4203 = vadd.f32 %v3293, %v4171
      %v4204 = vadd.f32 %v3294, %v4172
      %v4205 = vadd.f32 %v3295, %v4173
      %v4206 = vadd.f32 %v3296, %v4174
      %v4207 = vadd.f32 %v3297, %v4175
      %v4208 = vadd.f32 %v3298, %v4176
      %v4209 = vadd.f32 %v3299, %v4177
      %v4210 = vadd.f32 %v3300, %v4178
      %v4211 = vadd.f32 %v3301, %v4179
      %v4212 = vadd.f32 %v3302, %v4180
      %v4213 = vadd.f32 %v3303, %v4181
      %v4214 = vadd.f32 %v3304, %v4182
      %v4215 = vadd.f32 %v3305, %v4183
      %v4216 = vadd.f32 %v3306, %v4184
      %v4217 = vadd.f32 %v3307, %v4185
      %v4218 = vadd.f32 %v3308, %v4186
      %v4219 = vadd.f32 %v3309, %v4187
      %v4220 = vadd.f32 %v3310, %v4188
      %4221 = vst.msk [vmem:[%s334] sm:$0xff] %vm439, %v4189
      %4222 = vst.msk [vmem:[%s334 + $0x8] sm:$0xff] %vm439, %v4190
      %4223 = vst.msk [vmem:[%s334 + $0x10] sm:$0xff] %vm439, %v4191
      %4224 = vst.msk [vmem:[%s334 + $0x18] sm:$0xff] %vm439, %v4192
      %4225 = vst.msk [vmem:[%s334 + $0x20] sm:$0xff] %vm439, %v4193
      %4226 = vst.msk [vmem:[%s334 + $0x28] sm:$0xff] %vm439, %v4194
      %4227 = vst.msk [vmem:[%s334 + $0x30] sm:$0xff] %vm439, %v4195
      %4228 = vst.msk [vmem:[%s334 + $0x38] sm:$0xff] %vm439, %v4196
      %4229 = vst.msk [vmem:[%s334 + $0x40] sm:$0xff] %vm439, %v4197
      %4230 = vst.msk [vmem:[%s334 + $0x48] sm:$0xff] %vm439, %v4198
      %4231 = vst.msk [vmem:[%s334 + $0x50] sm:$0xff] %vm439, %v4199
      %4232 = vst.msk [vmem:[%s334 + $0x58] sm:$0xff] %vm439, %v4200
      %4233 = vst.msk [vmem:[%s334 + $0x60] sm:$0xff] %vm439, %v4201
      %4234 = vst.msk [vmem:[%s334 + $0x68] sm:$0xff] %vm439, %v4202
      %4235 = vst.msk [vmem:[%s334 + $0x70] sm:$0xff] %vm439, %v4203
      %4236 = vst.msk [vmem:[%s334 + $0x78] sm:$0xff] %vm439, %v4204
      %4237 = vst.msk [vmem:[%s334 + $0x80] sm:$0xff] %vm439, %v4205
      %4238 = vst.msk [vmem:[%s334 + $0x88] sm:$0xff] %vm439, %v4206
      %4239 = vst.msk [vmem:[%s334 + $0x90] sm:$0xff] %vm439, %v4207
      %4240 = vst.msk [vmem:[%s334 + $0x98] sm:$0xff] %vm439, %v4208
      %4241 = vst.msk [vmem:[%s334 + $0xa0] sm:$0xff] %vm439, %v4209
      %4242 = vst.msk [vmem:[%s334 + $0xa8] sm:$0xff] %vm439, %v4210
      %4243 = vst.msk [vmem:[%s334 + $0xb0] sm:$0xff] %vm439, %v4211
      %4244 = vst.msk [vmem:[%s334 + $0xb8] sm:$0xff] %vm439, %v4212
      %4245 = vst.msk [vmem:[%s334 + $0xc0] sm:$0xff] %vm439, %v4213
      %4246 = vst.msk [vmem:[%s334 + $0xc8] sm:$0xff] %vm439, %v4214
      %4247 = vst.msk [vmem:[%s334 + $0xd0] sm:$0xff] %vm439, %v4215
      %4248 = vst.msk [vmem:[%s334 + $0xd8] sm:$0xff] %vm439, %v4216
      %4249 = vst.msk [vmem:[%s334 + $0xe0] sm:$0xff] %vm439, %v4217
      %4250 = vst.msk [vmem:[%s334 + $0xe8] sm:$0xff] %vm439, %v4218
      %4251 = vst.msk [vmem:[%s334 + $0xf0] sm:$0xff] %vm439, %v4219
      %4252 = vst.msk [vmem:[%s334 + $0xf8] sm:$0xff] %vm439, %v4220
      %s4253 = smul.u32 32, %s20
      %p4254 = scmp.lt.s32.totalorder %s4253, 63
      %s4255 = scalar_select %p4254, %s4253, 63
      %s4256 = smul.addr %s4255, 8
      %s4257 = scalar_lea.vmem %s9, %s4256
      // Predicated region
      $region57: #{tpu_custom_call.1} parent=55 // pred_check
        %p4258 = pneg %p232
      $region58: #{tpu_custom_call.1} parent=55 // pred_check_branch
        %4260 = sbr.rel (%p4258) target = $region60
      $region59: #{tpu_custom_call.1} parent=55 // pred_region
        %s4261 = smul.u32 32, %s20
      $region60: #{tpu_custom_call.1} parent=55 // pred_fallthru
        _
    $region56: #{tpu_custom_call.1} parent=5 // pred_fallthru
      _
    %p4262 = scmp.le.s32.totalorder 2, %s15
    // Predicated region
    $region61: #{tpu_custom_call.1} parent=5 // pred_check
      %p4263 = pneg %p4262
    $region62: #{tpu_custom_call.1} parent=5 // pred_check_branch
      %4265 = sbr.rel (%p4263) target = $region64
    $region63: #{tpu_custom_call.1} parent=5 // pred_region
      %s4266 = ssub.s32 %s15, 2
      // Predicated region
      $region65: #{tpu_custom_call.1} parent=63 // pred_check
        %p4267 = pneg %p238
      $region66: #{tpu_custom_call.1} parent=63 // pred_check_branch
        %4269 = sbr.rel (%p4267) target = $region68
      $region67: #{tpu_custom_call.1} parent=63 // pred_region
        %s4270 = smul.u32 32, %s21
        %p4271 = scmp.lt.s32.totalorder %s4270, 63
        %s4272 = scalar_select %p4271, %s4270, 63
        %s4273 = smul.addr %s4272, 8
        %s4274 = scalar_lea.vmem %s9, %s4273
      $region68: #{tpu_custom_call.1} parent=63 // pred_fallthru
        _
    $region64: #{tpu_custom_call.1} parent=5 // pred_fallthru
      _
  $region6: #{tpu_custom_call.1} parent=0 // loop_footer
    %s19 = sadd.s32 1, %s15
  $region7: #{tpu_custom_call.1} parent=0 // loop_footer_branch
    %14 = sbr.rel target = $region3
  $region8: #{tpu_custom_call.1} parent=0 // loop_exit
    _

</llo_original>
